<compile_context>
chip_gen: v5e
topology: v5e:2x2
jax: 0.10.0
libtpu: 0.0.40
codegen_flags: <defaults>
</compile_context>

<pallas_src>
import numpy as np
import jax
import jax.numpy as jnp
from jax.experimental import pallas as pl
from jax.experimental.pallas import tpu as pltpu

_VMEM_LIMIT = 32 * 1024 * 1024


# ----------------------------- fused PropNet kernel -----------------------------

def _make_propnet_kernel(pstep):
    def kernel(x_ref, rr_ref, rs_ref, rrt_ref,
               ne_w0, ne_b0, ne_w1, ne_b1, ne_w2, ne_b2,
               ee_w0, ee_b0, ee_w1, ee_b1, ee_w2, ee_b2,
               ep_w, ep_b, npp_w, npp_b,
               pr_w0, pr_b0, pr_w1, pr_b1, pr_w2, pr_b2,
               o_ref):
        bf16 = jnp.bfloat16
        relu = lambda v: jnp.maximum(v, 0.0)

        x = x_ref[...]          # (TB*N, F)  f32, row-folded over TB batch items
        Rr = rr_ref[0]          # (TB*R, TB*N) bf16, block-diagonal
        Rs = rs_ref[0]          # (TB*R, TB*N) bf16, block-diagonal
        RrT = rrt_ref[0]        # (TB*N, TB*R) bf16, pre-transposed in the wrapper

        def dot_parts(parts, w_ref, b_ref):
            # concat(parts, -1) @ W + b as split matmuls (no in-kernel concat).
            # bf16 MXU operands, f32 accumulation.
            w = w_ref[...]
            off, acc = 0, None
            for p in parts:
                k = p.shape[-1]
                t = jnp.dot(p.astype(bf16), w[off:off + k],
                            preferred_element_type=jnp.float32)
                acc = t if acc is None else acc + t
                off += k
            return acc + b_ref[...]

        def mlp3(parts, w0, b0, w1, b1, w2, b2, final_relu):
            h = relu(dot_parts(parts, w0, b0))
            h = relu(dot_parts([h], w1, b1))
            h = dot_parts([h], w2, b2)
            return relu(h) if final_relu else h

        # node / edge encoders on folded row slabs
        node_encode = mlp3([x], ne_w0, ne_b0, ne_w1, ne_b1, ne_w2, ne_b2, True)   # (TB*N, H)
        xb = x.astype(bf16)
        x_r = jnp.dot(Rr, xb, preferred_element_type=jnp.float32)                 # (TB*R, F)
        x_s = jnp.dot(Rs, xb, preferred_element_type=jnp.float32)                 # (TB*R, F)
        edge_encode = mlp3([x_r, x_s], ee_w0, ee_b0, ee_w1, ee_b1, ee_w2, ee_b2, True)

        # pstep rounds of message passing (all 2-D matmuls on the folded slabs)
        node_effect = node_encode
        for _ in range(pstep):
            neb = node_effect.astype(bf16)
            ner = jnp.dot(Rr, neb, preferred_element_type=jnp.float32)            # (TB*R, H)
            nes = jnp.dot(Rs, neb, preferred_element_type=jnp.float32)            # (TB*R, H)
            edge_effect = relu(dot_parts([edge_encode, ner, nes], ep_w, ep_b))     # (TB*R, H)
            agg = jnp.dot(RrT, edge_effect.astype(bf16),
                          preferred_element_type=jnp.float32)                      # (TB*N, H)
            node_effect = relu(dot_parts([node_encode, agg], npp_w, npp_b)
                               + node_effect)                                      # residual

        reps = mlp3([node_encode, node_effect],
                    pr_w0, pr_b0, pr_w1, pr_b1, pr_w2, pr_b2, False)               # (TB*N, nf_out)
        o_ref[...] = reps.astype(o_ref.dtype)
    return kernel


def propnet_fused(params, x2d, Rr_bd, Rs_bd, RrT_bd, *, TB, N, R, pstep=2):
    """x2d: (BS*N, F); *_bd: (G, TB*R, TB*N) block-diag relations -> (BS*N, nf_out)."""
    G = Rr_bd.shape[0]
    F = x2d.shape[1]
    nf_out = params["node_predictor"][2]["w"].shape[1]

    weights = []
    for name in ("node_encoder", "edge_encoder"):
        for lyr in params[name]:
            weights += [lyr["w"], lyr["b"]]
    weights += [params["edge_propagator"]["w"], params["edge_propagator"]["b"]]
    weights += [params["node_propagator"]["w"], params["node_propagator"]["b"]]
    for lyr in params["node_predictor"]:
        weights += [lyr["w"], lyr["b"]]

    in_specs = [
        pl.BlockSpec((TB * N, F), lambda g: (g, 0)),
        pl.BlockSpec((1, TB * R, TB * N), lambda g: (g, 0, 0)),
        pl.BlockSpec((1, TB * R, TB * N), lambda g: (g, 0, 0)),
        pl.BlockSpec((1, TB * N, TB * R), lambda g: (g, 0, 0)),
    ] + [pl.BlockSpec(w.shape, lambda g, nd=w.ndim: (0,) * nd) for w in weights]

    return pl.pallas_call(
        _make_propnet_kernel(pstep),
        out_shape=jax.ShapeDtypeStruct((G * TB * N, nf_out), jnp.float32),
        grid=(G,),
        in_specs=in_specs,
        out_specs=pl.BlockSpec((TB * N, nf_out), lambda g: (g, 0)),
        compiler_params=pltpu.CompilerParams(
            dimension_semantics=("parallel",),
            vmem_limit_bytes=_VMEM_LIMIT),
    )(x2d, Rr_bd, Rs_bd, RrT_bd, *weights)


def _choose_tb(BS, N, max_tb=16):
    """Largest fold TB | BS keeping the (8,128) block rule: TB == BS (full) or 8 | TB*N."""
    for tb in range(min(BS, max_tb), 0, -1):
        if BS % tb == 0 and (tb == BS or (tb * N) % 8 == 0):
            return tb
    return BS


def _block_diag(a, TB):
    """(G*TB, R, N) -> (G, TB*R, TB*N) block-diagonal (batched bmm as one 2-D matmul)."""
    GT, R, N = a.shape
    G = GT // TB
    a = a.reshape(G, TB, R, N)
    eye = jnp.eye(TB, dtype=a.dtype)
    return jnp.einsum('gtrn,ts->gtrsn', a, eye).reshape(G, TB * R, TB * N)


# ----------------------------- fused bidirectional GRU kernel -----------------------------

def _make_bigru_kernel(T, H):
    def kernel(x_ref,
               f0_wih, f0_whh, f0_bih, f0_bhh,
               b0_wih, b0_whh, b0_bih, b0_bhh,
               f1_wih, f1_whh, f1_bih, f1_bhh,
               b1_wih, b1_whh, b1_bih, b1_bhh,
               o_ref):
        bf16 = jnp.bfloat16

        def cell(x, h, wih, whh, bih, bhh):
            # One fused gate matmul per side; PyTorch gate order r|z|n on the lane axis.
            gi = jnp.dot(x.astype(bf16), wih[...],
                         preferred_element_type=jnp.float32) + bih[...]
            if h is None:
                gh = bhh[...]                      # h == 0 -> skip hidden-side matmul
            else:
                gh = jnp.dot(h.astype(bf16), whh[...],
                             preferred_element_type=jnp.float32) + bhh[...]
            r = jax.nn.sigmoid(gi[:, 0:H] + gh[:, 0:H])
            z = jax.nn.sigmoid(gi[:, H:2 * H] + gh[:, H:2 * H])
            n = jnp.tanh(gi[:, 2 * H:3 * H] + r * gh[:, 2 * H:3 * H])
            h_new = (1.0 - z) * n
            if h is not None:
                h_new = h_new + z * h
            return h_new

        xs = [x_ref[0, t] for t in range(T)]       # each (rows, nf), f32

        # layer 0 (fwd + bwd), time loop fully unrolled; outputs stay in vregs
        hf, hb = None, None
        y0f, y0b = [None] * T, [None] * T
        for t in range(T):
            hf = cell(xs[t], hf, f0_wih, f0_whh, f0_bih, f0_bhh)
            y0f[t] = hf
            tb = T - 1 - t
            hb = cell(xs[tb], hb, b0_wih, b0_whh, b0_bih, b0_bhh)
            y0b[tb] = hb

        # layer 1: input = fwd|bwd lane-concat (2H <= one lane tile -> single matmul)
        hf, hb = None, None
        for t in range(T):
            hf = cell(jnp.concatenate([y0f[t], y0b[t]], axis=-1), hf,
                      f1_wih, f1_whh, f1_bih, f1_bhh)
            tb = T - 1 - t
            hb = cell(jnp.concatenate([y0f[tb], y0b[tb]], axis=-1), hb,
                      b1_wih, b1_whh, b1_bih, b1_bhh)

        # bi_output[-1, :, :H] == final fwd hidden; bi_output[0, :, H:] == final bwd hidden
        o_ref[0] = jnp.concatenate([hf, hb], axis=-1).astype(o_ref.dtype)
    return kernel


def bi_gru_fused(params, x):
    """x: (B, T, rows, nf) -> (B, rows, 2*H). Grid over B ('parallel')."""
    B, T, rows, nf = x.shape
    H = params["gru_l0_f"]["whh"].shape[0]
    wargs = []
    for name in ("gru_l0_f", "gru_l0_b", "gru_l1_f", "gru_l1_b"):
        p = params[name]
        wargs += [p["wih"], p["whh"], p["bih"], p["bhh"]]
    in_specs = [pl.BlockSpec((1, T, rows, nf), lambda b: (b, 0, 0, 0))]
    in_specs += [pl.BlockSpec(w.shape, lambda b, nd=w.ndim: (0,) * nd) for w in wargs]
    return pl.pallas_call(
        _make_bigru_kernel(T, H),
        out_shape=jax.ShapeDtypeStruct((B, rows, 2 * H), jnp.float32),
        grid=(B,),
        in_specs=in_specs,
        out_specs=pl.BlockSpec((1, rows, 2 * H), lambda b: (b, 0, 0)),
        compiler_params=pltpu.CompilerParams(
            dimension_semantics=("parallel",),
            vmem_limit_bytes=_VMEM_LIMIT),
    )(x, *wargs)


# ----------------------------- parameter init (pre-transposed, bf16 matmul weights) -----------------------------

def _init_linear(key, in_f, out_f, w_dtype=jnp.bfloat16):
    kw, kb = jax.random.split(key)
    bound = 1.0 / np.sqrt(in_f)
    w = jax.random.uniform(kw, (in_f, out_f), jnp.float32, -bound, bound).astype(w_dtype)
    b = jax.random.uniform(kb, (1, out_f), jnp.float32, -bound, bound)
    return {"w": w, "b": b}


def _init_mlp3(key, d0, d1, d2, d3):
    k0, k1, k2 = jax.random.split(key, 3)
    return [_init_linear(k0, d0, d1), _init_linear(k1, d1, d2), _init_linear(k2, d2, d3)]


def _init_gru_dir(key, in_f, H):
    # gate-fused, pre-transposed: wih (in_f, 3H), whh (H, 3H); gate order r|z|n.
    k = jax.random.split(key, 4)
    bound = 1.0 / np.sqrt(H)
    u = lambda kk, shape: jax.random.uniform(kk, shape, jnp.float32, -bound, bound)
    return {"wih": u(k[0], (in_f, 3 * H)).astype(jnp.bfloat16),
            "whh": u(k[1], (H, 3 * H)).astype(jnp.bfloat16),
            "bih": u(k[2], (1, 3 * H)),
            "bhh": u(k[3], (1, 3 * H))}


def init_params(key, args):
    # The reference's bi_output slicing is only meaningful when nf_pos == nf_effect.
    assert args["nf_pos"] == args["nf_effect"], "nf_pos must equal nf_effect"
    nf_input = args["attr_dim"] + args["state_dim"] + args["n_group_percept"]
    H = args["nf_pos"]
    nf_out = args["nf_effect"]
    ks = jax.random.split(key, 11)
    return {
        "node_encoder": _init_mlp3(ks[0], nf_input, H, H, H),
        "edge_encoder": _init_mlp3(ks[1], 2 * nf_input, H, H, H),
        "node_propagator": _init_linear(ks[2], 2 * H, H),
        "edge_propagator": _init_linear(ks[3], 3 * H, H),
        "node_predictor": _init_mlp3(ks[4], 2 * H, H, H, nf_out),
        "gru_l0_f": _init_gru_dir(ks[5], nf_out, H),
        "gru_l0_b": _init_gru_dir(ks[6], nf_out, H),
        "gru_l1_f": _init_gru_dir(ks[7], 2 * H, H),
        "gru_l1_b": _init_gru_dir(ks[8], 2 * H, H),
        # tail stays in XLA -> keep it f32
        "pe_0": _init_linear(ks[9], 2 * nf_out, nf_out, w_dtype=jnp.float32),
        "pe_1": _init_linear(ks[10], nf_out, 1, w_dtype=jnp.float32),
    }


# ----------------------------- model forward -----------------------------

def parameter_estimator_forward(params, args, inputs, stat):
    mean_p, std_p, _mean_d, _std_d = stat   # mean_d/std_d unused (matches reference)
    attr, state, group_percept, Rr, Rs, n_p, n_s, _n_instance = inputs
    assert args["nf_pos"] == args["nf_effect"]

    state_norm = (state - mean_p) / std_p
    B, seq_length, _, n_group = group_percept.shape
    n_rel = Rr.shape[2]
    N = n_p + n_s
    nf_eff = args["nf_effect"]
    F = args["attr_dim"] + args["state_dim"] + n_group
    BS = B * seq_length

    # Node features (tiny; left to XLA), flattened to the row-folded 2-D layout.
    pad = jnp.zeros((B, seq_length, n_s, n_group), jnp.float32)
    attr_rep = jnp.broadcast_to(attr[:, None, :, :], (B, seq_length) + attr.shape[1:])
    x = jnp.concatenate(
        [attr_rep, state_norm, jnp.concatenate([group_percept, pad], axis=2)], axis=3)
    x2d = x.reshape(BS * N, F)

    # Fold TB (b, s) items per PropNet grid step; the per-batch relation bmms become
    # one block-diagonal matmul per step (Rr^T pre-transposed here, bf16 operands).
    TB = _choose_tb(BS, N)
    Rr_bd = _block_diag(Rr.reshape(BS, n_rel, N), TB).astype(jnp.bfloat16)
    Rs_bd = _block_diag(Rs.reshape(BS, n_rel, N), TB).astype(jnp.bfloat16)
    RrT_bd = jnp.swapaxes(Rr_bd, 1, 2)

    reps = propnet_fused(params, x2d, Rr_bd, Rs_bd, RrT_bd,
                         TB=TB, N=N, R=n_rel, pstep=2)           # (BS*N, nf_eff)
    reps = reps.reshape(B, seq_length, N, nf_eff)[:, :, :n_p]     # (B, seq, n_p, nf)

    # Bidirectional 2-layer GRU, gridded over the independent batch rows; reads the
    # (B, seq, n_p, nf) layout directly (no wrapper transpose).
    r = bi_gru_fused(params, reps)                                # (B, n_p, 2*nf_eff)
    r_mean = jnp.mean(r, axis=1)                                  # (B, 2*nf_eff)

    # Tiny tail (1-lane output) -> plain XLA on purpose.
    h = jnp.maximum(r_mean @ params["pe_0"]["w"] + params["pe_0"]["b"], 0.0)
    out = jnp.tanh(h @ params["pe_1"]["w"] + params["pe_1"]["b"])  # (B, 1)
    return jnp.broadcast_to(out, (B, n_p))


# ----------------------------- demo -----------------------------

if __name__ == "__main__":
    args = dict(attr_dim=3, state_dim=3, n_group_percept=2, nf_pos=32, nf_effect=32)
    B, seq, n_p, n_s, n_rel = 2, 4, 3, 2, 10
    N = n_p + n_s

    key = jax.random.PRNGKey(0)
    kp, k1, k2, k3, k4, k5 = jax.random.split(key, 6)
    params = init_params(kp, args)

    attr = jax.random.normal(k1, (B, N, args["attr_dim"]), jnp.float32)
    state = jax.random.normal(k2, (B, seq, N, args["state_dim"]), jnp.float32)
    group_percept = jax.random.uniform(k3, (B, seq, n_p, args["n_group_percept"]),
                                       jnp.float32)
    Rr = (jax.random.uniform(k4, (B, seq, n_rel, N)) > 0.5).astype(jnp.float32)
    Rs = (jax.random.uniform(k5, (B, seq, n_rel, N)) > 0.5).astype(jnp.float32)

    stat = (jnp.zeros((args["state_dim"],), jnp.float32),
            jnp.ones((args["state_dim"],), jnp.float32),
            jnp.zeros((args["state_dim"],), jnp.float32),
            jnp.ones((args["state_dim"],), jnp.float32))

    fwd = jax.jit(lambda p, a, s, g, rr, rs: parameter_estimator_forward(
        p, args, (a, s, g, rr, rs, n_p, n_s, 1), stat))

    out = jax.block_until_ready(fwd(params, attr, state, group_percept, Rr, Rs))
    assert out.shape == (B, n_p) and out.dtype == jnp.float32
    assert bool(jnp.all(jnp.isfinite(out)))
    print("KERNEL_OK")
</pallas_src>

<mosaic_0001>
module attributes {stable_mosaic.version = 11 : i64} {
  func.func @kernel(%arg0: i32, %arg1: memref<40x8xf32, #tpu.memory_space<vmem>>, %arg2: memref<1x80x40xbf16, #tpu.memory_space<vmem>>, %arg3: memref<1x80x40xbf16, #tpu.memory_space<vmem>>, %arg4: memref<1x40x80xbf16, #tpu.memory_space<vmem>>, %arg5: memref<8x32xbf16, #tpu.memory_space<vmem>>, %arg6: memref<1x32xf32, #tpu.memory_space<vmem>>, %arg7: memref<32x32xbf16, #tpu.memory_space<vmem>>, %arg8: memref<1x32xf32, #tpu.memory_space<vmem>>, %arg9: memref<32x32xbf16, #tpu.memory_space<vmem>>, %arg10: memref<1x32xf32, #tpu.memory_space<vmem>>, %arg11: memref<16x32xbf16, #tpu.memory_space<vmem>>, %arg12: memref<1x32xf32, #tpu.memory_space<vmem>>, %arg13: memref<32x32xbf16, #tpu.memory_space<vmem>>, %arg14: memref<1x32xf32, #tpu.memory_space<vmem>>, %arg15: memref<32x32xbf16, #tpu.memory_space<vmem>>, %arg16: memref<1x32xf32, #tpu.memory_space<vmem>>, %arg17: memref<96x32xbf16, #tpu.memory_space<vmem>>, %arg18: memref<1x32xf32, #tpu.memory_space<vmem>>, %arg19: memref<64x32xbf16, #tpu.memory_space<vmem>>, %arg20: memref<1x32xf32, #tpu.memory_space<vmem>>, %arg21: memref<64x32xbf16, #tpu.memory_space<vmem>>, %arg22: memref<1x32xf32, #tpu.memory_space<vmem>>, %arg23: memref<32x32xbf16, #tpu.memory_space<vmem>>, %arg24: memref<1x32xf32, #tpu.memory_space<vmem>>, %arg25: memref<32x32xbf16, #tpu.memory_space<vmem>>, %arg26: memref<1x32xf32, #tpu.memory_space<vmem>>, %arg27: memref<40x32xf32, #tpu.memory_space<vmem>>) attributes {dimension_semantics = [#tpu.dimension_semantics<parallel>], iteration_bounds = array<i64: 1>, scalar_prefetch = 0 : i64, scratch_operands = 0 : i64, tpu.core_type = #tpu.core_type<tc>, window_params = [{transform_indices = @transform_0, window_bounds = array<i64: 40, 8>}, {transform_indices = @transform_1, window_bounds = array<i64: 1, 80, 40>}, {transform_indices = @transform_2, window_bounds = array<i64: 1, 80, 40>}, {transform_indices = @transform_3, window_bounds = array<i64: 1, 40, 80>}, {pipeline_mode = #tpu.pipeline_mode<synchronous>, transform_indices = @transform_4, window_bounds = array<i64: 8, 32>}, {pipeline_mode = #tpu.pipeline_mode<synchronous>, transform_indices = @transform_5, window_bounds = array<i64: 1, 32>}, {pipeline_mode = #tpu.pipeline_mode<synchronous>, transform_indices = @transform_6, window_bounds = array<i64: 32, 32>}, {pipeline_mode = #tpu.pipeline_mode<synchronous>, transform_indices = @transform_7, window_bounds = array<i64: 1, 32>}, {pipeline_mode = #tpu.pipeline_mode<synchronous>, transform_indices = @transform_8, window_bounds = array<i64: 32, 32>}, {pipeline_mode = #tpu.pipeline_mode<synchronous>, transform_indices = @transform_9, window_bounds = array<i64: 1, 32>}, {pipeline_mode = #tpu.pipeline_mode<synchronous>, transform_indices = @transform_10, window_bounds = array<i64: 16, 32>}, {pipeline_mode = #tpu.pipeline_mode<synchronous>, transform_indices = @transform_11, window_bounds = array<i64: 1, 32>}, {pipeline_mode = #tpu.pipeline_mode<synchronous>, transform_indices = @transform_12, window_bounds = array<i64: 32, 32>}, {pipeline_mode = #tpu.pipeline_mode<synchronous>, transform_indices = @transform_13, window_bounds = array<i64: 1, 32>}, {pipeline_mode = #tpu.pipeline_mode<synchronous>, transform_indices = @transform_14, window_bounds = array<i64: 32, 32>}, {pipeline_mode = #tpu.pipeline_mode<synchronous>, transform_indices = @transform_15, window_bounds = array<i64: 1, 32>}, {pipeline_mode = #tpu.pipeline_mode<synchronous>, transform_indices = @transform_16, window_bounds = array<i64: 96, 32>}, {pipeline_mode = #tpu.pipeline_mode<synchronous>, transform_indices = @transform_17, window_bounds = array<i64: 1, 32>}, {pipeline_mode = #tpu.pipeline_mode<synchronous>, transform_indices = @transform_18, window_bounds = array<i64: 64, 32>}, {pipeline_mode = #tpu.pipeline_mode<synchronous>, transform_indices = @transform_19, window_bounds = array<i64: 1, 32>}, {pipeline_mode = #tpu.pipeline_mode<synchronous>, transform_indices = @transform_20, window_bounds = array<i64: 64, 32>}, {pipeline_mode = #tpu.pipeline_mode<synchronous>, transform_indices = @transform_21, window_bounds = array<i64: 1, 32>}, {pipeline_mode = #tpu.pipeline_mode<synchronous>, transform_indices = @transform_22, window_bounds = array<i64: 32, 32>}, {pipeline_mode = #tpu.pipeline_mode<synchronous>, transform_indices = @transform_23, window_bounds = array<i64: 1, 32>}, {pipeline_mode = #tpu.pipeline_mode<synchronous>, transform_indices = @transform_24, window_bounds = array<i64: 32, 32>}, {pipeline_mode = #tpu.pipeline_mode<synchronous>, transform_indices = @transform_25, window_bounds = array<i64: 1, 32>}, {transform_indices = @transform_26, window_bounds = array<i64: 40, 32>}]} {
    %c0 = arith.constant 0 : index
    %c0_0 = arith.constant 0 : index
    %0 = vector.load %arg1[%c0, %c0_0] : memref<40x8xf32, #tpu.memory_space<vmem>>, vector<40x8xf32>
    %c0_1 = arith.constant 0 : index
    %c0_2 = arith.constant 0 : index
    %c0_3 = arith.constant 0 : index
    %1 = vector.load %arg2[%c0_1, %c0_2, %c0_3] : memref<1x80x40xbf16, #tpu.memory_space<vmem>>, vector<1x80x40xbf16>
    %2 = vector.shape_cast %1 : vector<1x80x40xbf16> to vector<80x40xbf16>
    %c0_4 = arith.constant 0 : index
    %c0_5 = arith.constant 0 : index
    %c0_6 = arith.constant 0 : index
    %3 = vector.load %arg3[%c0_4, %c0_5, %c0_6] : memref<1x80x40xbf16, #tpu.memory_space<vmem>>, vector<1x80x40xbf16>
    %4 = vector.shape_cast %3 : vector<1x80x40xbf16> to vector<80x40xbf16>
    %c0_7 = arith.constant 0 : index
    %c0_8 = arith.constant 0 : index
    %c0_9 = arith.constant 0 : index
    %5 = vector.load %arg4[%c0_7, %c0_8, %c0_9] : memref<1x40x80xbf16, #tpu.memory_space<vmem>>, vector<1x40x80xbf16>
    %6 = vector.shape_cast %5 : vector<1x40x80xbf16> to vector<40x80xbf16>
    %c0_10 = arith.constant 0 : index
    %c0_11 = arith.constant 0 : index
    %7 = vector.load %arg5[%c0_10, %c0_11] : memref<8x32xbf16, #tpu.memory_space<vmem>>, vector<8x32xbf16>
    %8 = arith.truncf %0 : vector<40x8xf32> to vector<40x8xbf16>
    %cst = arith.constant dense<0.000000e+00> : vector<40x32xf32>
    %9 = tpu.matmul %8, %7, %cst {dimension_numbers = #tpu.dot_dimension_numbers<[1], [0], [0], [1], [0, 0, 1, 1], [], []>} : vector<40x8xbf16>, vector<8x32xbf16>, vector<40x32xf32> -> vector<40x32xf32>
    %c0_12 = arith.constant 0 : index
    %c0_13 = arith.constant 0 : index
    %10 = vector.load %arg6[%c0_12, %c0_13] : memref<1x32xf32, #tpu.memory_space<vmem>>, vector<1x32xf32>
    %11 = vector.broadcast %10 : vector<1x32xf32> to vector<40x32xf32>
    %12 = arith.addf %9, %11 : vector<40x32xf32>
    %cst_14 = arith.constant 0.000000e+00 : f32
    %13 = vector.broadcast %cst_14 : f32 to vector<40x32xf32>
    %14 = arith.maximumf %12, %13 : vector<40x32xf32>
    %c0_15 = arith.constant 0 : index
    %c0_16 = arith.constant 0 : index
    %15 = vector.load %arg7[%c0_15, %c0_16] : memref<32x32xbf16, #tpu.memory_space<vmem>>, vector<32x32xbf16>
    %16 = arith.truncf %14 : vector<40x32xf32> to vector<40x32xbf16>
    %cst_17 = arith.constant dense<0.000000e+00> : vector<40x32xf32>
    %17 = tpu.matmul %16, %15, %cst_17 {dimension_numbers = #tpu.dot_dimension_numbers<[1], [0], [0], [1], [0, 0, 1, 1], [], []>} : vector<40x32xbf16>, vector<32x32xbf16>, vector<40x32xf32> -> vector<40x32xf32>
    %c0_18 = arith.constant 0 : index
    %c0_19 = arith.constant 0 : index
    %18 = vector.load %arg8[%c0_18, %c0_19] : memref<1x32xf32, #tpu.memory_space<vmem>>, vector<1x32xf32>
    %19 = vector.broadcast %18 : vector<1x32xf32> to vector<40x32xf32>
    %20 = arith.addf %17, %19 : vector<40x32xf32>
    %cst_20 = arith.constant 0.000000e+00 : f32
    %21 = vector.broadcast %cst_20 : f32 to vector<40x32xf32>
    %22 = arith.maximumf %20, %21 : vector<40x32xf32>
    %c0_21 = arith.constant 0 : index
    %c0_22 = arith.constant 0 : index
    %23 = vector.load %arg9[%c0_21, %c0_22] : memref<32x32xbf16, #tpu.memory_space<vmem>>, vector<32x32xbf16>
    %24 = arith.truncf %22 : vector<40x32xf32> to vector<40x32xbf16>
    %cst_23 = arith.constant dense<0.000000e+00> : vector<40x32xf32>
    %25 = tpu.matmul %24, %23, %cst_23 {dimension_numbers = #tpu.dot_dimension_numbers<[1], [0], [0], [1], [0, 0, 1, 1], [], []>} : vector<40x32xbf16>, vector<32x32xbf16>, vector<40x32xf32> -> vector<40x32xf32>
    %c0_24 = arith.constant 0 : index
    %c0_25 = arith.constant 0 : index
    %26 = vector.load %arg10[%c0_24, %c0_25] : memref<1x32xf32, #tpu.memory_space<vmem>>, vector<1x32xf32>
    %27 = vector.broadcast %26 : vector<1x32xf32> to vector<40x32xf32>
    %28 = arith.addf %25, %27 : vector<40x32xf32>
    %cst_26 = arith.constant 0.000000e+00 : f32
    %29 = vector.broadcast %cst_26 : f32 to vector<40x32xf32>
    %30 = arith.maximumf %28, %29 : vector<40x32xf32>
    %31 = arith.truncf %0 : vector<40x8xf32> to vector<40x8xbf16>
    %cst_27 = arith.constant dense<0.000000e+00> : vector<80x8xf32>
    %32 = tpu.matmul %2, %31, %cst_27 {dimension_numbers = #tpu.dot_dimension_numbers<[1], [0], [0], [1], [0, 0, 1, 1], [], []>} : vector<80x40xbf16>, vector<40x8xbf16>, vector<80x8xf32> -> vector<80x8xf32>
    %cst_28 = arith.constant dense<0.000000e+00> : vector<80x8xf32>
    %33 = tpu.matmul %4, %31, %cst_28 {dimension_numbers = #tpu.dot_dimension_numbers<[1], [0], [0], [1], [0, 0, 1, 1], [], []>} : vector<80x40xbf16>, vector<40x8xbf16>, vector<80x8xf32> -> vector<80x8xf32>
    %c0_29 = arith.constant 0 : index
    %c0_30 = arith.constant 0 : index
    %34 = vector.load %arg11[%c0_29, %c0_30] : memref<16x32xbf16, #tpu.memory_space<vmem>>, vector<16x32xbf16>
    %35 = arith.truncf %32 : vector<80x8xf32> to vector<80x8xbf16>
    %36 = vector.extract_strided_slice %34 {offsets = [0, 0], sizes = [8, 32], strides = [1, 1]} : vector<16x32xbf16> to vector<8x32xbf16>
    %cst_31 = arith.constant dense<0.000000e+00> : vector<80x32xf32>
    %37 = tpu.matmul %35, %36, %cst_31 {dimension_numbers = #tpu.dot_dimension_numbers<[1], [0], [0], [1], [0, 0, 1, 1], [], []>} : vector<80x8xbf16>, vector<8x32xbf16>, vector<80x32xf32> -> vector<80x32xf32>
    %38 = arith.truncf %33 : vector<80x8xf32> to vector<80x8xbf16>
    %39 = vector.extract_strided_slice %34 {offsets = [8, 0], sizes = [8, 32], strides = [1, 1]} : vector<16x32xbf16> to vector<8x32xbf16>
    %cst_32 = arith.constant dense<0.000000e+00> : vector<80x32xf32>
    %40 = tpu.matmul %38, %39, %cst_32 {dimension_numbers = #tpu.dot_dimension_numbers<[1], [0], [0], [1], [0, 0, 1, 1], [], []>} : vector<80x8xbf16>, vector<8x32xbf16>, vector<80x32xf32> -> vector<80x32xf32>
    %41 = arith.addf %37, %40 : vector<80x32xf32>
    %c0_33 = arith.constant 0 : index
    %c0_34 = arith.constant 0 : index
    %42 = vector.load %arg12[%c0_33, %c0_34] : memref<1x32xf32, #tpu.memory_space<vmem>>, vector<1x32xf32>
    %43 = vector.broadcast %42 : vector<1x32xf32> to vector<80x32xf32>
    %44 = arith.addf %41, %43 : vector<80x32xf32>
    %cst_35 = arith.constant 0.000000e+00 : f32
    %45 = vector.broadcast %cst_35 : f32 to vector<80x32xf32>
    %46 = arith.maximumf %44, %45 : vector<80x32xf32>
    %c0_36 = arith.constant 0 : index
    %c0_37 = arith.constant 0 : index
    %47 = vector.load %arg13[%c0_36, %c0_37] : memref<32x32xbf16, #tpu.memory_space<vmem>>, vector<32x32xbf16>
    %48 = arith.truncf %46 : vector<80x32xf32> to vector<80x32xbf16>
    %cst_38 = arith.constant dense<0.000000e+00> : vector<80x32xf32>
    %49 = tpu.matmul %48, %47, %cst_38 {dimension_numbers = #tpu.dot_dimension_numbers<[1], [0], [0], [1], [0, 0, 1, 1], [], []>} : vector<80x32xbf16>, vector<32x32xbf16>, vector<80x32xf32> -> vector<80x32xf32>
    %c0_39 = arith.constant 0 : index
    %c0_40 = arith.constant 0 : index
    %50 = vector.load %arg14[%c0_39, %c0_40] : memref<1x32xf32, #tpu.memory_space<vmem>>, vector<1x32xf32>
    %51 = vector.broadcast %50 : vector<1x32xf32> to vector<80x32xf32>
    %52 = arith.addf %49, %51 : vector<80x32xf32>
    %cst_41 = arith.constant 0.000000e+00 : f32
    %53 = vector.broadcast %cst_41 : f32 to vector<80x32xf32>
    %54 = arith.maximumf %52, %53 : vector<80x32xf32>
    %c0_42 = arith.constant 0 : index
    %c0_43 = arith.constant 0 : index
    %55 = vector.load %arg15[%c0_42, %c0_43] : memref<32x32xbf16, #tpu.memory_space<vmem>>, vector<32x32xbf16>
    %56 = arith.truncf %54 : vector<80x32xf32> to vector<80x32xbf16>
    %cst_44 = arith.constant dense<0.000000e+00> : vector<80x32xf32>
    %57 = tpu.matmul %56, %55, %cst_44 {dimension_numbers = #tpu.dot_dimension_numbers<[1], [0], [0], [1], [0, 0, 1, 1], [], []>} : vector<80x32xbf16>, vector<32x32xbf16>, vector<80x32xf32> -> vector<80x32xf32>
    %c0_45 = arith.constant 0 : index
    %c0_46 = arith.constant 0 : index
    %58 = vector.load %arg16[%c0_45, %c0_46] : memref<1x32xf32, #tpu.memory_space<vmem>>, vector<1x32xf32>
    %59 = vector.broadcast %58 : vector<1x32xf32> to vector<80x32xf32>
    %60 = arith.addf %57, %59 : vector<80x32xf32>
    %cst_47 = arith.constant 0.000000e+00 : f32
    %61 = vector.broadcast %cst_47 : f32 to vector<80x32xf32>
    %62 = arith.maximumf %60, %61 : vector<80x32xf32>
    %63 = arith.truncf %30 : vector<40x32xf32> to vector<40x32xbf16>
    %cst_48 = arith.constant dense<0.000000e+00> : vector<80x32xf32>
    %64 = tpu.matmul %2, %63, %cst_48 {dimension_numbers = #tpu.dot_dimension_numbers<[1], [0], [0], [1], [0, 0, 1, 1], [], []>} : vector<80x40xbf16>, vector<40x32xbf16>, vector<80x32xf32> -> vector<80x32xf32>
    %cst_49 = arith.constant dense<0.000000e+00> : vector<80x32xf32>
    %65 = tpu.matmul %4, %63, %cst_49 {dimension_numbers = #tpu.dot_dimension_numbers<[1], [0], [0], [1], [0, 0, 1, 1], [], []>} : vector<80x40xbf16>, vector<40x32xbf16>, vector<80x32xf32> -> vector<80x32xf32>
    %c0_50 = arith.constant 0 : index
    %c0_51 = arith.constant 0 : index
    %66 = vector.load %arg17[%c0_50, %c0_51] : memref<96x32xbf16, #tpu.memory_space<vmem>>, vector<96x32xbf16>
    %67 = arith.truncf %62 : vector<80x32xf32> to vector<80x32xbf16>
    %68 = vector.extract_strided_slice %66 {offsets = [0, 0], sizes = [32, 32], strides = [1, 1]} : vector<96x32xbf16> to vector<32x32xbf16>
    %cst_52 = arith.constant dense<0.000000e+00> : vector<80x32xf32>
    %69 = tpu.matmul %67, %68, %cst_52 {dimension_numbers = #tpu.dot_dimension_numbers<[1], [0], [0], [1], [0, 0, 1, 1], [], []>} : vector<80x32xbf16>, vector<32x32xbf16>, vector<80x32xf32> -> vector<80x32xf32>
    %70 = arith.truncf %64 : vector<80x32xf32> to vector<80x32xbf16>
    %71 = vector.extract_strided_slice %66 {offsets = [32, 0], sizes = [32, 32], strides = [1, 1]} : vector<96x32xbf16> to vector<32x32xbf16>
    %cst_53 = arith.constant dense<0.000000e+00> : vector<80x32xf32>
    %72 = tpu.matmul %70, %71, %cst_53 {dimension_numbers = #tpu.dot_dimension_numbers<[1], [0], [0], [1], [0, 0, 1, 1], [], []>} : vector<80x32xbf16>, vector<32x32xbf16>, vector<80x32xf32> -> vector<80x32xf32>
    %73 = arith.addf %69, %72 : vector<80x32xf32>
    %74 = arith.truncf %65 : vector<80x32xf32> to vector<80x32xbf16>
    %75 = vector.extract_strided_slice %66 {offsets = [64, 0], sizes = [32, 32], strides = [1, 1]} : vector<96x32xbf16> to vector<32x32xbf16>
    %cst_54 = arith.constant dense<0.000000e+00> : vector<80x32xf32>
    %76 = tpu.matmul %74, %75, %cst_54 {dimension_numbers = #tpu.dot_dimension_numbers<[1], [0], [0], [1], [0, 0, 1, 1], [], []>} : vector<80x32xbf16>, vector<32x32xbf16>, vector<80x32xf32> -> vector<80x32xf32>
    %77 = arith.addf %73, %76 : vector<80x32xf32>
    %c0_55 = arith.constant 0 : index
    %c0_56 = arith.constant 0 : index
    %78 = vector.load %arg18[%c0_55, %c0_56] : memref<1x32xf32, #tpu.memory_space<vmem>>, vector<1x32xf32>
    %79 = vector.broadcast %78 : vector<1x32xf32> to vector<80x32xf32>
    %80 = arith.addf %77, %79 : vector<80x32xf32>
    %cst_57 = arith.constant 0.000000e+00 : f32
    %81 = vector.broadcast %cst_57 : f32 to vector<80x32xf32>
    %82 = arith.maximumf %80, %81 : vector<80x32xf32>
    %83 = arith.truncf %82 : vector<80x32xf32> to vector<80x32xbf16>
    %cst_58 = arith.constant dense<0.000000e+00> : vector<40x32xf32>
    %84 = tpu.matmul %6, %83, %cst_58 {dimension_numbers = #tpu.dot_dimension_numbers<[1], [0], [0], [1], [0, 0, 1, 1], [], []>} : vector<40x80xbf16>, vector<80x32xbf16>, vector<40x32xf32> -> vector<40x32xf32>
    %c0_59 = arith.constant 0 : index
    %c0_60 = arith.constant 0 : index
    %85 = vector.load %arg19[%c0_59, %c0_60] : memref<64x32xbf16, #tpu.memory_space<vmem>>, vector<64x32xbf16>
    %86 = arith.truncf %30 : vector<40x32xf32> to vector<40x32xbf16>
    %87 = vector.extract_strided_slice %85 {offsets = [0, 0], sizes = [32, 32], strides = [1, 1]} : vector<64x32xbf16> to vector<32x32xbf16>
    %cst_61 = arith.constant dense<0.000000e+00> : vector<40x32xf32>
    %88 = tpu.matmul %86, %87, %cst_61 {dimension_numbers = #tpu.dot_dimension_numbers<[1], [0], [0], [1], [0, 0, 1, 1], [], []>} : vector<40x32xbf16>, vector<32x32xbf16>, vector<40x32xf32> -> vector<40x32xf32>
    %89 = arith.truncf %84 : vector<40x32xf32> to vector<40x32xbf16>
    %90 = vector.extract_strided_slice %85 {offsets = [32, 0], sizes = [32, 32], strides = [1, 1]} : vector<64x32xbf16> to vector<32x32xbf16>
    %cst_62 = arith.constant dense<0.000000e+00> : vector<40x32xf32>
    %91 = tpu.matmul %89, %90, %cst_62 {dimension_numbers = #tpu.dot_dimension_numbers<[1], [0], [0], [1], [0, 0, 1, 1], [], []>} : vector<40x32xbf16>, vector<32x32xbf16>, vector<40x32xf32> -> vector<40x32xf32>
    %92 = arith.addf %88, %91 : vector<40x32xf32>
    %c0_63 = arith.constant 0 : index
    %c0_64 = arith.constant 0 : index
    %93 = vector.load %arg20[%c0_63, %c0_64] : memref<1x32xf32, #tpu.memory_space<vmem>>, vector<1x32xf32>
    %94 = vector.broadcast %93 : vector<1x32xf32> to vector<40x32xf32>
    %95 = arith.addf %92, %94 : vector<40x32xf32>
    %96 = arith.addf %95, %30 : vector<40x32xf32>
    %cst_65 = arith.constant 0.000000e+00 : f32
    %97 = vector.broadcast %cst_65 : f32 to vector<40x32xf32>
    %98 = arith.maximumf %96, %97 : vector<40x32xf32>
    %99 = arith.truncf %98 : vector<40x32xf32> to vector<40x32xbf16>
    %cst_66 = arith.constant dense<0.000000e+00> : vector<80x32xf32>
    %100 = tpu.matmul %2, %99, %cst_66 {dimension_numbers = #tpu.dot_dimension_numbers<[1], [0], [0], [1], [0, 0, 1, 1], [], []>} : vector<80x40xbf16>, vector<40x32xbf16>, vector<80x32xf32> -> vector<80x32xf32>
    %cst_67 = arith.constant dense<0.000000e+00> : vector<80x32xf32>
    %101 = tpu.matmul %4, %99, %cst_67 {dimension_numbers = #tpu.dot_dimension_numbers<[1], [0], [0], [1], [0, 0, 1, 1], [], []>} : vector<80x40xbf16>, vector<40x32xbf16>, vector<80x32xf32> -> vector<80x32xf32>
    %c0_68 = arith.constant 0 : index
    %c0_69 = arith.constant 0 : index
    %102 = vector.load %arg17[%c0_68, %c0_69] : memref<96x32xbf16, #tpu.memory_space<vmem>>, vector<96x32xbf16>
    %103 = arith.truncf %62 : vector<80x32xf32> to vector<80x32xbf16>
    %104 = vector.extract_strided_slice %102 {offsets = [0, 0], sizes = [32, 32], strides = [1, 1]} : vector<96x32xbf16> to vector<32x32xbf16>
    %cst_70 = arith.constant dense<0.000000e+00> : vector<80x32xf32>
    %105 = tpu.matmul %103, %104, %cst_70 {dimension_numbers = #tpu.dot_dimension_numbers<[1], [0], [0], [1], [0, 0, 1, 1], [], []>} : vector<80x32xbf16>, vector<32x32xbf16>, vector<80x32xf32> -> vector<80x32xf32>
    %106 = arith.truncf %100 : vector<80x32xf32> to vector<80x32xbf16>
    %107 = vector.extract_strided_slice %102 {offsets = [32, 0], sizes = [32, 32], strides = [1, 1]} : vector<96x32xbf16> to vector<32x32xbf16>
    %cst_71 = arith.constant dense<0.000000e+00> : vector<80x32xf32>
    %108 = tpu.matmul %106, %107, %cst_71 {dimension_numbers = #tpu.dot_dimension_numbers<[1], [0], [0], [1], [0, 0, 1, 1], [], []>} : vector<80x32xbf16>, vector<32x32xbf16>, vector<80x32xf32> -> vector<80x32xf32>
    %109 = arith.addf %105, %108 : vector<80x32xf32>
    %110 = arith.truncf %101 : vector<80x32xf32> to vector<80x32xbf16>
    %111 = vector.extract_strided_slice %102 {offsets = [64, 0], sizes = [32, 32], strides = [1, 1]} : vector<96x32xbf16> to vector<32x32xbf16>
    %cst_72 = arith.constant dense<0.000000e+00> : vector<80x32xf32>
    %112 = tpu.matmul %110, %111, %cst_72 {dimension_numbers = #tpu.dot_dimension_numbers<[1], [0], [0], [1], [0, 0, 1, 1], [], []>} : vector<80x32xbf16>, vector<32x32xbf16>, vector<80x32xf32> -> vector<80x32xf32>
    %113 = arith.addf %109, %112 : vector<80x32xf32>
    %c0_73 = arith.constant 0 : index
    %c0_74 = arith.constant 0 : index
    %114 = vector.load %arg18[%c0_73, %c0_74] : memref<1x32xf32, #tpu.memory_space<vmem>>, vector<1x32xf32>
    %115 = vector.broadcast %114 : vector<1x32xf32> to vector<80x32xf32>
    %116 = arith.addf %113, %115 : vector<80x32xf32>
    %cst_75 = arith.constant 0.000000e+00 : f32
    %117 = vector.broadcast %cst_75 : f32 to vector<80x32xf32>
    %118 = arith.maximumf %116, %117 : vector<80x32xf32>
    %119 = arith.truncf %118 : vector<80x32xf32> to vector<80x32xbf16>
    %cst_76 = arith.constant dense<0.000000e+00> : vector<40x32xf32>
    %120 = tpu.matmul %6, %119, %cst_76 {dimension_numbers = #tpu.dot_dimension_numbers<[1], [0], [0], [1], [0, 0, 1, 1], [], []>} : vector<40x80xbf16>, vector<80x32xbf16>, vector<40x32xf32> -> vector<40x32xf32>
    %c0_77 = arith.constant 0 : index
    %c0_78 = arith.constant 0 : index
    %121 = vector.load %arg19[%c0_77, %c0_78] : memref<64x32xbf16, #tpu.memory_space<vmem>>, vector<64x32xbf16>
    %122 = arith.truncf %30 : vector<40x32xf32> to vector<40x32xbf16>
    %123 = vector.extract_strided_slice %121 {offsets = [0, 0], sizes = [32, 32], strides = [1, 1]} : vector<64x32xbf16> to vector<32x32xbf16>
    %cst_79 = arith.constant dense<0.000000e+00> : vector<40x32xf32>
    %124 = tpu.matmul %122, %123, %cst_79 {dimension_numbers = #tpu.dot_dimension_numbers<[1], [0], [0], [1], [0, 0, 1, 1], [], []>} : vector<40x32xbf16>, vector<32x32xbf16>, vector<40x32xf32> -> vector<40x32xf32>
    %125 = arith.truncf %120 : vector<40x32xf32> to vector<40x32xbf16>
    %126 = vector.extract_strided_slice %121 {offsets = [32, 0], sizes = [32, 32], strides = [1, 1]} : vector<64x32xbf16> to vector<32x32xbf16>
    %cst_80 = arith.constant dense<0.000000e+00> : vector<40x32xf32>
    %127 = tpu.matmul %125, %126, %cst_80 {dimension_numbers = #tpu.dot_dimension_numbers<[1], [0], [0], [1], [0, 0, 1, 1], [], []>} : vector<40x32xbf16>, vector<32x32xbf16>, vector<40x32xf32> -> vector<40x32xf32>
    %128 = arith.addf %124, %127 : vector<40x32xf32>
    %c0_81 = arith.constant 0 : index
    %c0_82 = arith.constant 0 : index
    %129 = vector.load %arg20[%c0_81, %c0_82] : memref<1x32xf32, #tpu.memory_space<vmem>>, vector<1x32xf32>
    %130 = vector.broadcast %129 : vector<1x32xf32> to vector<40x32xf32>
    %131 = arith.addf %128, %130 : vector<40x32xf32>
    %132 = arith.addf %131, %98 : vector<40x32xf32>
    %cst_83 = arith.constant 0.000000e+00 : f32
    %133 = vector.broadcast %cst_83 : f32 to vector<40x32xf32>
    %134 = arith.maximumf %132, %133 : vector<40x32xf32>
    %c0_84 = arith.constant 0 : index
    %c0_85 = arith.constant 0 : index
    %135 = vector.load %arg21[%c0_84, %c0_85] : memref<64x32xbf16, #tpu.memory_space<vmem>>, vector<64x32xbf16>
    %136 = arith.truncf %30 : vector<40x32xf32> to vector<40x32xbf16>
    %137 = vector.extract_strided_slice %135 {offsets = [0, 0], sizes = [32, 32], strides = [1, 1]} : vector<64x32xbf16> to vector<32x32xbf16>
    %cst_86 = arith.constant dense<0.000000e+00> : vector<40x32xf32>
    %138 = tpu.matmul %136, %137, %cst_86 {dimension_numbers = #tpu.dot_dimension_numbers<[1], [0], [0], [1], [0, 0, 1, 1], [], []>} : vector<40x32xbf16>, vector<32x32xbf16>, vector<40x32xf32> -> vector<40x32xf32>
    %139 = arith.truncf %134 : vector<40x32xf32> to vector<40x32xbf16>
    %140 = vector.extract_strided_slice %135 {offsets = [32, 0], sizes = [32, 32], strides = [1, 1]} : vector<64x32xbf16> to vector<32x32xbf16>
    %cst_87 = arith.constant dense<0.000000e+00> : vector<40x32xf32>
    %141 = tpu.matmul %139, %140, %cst_87 {dimension_numbers = #tpu.dot_dimension_numbers<[1], [0], [0], [1], [0, 0, 1, 1], [], []>} : vector<40x32xbf16>, vector<32x32xbf16>, vector<40x32xf32> -> vector<40x32xf32>
    %142 = arith.addf %138, %141 : vector<40x32xf32>
    %c0_88 = arith.constant 0 : index
    %c0_89 = arith.constant 0 : index
    %143 = vector.load %arg22[%c0_88, %c0_89] : memref<1x32xf32, #tpu.memory_space<vmem>>, vector<1x32xf32>
    %144 = vector.broadcast %143 : vector<1x32xf32> to vector<40x32xf32>
    %145 = arith.addf %142, %144 : vector<40x32xf32>
    %cst_90 = arith.constant 0.000000e+00 : f32
    %146 = vector.broadcast %cst_90 : f32 to vector<40x32xf32>
    %147 = arith.maximumf %145, %146 : vector<40x32xf32>
    %c0_91 = arith.constant 0 : index
    %c0_92 = arith.constant 0 : index
    %148 = vector.load %arg23[%c0_91, %c0_92] : memref<32x32xbf16, #tpu.memory_space<vmem>>, vector<32x32xbf16>
    %149 = arith.truncf %147 : vector<40x32xf32> to vector<40x32xbf16>
    %cst_93 = arith.constant dense<0.000000e+00> : vector<40x32xf32>
    %150 = tpu.matmul %149, %148, %cst_93 {dimension_numbers = #tpu.dot_dimension_numbers<[1], [0], [0], [1], [0, 0, 1, 1], [], []>} : vector<40x32xbf16>, vector<32x32xbf16>, vector<40x32xf32> -> vector<40x32xf32>
    %c0_94 = arith.constant 0 : index
    %c0_95 = arith.constant 0 : index
    %151 = vector.load %arg24[%c0_94, %c0_95] : memref<1x32xf32, #tpu.memory_space<vmem>>, vector<1x32xf32>
    %152 = vector.broadcast %151 : vector<1x32xf32> to vector<40x32xf32>
    %153 = arith.addf %150, %152 : vector<40x32xf32>
    %cst_96 = arith.constant 0.000000e+00 : f32
    %154 = vector.broadcast %cst_96 : f32 to vector<40x32xf32>
    %155 = arith.maximumf %153, %154 : vector<40x32xf32>
    %c0_97 = arith.constant 0 : index
    %c0_98 = arith.constant 0 : index
    %156 = vector.load %arg25[%c0_97, %c0_98] : memref<32x32xbf16, #tpu.memory_space<vmem>>, vector<32x32xbf16>
    %157 = arith.truncf %155 : vector<40x32xf32> to vector<40x32xbf16>
    %cst_99 = arith.constant dense<0.000000e+00> : vector<40x32xf32>
    %158 = tpu.matmul %157, %156, %cst_99 {dimension_numbers = #tpu.dot_dimension_numbers<[1], [0], [0], [1], [0, 0, 1, 1], [], []>} : vector<40x32xbf16>, vector<32x32xbf16>, vector<40x32xf32> -> vector<40x32xf32>
    %c0_100 = arith.constant 0 : index
    %c0_101 = arith.constant 0 : index
    %159 = vector.load %arg26[%c0_100, %c0_101] : memref<1x32xf32, #tpu.memory_space<vmem>>, vector<1x32xf32>
    %160 = vector.broadcast %159 : vector<1x32xf32> to vector<40x32xf32>
    %161 = arith.addf %158, %160 : vector<40x32xf32>
    %c0_102 = arith.constant 0 : index
    %c0_103 = arith.constant 0 : index
    %162 = vector.load %arg27[%c0_102, %c0_103] : memref<40x32xf32, #tpu.memory_space<vmem>>, vector<40x32xf32>
    tpu.vector_store %arg27[%c0_102, %c0_103], %161 {strides = array<i32>} : memref<40x32xf32, #tpu.memory_space<vmem>>, vector<40x32xf32>,
    return
  }
  func.func @transform_0(%arg0: i32) -> (i32, i32) {
    %c0_i32 = arith.constant 0 : i32
    %c0_i32_0 = arith.constant 0 : i32
    return %arg0, %c0_i32 : i32, i32
  }
  func.func @transform_1(%arg0: i32) -> (i32, i32, i32) {
    %c0_i32 = arith.constant 0 : i32
    %c0_i32_0 = arith.constant 0 : i32
    %c0_i32_1 = arith.constant 0 : i32
    return %arg0, %c0_i32, %c0_i32_0 : i32, i32, i32
  }
  func.func @transform_2(%arg0: i32) -> (i32, i32, i32) {
    %c0_i32 = arith.constant 0 : i32
    %c0_i32_0 = arith.constant 0 : i32
    %c0_i32_1 = arith.constant 0 : i32
    return %arg0, %c0_i32, %c0_i32_0 : i32, i32, i32
  }
  func.func @transform_3(%arg0: i32) -> (i32, i32, i32) {
    %c0_i32 = arith.constant 0 : i32
    %c0_i32_0 = arith.constant 0 : i32
    %c0_i32_1 = arith.constant 0 : i32
    return %arg0, %c0_i32, %c0_i32_0 : i32, i32, i32
  }
  func.func @transform_4(%arg0: i32) -> (i32, i32) {
    %c0_i32 = arith.constant 0 : i32
    %c0_i32_0 = arith.constant 0 : i32
    %c0_i32_1 = arith.constant 0 : i32
    return %c0_i32, %c0_i32_0 : i32, i32
  }
  func.func @transform_5(%arg0: i32) -> (i32, i32) {
    %c0_i32 = arith.constant 0 : i32
    %c0_i32_0 = arith.constant 0 : i32
    %c0_i32_1 = arith.constant 0 : i32
    return %c0_i32, %c0_i32_0 : i32, i32
  }
  func.func @transform_6(%arg0: i32) -> (i32, i32) {
    %c0_i32 = arith.constant 0 : i32
    %c0_i32_0 = arith.constant 0 : i32
    %c0_i32_1 = arith.constant 0 : i32
    return %c0_i32, %c0_i32_0 : i32, i32
  }
  func.func @transform_7(%arg0: i32) -> (i32, i32) {
    %c0_i32 = arith.constant 0 : i32
    %c0_i32_0 = arith.constant 0 : i32
    %c0_i32_1 = arith.constant 0 : i32
    return %c0_i32, %c0_i32_0 : i32, i32
  }
  func.func @transform_8(%arg0: i32) -> (i32, i32) {
    %c0_i32 = arith.constant 0 : i32
    %c0_i32_0 = arith.constant 0 : i32
    %c0_i32_1 = arith.constant 0 : i32
    return %c0_i32, %c0_i32_0 : i32, i32
  }
  func.func @transform_9(%arg0: i32) -> (i32, i32) {
    %c0_i32 = arith.constant 0 : i32
    %c0_i32_0 = arith.constant 0 : i32
    %c0_i32_1 = arith.constant 0 : i32
    return %c0_i32, %c0_i32_0 : i32, i32
  }
  func.func @transform_10(%arg0: i32) -> (i32, i32) {
    %c0_i32 = arith.constant 0 : i32
    %c0_i32_0 = arith.constant 0 : i32
    %c0_i32_1 = arith.constant 0 : i32
    return %c0_i32, %c0_i32_0 : i32, i32
  }
  func.func @transform_11(%arg0: i32) -> (i32, i32) {
    %c0_i32 = arith.constant 0 : i32
    %c0_i32_0 = arith.constant 0 : i32
    %c0_i32_1 = arith.constant 0 : i32
    return %c0_i32, %c0_i32_0 : i32, i32
  }
  func.func @transform_12(%arg0: i32) -> (i32, i32) {
    %c0_i32 = arith.constant 0 : i32
    %c0_i32_0 = arith.constant 0 : i32
    %c0_i32_1 = arith.constant 0 : i32
    return %c0_i32, %c0_i32_0 : i32, i32
  }
  func.func @transform_13(%arg0: i32) -> (i32, i32) {
    %c0_i32 = arith.constant 0 : i32
    %c0_i32_0 = arith.constant 0 : i32
    %c0_i32_1 = arith.constant 0 : i32
    return %c0_i32, %c0_i32_0 : i32, i32
  }
  func.func @transform_14(%arg0: i32) -> (i32, i32) {
    %c0_i32 = arith.constant 0 : i32
    %c0_i32_0 = arith.constant 0 : i32
    %c0_i32_1 = arith.constant 0 : i32
    return %c0_i32, %c0_i32_0 : i32, i32
  }
  func.func @transform_15(%arg0: i32) -> (i32, i32) {
    %c0_i32 = arith.constant 0 : i32
    %c0_i32_0 = arith.constant 0 : i32
    %c0_i32_1 = arith.constant 0 : i32
    return %c0_i32, %c0_i32_0 : i32, i32
  }
  func.func @transform_16(%arg0: i32) -> (i32, i32) {
    %c0_i32 = arith.constant 0 : i32
    %c0_i32_0 = arith.constant 0 : i32
    %c0_i32_1 = arith.constant 0 : i32
    return %c0_i32, %c0_i32_0 : i32, i32
  }
  func.func @transform_17(%arg0: i32) -> (i32, i32) {
    %c0_i32 = arith.constant 0 : i32
    %c0_i32_0 = arith.constant 0 : i32
    %c0_i32_1 = arith.constant 0 : i32
    return %c0_i32, %c0_i32_0 : i32, i32
  }
  func.func @transform_18(%arg0: i32) -> (i32, i32) {
    %c0_i32 = arith.constant 0 : i32
    %c0_i32_0 = arith.constant 0 : i32
    %c0_i32_1 = arith.constant 0 : i32
    return %c0_i32, %c0_i32_0 : i32, i32
  }
  func.func @transform_19(%arg0: i32) -> (i32, i32) {
    %c0_i32 = arith.constant 0 : i32
    %c0_i32_0 = arith.constant 0 : i32
    %c0_i32_1 = arith.constant 0 : i32
    return %c0_i32, %c0_i32_0 : i32, i32
  }
  func.func @transform_20(%arg0: i32) -> (i32, i32) {
    %c0_i32 = arith.constant 0 : i32
    %c0_i32_0 = arith.constant 0 : i32
    %c0_i32_1 = arith.constant 0 : i32
    return %c0_i32, %c0_i32_0 : i32, i32
  }
  func.func @transform_21(%arg0: i32) -> (i32, i32) {
    %c0_i32 = arith.constant 0 : i32
    %c0_i32_0 = arith.constant 0 : i32
    %c0_i32_1 = arith.constant 0 : i32
    return %c0_i32, %c0_i32_0 : i32, i32
  }
  func.func @transform_22(%arg0: i32) -> (i32, i32) {
    %c0_i32 = arith.constant 0 : i32
    %c0_i32_0 = arith.constant 0 : i32
    %c0_i32_1 = arith.constant 0 : i32
    return %c0_i32, %c0_i32_0 : i32, i32
  }
  func.func @transform_23(%arg0: i32) -> (i32, i32) {
    %c0_i32 = arith.constant 0 : i32
    %c0_i32_0 = arith.constant 0 : i32
    %c0_i32_1 = arith.constant 0 : i32
    return %c0_i32, %c0_i32_0 : i32, i32
  }
  func.func @transform_24(%arg0: i32) -> (i32, i32) {
    %c0_i32 = arith.constant 0 : i32
    %c0_i32_0 = arith.constant 0 : i32
    %c0_i32_1 = arith.constant 0 : i32
    return %c0_i32, %c0_i32_0 : i32, i32
  }
  func.func @transform_25(%arg0: i32) -> (i32, i32) {
    %c0_i32 = arith.constant 0 : i32
    %c0_i32_0 = arith.constant 0 : i32
    %c0_i32_1 = arith.constant 0 : i32
    return %c0_i32, %c0_i32_0 : i32, i32
  }
  func.func @transform_26(%arg0: i32) -> (i32, i32) {
    %c0_i32 = arith.constant 0 : i32
    %c0_i32_0 = arith.constant 0 : i32
    return %arg0, %c0_i32 : i32, i32
  }
}

module attributes {stable_mosaic.version = 11 : i64} {
  func.func @kernel(%arg0: i32, %arg1: memref<1x4x3x32xf32, #tpu.memory_space<vmem>>, %arg2: memref<32x96xbf16, #tpu.memory_space<vmem>>, %arg3: memref<32x96xbf16, #tpu.memory_space<vmem>>, %arg4: memref<1x96xf32, #tpu.memory_space<vmem>>, %arg5: memref<1x96xf32, #tpu.memory_space<vmem>>, %arg6: memref<32x96xbf16, #tpu.memory_space<vmem>>, %arg7: memref<32x96xbf16, #tpu.memory_space<vmem>>, %arg8: memref<1x96xf32, #tpu.memory_space<vmem>>, %arg9: memref<1x96xf32, #tpu.memory_space<vmem>>, %arg10: memref<64x96xbf16, #tpu.memory_space<vmem>>, %arg11: memref<32x96xbf16, #tpu.memory_space<vmem>>, %arg12: memref<1x96xf32, #tpu.memory_space<vmem>>, %arg13: memref<1x96xf32, #tpu.memory_space<vmem>>, %arg14: memref<64x96xbf16, #tpu.memory_space<vmem>>, %arg15: memref<32x96xbf16, #tpu.memory_space<vmem>>, %arg16: memref<1x96xf32, #tpu.memory_space<vmem>>, %arg17: memref<1x96xf32, #tpu.memory_space<vmem>>, %arg18: memref<1x3x64xf32, #tpu.memory_space<vmem>>) attributes {dimension_semantics = [#tpu.dimension_semantics<parallel>], iteration_bounds = array<i64: 2>, scalar_prefetch = 0 : i64, scratch_operands = 0 : i64, tpu.core_type = #tpu.core_type<tc>, window_params = [{transform_indices = @transform_0, window_bounds = array<i64: 1, 4, 3, 32>}, {pipeline_mode = #tpu.pipeline_mode<synchronous>, transform_indices = @transform_1, window_bounds = array<i64: 32, 96>}, {pipeline_mode = #tpu.pipeline_mode<synchronous>, transform_indices = @transform_2, window_bounds = array<i64: 32, 96>}, {pipeline_mode = #tpu.pipeline_mode<synchronous>, transform_indices = @transform_3, window_bounds = array<i64: 1, 96>}, {pipeline_mode = #tpu.pipeline_mode<synchronous>, transform_indices = @transform_4, window_bounds = array<i64: 1, 96>}, {pipeline_mode = #tpu.pipeline_mode<synchronous>, transform_indices = @transform_5, window_bounds = array<i64: 32, 96>}, {pipeline_mode = #tpu.pipeline_mode<synchronous>, transform_indices = @transform_6, window_bounds = array<i64: 32, 96>}, {pipeline_mode = #tpu.pipeline_mode<synchronous>, transform_indices = @transform_7, window_bounds = array<i64: 1, 96>}, {pipeline_mode = #tpu.pipeline_mode<synchronous>, transform_indices = @transform_8, window_bounds = array<i64: 1, 96>}, {pipeline_mode = #tpu.pipeline_mode<synchronous>, transform_indices = @transform_9, window_bounds = array<i64: 64, 96>}, {pipeline_mode = #tpu.pipeline_mode<synchronous>, transform_indices = @transform_10, window_bounds = array<i64: 32, 96>}, {pipeline_mode = #tpu.pipeline_mode<synchronous>, transform_indices = @transform_11, window_bounds = array<i64: 1, 96>}, {pipeline_mode = #tpu.pipeline_mode<synchronous>, transform_indices = @transform_12, window_bounds = array<i64: 1, 96>}, {pipeline_mode = #tpu.pipeline_mode<synchronous>, transform_indices = @transform_13, window_bounds = array<i64: 64, 96>}, {pipeline_mode = #tpu.pipeline_mode<synchronous>, transform_indices = @transform_14, window_bounds = array<i64: 32, 96>}, {pipeline_mode = #tpu.pipeline_mode<synchronous>, transform_indices = @transform_15, window_bounds = array<i64: 1, 96>}, {pipeline_mode = #tpu.pipeline_mode<synchronous>, transform_indices = @transform_16, window_bounds = array<i64: 1, 96>}, {transform_indices = @transform_17, window_bounds = array<i64: 1, 3, 64>}]} {
    %c0 = arith.constant 0 : index
    %c0_0 = arith.constant 0 : index
    %c0_1 = arith.constant 0 : index
    %c0_2 = arith.constant 0 : index
    %0 = vector.load %arg1[%c0, %c0_0, %c0_1, %c0_2] : memref<1x4x3x32xf32, #tpu.memory_space<vmem>>, vector<1x1x3x32xf32>
    %1 = vector.shape_cast %0 : vector<1x1x3x32xf32> to vector<3x32xf32>
    %c0_3 = arith.constant 0 : index
    %c1 = arith.constant 1 : index
    %c0_4 = arith.constant 0 : index
    %c0_5 = arith.constant 0 : index
    %2 = vector.load %arg1[%c0_3, %c1, %c0_4, %c0_5] : memref<1x4x3x32xf32, #tpu.memory_space<vmem>>, vector<1x1x3x32xf32>
    %3 = vector.shape_cast %2 : vector<1x1x3x32xf32> to vector<3x32xf32>
    %c0_6 = arith.constant 0 : index
    %c2 = arith.constant 2 : index
    %c0_7 = arith.constant 0 : index
    %c0_8 = arith.constant 0 : index
    %4 = vector.load %arg1[%c0_6, %c2, %c0_7, %c0_8] : memref<1x4x3x32xf32, #tpu.memory_space<vmem>>, vector<1x1x3x32xf32>
    %5 = vector.shape_cast %4 : vector<1x1x3x32xf32> to vector<3x32xf32>
    %c0_9 = arith.constant 0 : index
    %c3 = arith.constant 3 : index
    %c0_10 = arith.constant 0 : index
    %c0_11 = arith.constant 0 : index
    %6 = vector.load %arg1[%c0_9, %c3, %c0_10, %c0_11] : memref<1x4x3x32xf32, #tpu.memory_space<vmem>>, vector<1x1x3x32xf32>
    %7 = vector.shape_cast %6 : vector<1x1x3x32xf32> to vector<3x32xf32>
    %8 = arith.truncf %1 : vector<3x32xf32> to vector<3x32xbf16>
    %c0_12 = arith.constant 0 : index
    %c0_13 = arith.constant 0 : index
    %9 = vector.load %arg2[%c0_12, %c0_13] : memref<32x96xbf16, #tpu.memory_space<vmem>>, vector<32x96xbf16>
    %cst = arith.constant dense<0.000000e+00> : vector<3x96xf32>
    %10 = tpu.matmul %8, %9, %cst {dimension_numbers = #tpu.dot_dimension_numbers<[1], [0], [0], [1], [0, 0, 1, 1], [], []>} : vector<3x32xbf16>, vector<32x96xbf16>, vector<3x96xf32> -> vector<3x96xf32>
    %c0_14 = arith.constant 0 : index
    %c0_15 = arith.constant 0 : index
    %11 = vector.load %arg4[%c0_14, %c0_15] : memref<1x96xf32, #tpu.memory_space<vmem>>, vector<1x96xf32>
    %12 = vector.broadcast %11 : vector<1x96xf32> to vector<3x96xf32>
    %13 = arith.addf %10, %12 : vector<3x96xf32>
    %c0_16 = arith.constant 0 : index
    %c0_17 = arith.constant 0 : index
    %14 = vector.load %arg5[%c0_16, %c0_17] : memref<1x96xf32, #tpu.memory_space<vmem>>, vector<1x96xf32>
    %15 = vector.extract_strided_slice %13 {offsets = [0, 0], sizes = [3, 32], strides = [1, 1]} : vector<3x96xf32> to vector<3x32xf32>
    %16 = vector.extract_strided_slice %14 {offsets = [0, 0], sizes = [1, 32], strides = [1, 1]} : vector<1x96xf32> to vector<1x32xf32>
    %17 = vector.broadcast %16 : vector<1x32xf32> to vector<3x32xf32>
    %18 = arith.addf %15, %17 : vector<3x32xf32>
    %19 = arith.negf %18 : vector<3x32xf32>
    %20 = math.exp %19 : vector<3x32xf32>
    %cst_18 = arith.constant 1.000000e+00 : f32
    %21 = vector.broadcast %cst_18 : f32 to vector<3x32xf32>
    %22 = arith.addf %21, %20 : vector<3x32xf32>
    %23 = arith.divf %21, %22 : vector<3x32xf32>
    %24 = vector.extract_strided_slice %13 {offsets = [0, 32], sizes = [3, 32], strides = [1, 1]} : vector<3x96xf32> to vector<3x32xf32>
    %25 = vector.extract_strided_slice %14 {offsets = [0, 32], sizes = [1, 32], strides = [1, 1]} : vector<1x96xf32> to vector<1x32xf32>
    %26 = vector.broadcast %25 : vector<1x32xf32> to vector<3x32xf32>
    %27 = arith.addf %24, %26 : vector<3x32xf32>
    %28 = arith.negf %27 : vector<3x32xf32>
    %29 = math.exp %28 : vector<3x32xf32>
    %cst_19 = arith.constant 1.000000e+00 : f32
    %30 = vector.broadcast %cst_19 : f32 to vector<3x32xf32>
    %31 = arith.addf %30, %29 : vector<3x32xf32>
    %32 = arith.divf %30, %31 : vector<3x32xf32>
    %33 = vector.extract_strided_slice %13 {offsets = [0, 64], sizes = [3, 32], strides = [1, 1]} : vector<3x96xf32> to vector<3x32xf32>
    %34 = vector.extract_strided_slice %14 {offsets = [0, 64], sizes = [1, 32], strides = [1, 1]} : vector<1x96xf32> to vector<1x32xf32>
    %35 = vector.broadcast %34 : vector<1x32xf32> to vector<3x32xf32>
    %36 = arith.mulf %23, %35 : vector<3x32xf32>
    %37 = arith.addf %33, %36 : vector<3x32xf32>
    %38 = math.tanh %37 : vector<3x32xf32>
    %cst_20 = arith.constant 1.000000e+00 : f32
    %39 = vector.broadcast %cst_20 : f32 to vector<3x32xf32>
    %40 = arith.subf %39, %32 : vector<3x32xf32>
    %41 = arith.mulf %40, %38 : vector<3x32xf32>
    %42 = arith.truncf %7 : vector<3x32xf32> to vector<3x32xbf16>
    %c0_21 = arith.constant 0 : index
    %c0_22 = arith.constant 0 : index
    %43 = vector.load %arg6[%c0_21, %c0_22] : memref<32x96xbf16, #tpu.memory_space<vmem>>, vector<32x96xbf16>
    %cst_23 = arith.constant dense<0.000000e+00> : vector<3x96xf32>
    %44 = tpu.matmul %42, %43, %cst_23 {dimension_numbers = #tpu.dot_dimension_numbers<[1], [0], [0], [1], [0, 0, 1, 1], [], []>} : vector<3x32xbf16>, vector<32x96xbf16>, vector<3x96xf32> -> vector<3x96xf32>
    %c0_24 = arith.constant 0 : index
    %c0_25 = arith.constant 0 : index
    %45 = vector.load %arg8[%c0_24, %c0_25] : memref<1x96xf32, #tpu.memory_space<vmem>>, vector<1x96xf32>
    %46 = vector.broadcast %45 : vector<1x96xf32> to vector<3x96xf32>
    %47 = arith.addf %44, %46 : vector<3x96xf32>
    %c0_26 = arith.constant 0 : index
    %c0_27 = arith.constant 0 : index
    %48 = vector.load %arg9[%c0_26, %c0_27] : memref<1x96xf32, #tpu.memory_space<vmem>>, vector<1x96xf32>
    %49 = vector.extract_strided_slice %47 {offsets = [0, 0], sizes = [3, 32], strides = [1, 1]} : vector<3x96xf32> to vector<3x32xf32>
    %50 = vector.extract_strided_slice %48 {offsets = [0, 0], sizes = [1, 32], strides = [1, 1]} : vector<1x96xf32> to vector<1x32xf32>
    %51 = vector.broadcast %50 : vector<1x32xf32> to vector<3x32xf32>
    %52 = arith.addf %49, %51 : vector<3x32xf32>
    %53 = arith.negf %52 : vector<3x32xf32>
    %54 = math.exp %53 : vector<3x32xf32>
    %cst_28 = arith.constant 1.000000e+00 : f32
    %55 = vector.broadcast %cst_28 : f32 to vector<3x32xf32>
    %56 = arith.addf %55, %54 : vector<3x32xf32>
    %57 = arith.divf %55, %56 : vector<3x32xf32>
    %58 = vector.extract_strided_slice %47 {offsets = [0, 32], sizes = [3, 32], strides = [1, 1]} : vector<3x96xf32> to vector<3x32xf32>
    %59 = vector.extract_strided_slice %48 {offsets = [0, 32], sizes = [1, 32], strides = [1, 1]} : vector<1x96xf32> to vector<1x32xf32>
    %60 = vector.broadcast %59 : vector<1x32xf32> to vector<3x32xf32>
    %61 = arith.addf %58, %60 : vector<3x32xf32>
    %62 = arith.negf %61 : vector<3x32xf32>
    %63 = math.exp %62 : vector<3x32xf32>
    %cst_29 = arith.constant 1.000000e+00 : f32
    %64 = vector.broadcast %cst_29 : f32 to vector<3x32xf32>
    %65 = arith.addf %64, %63 : vector<3x32xf32>
    %66 = arith.divf %64, %65 : vector<3x32xf32>
    %67 = vector.extract_strided_slice %47 {offsets = [0, 64], sizes = [3, 32], strides = [1, 1]} : vector<3x96xf32> to vector<3x32xf32>
    %68 = vector.extract_strided_slice %48 {offsets = [0, 64], sizes = [1, 32], strides = [1, 1]} : vector<1x96xf32> to vector<1x32xf32>
    %69 = vector.broadcast %68 : vector<1x32xf32> to vector<3x32xf32>
    %70 = arith.mulf %57, %69 : vector<3x32xf32>
    %71 = arith.addf %67, %70 : vector<3x32xf32>
    %72 = math.tanh %71 : vector<3x32xf32>
    %cst_30 = arith.constant 1.000000e+00 : f32
    %73 = vector.broadcast %cst_30 : f32 to vector<3x32xf32>
    %74 = arith.subf %73, %66 : vector<3x32xf32>
    %75 = arith.mulf %74, %72 : vector<3x32xf32>
    %76 = arith.truncf %3 : vector<3x32xf32> to vector<3x32xbf16>
    %c0_31 = arith.constant 0 : index
    %c0_32 = arith.constant 0 : index
    %77 = vector.load %arg2[%c0_31, %c0_32] : memref<32x96xbf16, #tpu.memory_space<vmem>>, vector<32x96xbf16>
    %cst_33 = arith.constant dense<0.000000e+00> : vector<3x96xf32>
    %78 = tpu.matmul %76, %77, %cst_33 {dimension_numbers = #tpu.dot_dimension_numbers<[1], [0], [0], [1], [0, 0, 1, 1], [], []>} : vector<3x32xbf16>, vector<32x96xbf16>, vector<3x96xf32> -> vector<3x96xf32>
    %c0_34 = arith.constant 0 : index
    %c0_35 = arith.constant 0 : index
    %79 = vector.load %arg4[%c0_34, %c0_35] : memref<1x96xf32, #tpu.memory_space<vmem>>, vector<1x96xf32>
    %80 = vector.broadcast %79 : vector<1x96xf32> to vector<3x96xf32>
    %81 = arith.addf %78, %80 : vector<3x96xf32>
    %82 = arith.truncf %41 : vector<3x32xf32> to vector<3x32xbf16>
    %c0_36 = arith.constant 0 : index
    %c0_37 = arith.constant 0 : index
    %83 = vector.load %arg3[%c0_36, %c0_37] : memref<32x96xbf16, #tpu.memory_space<vmem>>, vector<32x96xbf16>
    %cst_38 = arith.constant dense<0.000000e+00> : vector<3x96xf32>
    %84 = tpu.matmul %82, %83, %cst_38 {dimension_numbers = #tpu.dot_dimension_numbers<[1], [0], [0], [1], [0, 0, 1, 1], [], []>} : vector<3x32xbf16>, vector<32x96xbf16>, vector<3x96xf32> -> vector<3x96xf32>
    %c0_39 = arith.constant 0 : index
    %c0_40 = arith.constant 0 : index
    %85 = vector.load %arg5[%c0_39, %c0_40] : memref<1x96xf32, #tpu.memory_space<vmem>>, vector<1x96xf32>
    %86 = vector.broadcast %85 : vector<1x96xf32> to vector<3x96xf32>
    %87 = arith.addf %84, %86 : vector<3x96xf32>
    %88 = vector.extract_strided_slice %81 {offsets = [0, 0], sizes = [3, 32], strides = [1, 1]} : vector<3x96xf32> to vector<3x32xf32>
    %89 = vector.extract_strided_slice %87 {offsets = [0, 0], sizes = [3, 32], strides = [1, 1]} : vector<3x96xf32> to vector<3x32xf32>
    %90 = arith.addf %88, %89 : vector<3x32xf32>
    %91 = arith.negf %90 : vector<3x32xf32>
    %92 = math.exp %91 : vector<3x32xf32>
    %cst_41 = arith.constant 1.000000e+00 : f32
    %93 = vector.broadcast %cst_41 : f32 to vector<3x32xf32>
    %94 = arith.addf %93, %92 : vector<3x32xf32>
    %95 = arith.divf %93, %94 : vector<3x32xf32>
    %96 = vector.extract_strided_slice %81 {offsets = [0, 32], sizes = [3, 32], strides = [1, 1]} : vector<3x96xf32> to vector<3x32xf32>
    %97 = vector.extract_strided_slice %87 {offsets = [0, 32], sizes = [3, 32], strides = [1, 1]} : vector<3x96xf32> to vector<3x32xf32>
    %98 = arith.addf %96, %97 : vector<3x32xf32>
    %99 = arith.negf %98 : vector<3x32xf32>
    %100 = math.exp %99 : vector<3x32xf32>
    %cst_42 = arith.constant 1.000000e+00 : f32
    %101 = vector.broadcast %cst_42 : f32 to vector<3x32xf32>
    %102 = arith.addf %101, %100 : vector<3x32xf32>
    %103 = arith.divf %101, %102 : vector<3x32xf32>
    %104 = vector.extract_strided_slice %81 {offsets = [0, 64], sizes = [3, 32], strides = [1, 1]} : vector<3x96xf32> to vector<3x32xf32>
    %105 = vector.extract_strided_slice %87 {offsets = [0, 64], sizes = [3, 32], strides = [1, 1]} : vector<3x96xf32> to vector<3x32xf32>
    %106 = arith.mulf %95, %105 : vector<3x32xf32>
    %107 = arith.addf %104, %106 : vector<3x32xf32>
    %108 = math.tanh %107 : vector<3x32xf32>
    %cst_43 = arith.constant 1.000000e+00 : f32
    %109 = vector.broadcast %cst_43 : f32 to vector<3x32xf32>
    %110 = arith.subf %109, %103 : vector<3x32xf32>
    %111 = arith.mulf %110, %108 : vector<3x32xf32>
    %112 = arith.mulf %103, %41 : vector<3x32xf32>
    %113 = arith.addf %111, %112 : vector<3x32xf32>
    %114 = arith.truncf %5 : vector<3x32xf32> to vector<3x32xbf16>
    %c0_44 = arith.constant 0 : index
    %c0_45 = arith.constant 0 : index
    %115 = vector.load %arg6[%c0_44, %c0_45] : memref<32x96xbf16, #tpu.memory_space<vmem>>, vector<32x96xbf16>
    %cst_46 = arith.constant dense<0.000000e+00> : vector<3x96xf32>
    %116 = tpu.matmul %114, %115, %cst_46 {dimension_numbers = #tpu.dot_dimension_numbers<[1], [0], [0], [1], [0, 0, 1, 1], [], []>} : vector<3x32xbf16>, vector<32x96xbf16>, vector<3x96xf32> -> vector<3x96xf32>
    %c0_47 = arith.constant 0 : index
    %c0_48 = arith.constant 0 : index
    %117 = vector.load %arg8[%c0_47, %c0_48] : memref<1x96xf32, #tpu.memory_space<vmem>>, vector<1x96xf32>
    %118 = vector.broadcast %117 : vector<1x96xf32> to vector<3x96xf32>
    %119 = arith.addf %116, %118 : vector<3x96xf32>
    %120 = arith.truncf %75 : vector<3x32xf32> to vector<3x32xbf16>
    %c0_49 = arith.constant 0 : index
    %c0_50 = arith.constant 0 : index
    %121 = vector.load %arg7[%c0_49, %c0_50] : memref<32x96xbf16, #tpu.memory_space<vmem>>, vector<32x96xbf16>
    %cst_51 = arith.constant dense<0.000000e+00> : vector<3x96xf32>
    %122 = tpu.matmul %120, %121, %cst_51 {dimension_numbers = #tpu.dot_dimension_numbers<[1], [0], [0], [1], [0, 0, 1, 1], [], []>} : vector<3x32xbf16>, vector<32x96xbf16>, vector<3x96xf32> -> vector<3x96xf32>
    %c0_52 = arith.constant 0 : index
    %c0_53 = arith.constant 0 : index
    %123 = vector.load %arg9[%c0_52, %c0_53] : memref<1x96xf32, #tpu.memory_space<vmem>>, vector<1x96xf32>
    %124 = vector.broadcast %123 : vector<1x96xf32> to vector<3x96xf32>
    %125 = arith.addf %122, %124 : vector<3x96xf32>
    %126 = vector.extract_strided_slice %119 {offsets = [0, 0], sizes = [3, 32], strides = [1, 1]} : vector<3x96xf32> to vector<3x32xf32>
    %127 = vector.extract_strided_slice %125 {offsets = [0, 0], sizes = [3, 32], strides = [1, 1]} : vector<3x96xf32> to vector<3x32xf32>
    %128 = arith.addf %126, %127 : vector<3x32xf32>
    %129 = arith.negf %128 : vector<3x32xf32>
    %130 = math.exp %129 : vector<3x32xf32>
    %cst_54 = arith.constant 1.000000e+00 : f32
    %131 = vector.broadcast %cst_54 : f32 to vector<3x32xf32>
    %132 = arith.addf %131, %130 : vector<3x32xf32>
    %133 = arith.divf %131, %132 : vector<3x32xf32>
    %134 = vector.extract_strided_slice %119 {offsets = [0, 32], sizes = [3, 32], strides = [1, 1]} : vector<3x96xf32> to vector<3x32xf32>
    %135 = vector.extract_strided_slice %125 {offsets = [0, 32], sizes = [3, 32], strides = [1, 1]} : vector<3x96xf32> to vector<3x32xf32>
    %136 = arith.addf %134, %135 : vector<3x32xf32>
    %137 = arith.negf %136 : vector<3x32xf32>
    %138 = math.exp %137 : vector<3x32xf32>
    %cst_55 = arith.constant 1.000000e+00 : f32
    %139 = vector.broadcast %cst_55 : f32 to vector<3x32xf32>
    %140 = arith.addf %139, %138 : vector<3x32xf32>
    %141 = arith.divf %139, %140 : vector<3x32xf32>
    %142 = vector.extract_strided_slice %119 {offsets = [0, 64], sizes = [3, 32], strides = [1, 1]} : vector<3x96xf32> to vector<3x32xf32>
    %143 = vector.extract_strided_slice %125 {offsets = [0, 64], sizes = [3, 32], strides = [1, 1]} : vector<3x96xf32> to vector<3x32xf32>
    %144 = arith.mulf %133, %143 : vector<3x32xf32>
    %145 = arith.addf %142, %144 : vector<3x32xf32>
    %146 = math.tanh %145 : vector<3x32xf32>
    %cst_56 = arith.constant 1.000000e+00 : f32
    %147 = vector.broadcast %cst_56 : f32 to vector<3x32xf32>
    %148 = arith.subf %147, %141 : vector<3x32xf32>
    %149 = arith.mulf %148, %146 : vector<3x32xf32>
    %150 = arith.mulf %141, %75 : vector<3x32xf32>
    %151 = arith.addf %149, %150 : vector<3x32xf32>
    %152 = arith.truncf %5 : vector<3x32xf32> to vector<3x32xbf16>
    %c0_57 = arith.constant 0 : index
    %c0_58 = arith.constant 0 : index
    %153 = vector.load %arg2[%c0_57, %c0_58] : memref<32x96xbf16, #tpu.memory_space<vmem>>, vector<32x96xbf16>
    %cst_59 = arith.constant dense<0.000000e+00> : vector<3x96xf32>
    %154 = tpu.matmul %152, %153, %cst_59 {dimension_numbers = #tpu.dot_dimension_numbers<[1], [0], [0], [1], [0, 0, 1, 1], [], []>} : vector<3x32xbf16>, vector<32x96xbf16>, vector<3x96xf32> -> vector<3x96xf32>
    %c0_60 = arith.constant 0 : index
    %c0_61 = arith.constant 0 : index
    %155 = vector.load %arg4[%c0_60, %c0_61] : memref<1x96xf32, #tpu.memory_space<vmem>>, vector<1x96xf32>
    %156 = vector.broadcast %155 : vector<1x96xf32> to vector<3x96xf32>
    %157 = arith.addf %154, %156 : vector<3x96xf32>
    %158 = arith.truncf %113 : vector<3x32xf32> to vector<3x32xbf16>
    %c0_62 = arith.constant 0 : index
    %c0_63 = arith.constant 0 : index
    %159 = vector.load %arg3[%c0_62, %c0_63] : memref<32x96xbf16, #tpu.memory_space<vmem>>, vector<32x96xbf16>
    %cst_64 = arith.constant dense<0.000000e+00> : vector<3x96xf32>
    %160 = tpu.matmul %158, %159, %cst_64 {dimension_numbers = #tpu.dot_dimension_numbers<[1], [0], [0], [1], [0, 0, 1, 1], [], []>} : vector<3x32xbf16>, vector<32x96xbf16>, vector<3x96xf32> -> vector<3x96xf32>
    %c0_65 = arith.constant 0 : index
    %c0_66 = arith.constant 0 : index
    %161 = vector.load %arg5[%c0_65, %c0_66] : memref<1x96xf32, #tpu.memory_space<vmem>>, vector<1x96xf32>
    %162 = vector.broadcast %161 : vector<1x96xf32> to vector<3x96xf32>
    %163 = arith.addf %160, %162 : vector<3x96xf32>
    %164 = vector.extract_strided_slice %157 {offsets = [0, 0], sizes = [3, 32], strides = [1, 1]} : vector<3x96xf32> to vector<3x32xf32>
    %165 = vector.extract_strided_slice %163 {offsets = [0, 0], sizes = [3, 32], strides = [1, 1]} : vector<3x96xf32> to vector<3x32xf32>
    %166 = arith.addf %164, %165 : vector<3x32xf32>
    %167 = arith.negf %166 : vector<3x32xf32>
    %168 = math.exp %167 : vector<3x32xf32>
    %cst_67 = arith.constant 1.000000e+00 : f32
    %169 = vector.broadcast %cst_67 : f32 to vector<3x32xf32>
    %170 = arith.addf %169, %168 : vector<3x32xf32>
    %171 = arith.divf %169, %170 : vector<3x32xf32>
    %172 = vector.extract_strided_slice %157 {offsets = [0, 32], sizes = [3, 32], strides = [1, 1]} : vector<3x96xf32> to vector<3x32xf32>
    %173 = vector.extract_strided_slice %163 {offsets = [0, 32], sizes = [3, 32], strides = [1, 1]} : vector<3x96xf32> to vector<3x32xf32>
    %174 = arith.addf %172, %173 : vector<3x32xf32>
    %175 = arith.negf %174 : vector<3x32xf32>
    %176 = math.exp %175 : vector<3x32xf32>
    %cst_68 = arith.constant 1.000000e+00 : f32
    %177 = vector.broadcast %cst_68 : f32 to vector<3x32xf32>
    %178 = arith.addf %177, %176 : vector<3x32xf32>
    %179 = arith.divf %177, %178 : vector<3x32xf32>
    %180 = vector.extract_strided_slice %157 {offsets = [0, 64], sizes = [3, 32], strides = [1, 1]} : vector<3x96xf32> to vector<3x32xf32>
    %181 = vector.extract_strided_slice %163 {offsets = [0, 64], sizes = [3, 32], strides = [1, 1]} : vector<3x96xf32> to vector<3x32xf32>
    %182 = arith.mulf %171, %181 : vector<3x32xf32>
    %183 = arith.addf %180, %182 : vector<3x32xf32>
    %184 = math.tanh %183 : vector<3x32xf32>
    %cst_69 = arith.constant 1.000000e+00 : f32
    %185 = vector.broadcast %cst_69 : f32 to vector<3x32xf32>
    %186 = arith.subf %185, %179 : vector<3x32xf32>
    %187 = arith.mulf %186, %184 : vector<3x32xf32>
    %188 = arith.mulf %179, %113 : vector<3x32xf32>
    %189 = arith.addf %187, %188 : vector<3x32xf32>
    %190 = arith.truncf %3 : vector<3x32xf32> to vector<3x32xbf16>
    %c0_70 = arith.constant 0 : index
    %c0_71 = arith.constant 0 : index
    %191 = vector.load %arg6[%c0_70, %c0_71] : memref<32x96xbf16, #tpu.memory_space<vmem>>, vector<32x96xbf16>
    %cst_72 = arith.constant dense<0.000000e+00> : vector<3x96xf32>
    %192 = tpu.matmul %190, %191, %cst_72 {dimension_numbers = #tpu.dot_dimension_numbers<[1], [0], [0], [1], [0, 0, 1, 1], [], []>} : vector<3x32xbf16>, vector<32x96xbf16>, vector<3x96xf32> -> vector<3x96xf32>
    %c0_73 = arith.constant 0 : index
    %c0_74 = arith.constant 0 : index
    %193 = vector.load %arg8[%c0_73, %c0_74] : memref<1x96xf32, #tpu.memory_space<vmem>>, vector<1x96xf32>
    %194 = vector.broadcast %193 : vector<1x96xf32> to vector<3x96xf32>
    %195 = arith.addf %192, %194 : vector<3x96xf32>
    %196 = arith.truncf %151 : vector<3x32xf32> to vector<3x32xbf16>
    %c0_75 = arith.constant 0 : index
    %c0_76 = arith.constant 0 : index
    %197 = vector.load %arg7[%c0_75, %c0_76] : memref<32x96xbf16, #tpu.memory_space<vmem>>, vector<32x96xbf16>
    %cst_77 = arith.constant dense<0.000000e+00> : vector<3x96xf32>
    %198 = tpu.matmul %196, %197, %cst_77 {dimension_numbers = #tpu.dot_dimension_numbers<[1], [0], [0], [1], [0, 0, 1, 1], [], []>} : vector<3x32xbf16>, vector<32x96xbf16>, vector<3x96xf32> -> vector<3x96xf32>
    %c0_78 = arith.constant 0 : index
    %c0_79 = arith.constant 0 : index
    %199 = vector.load %arg9[%c0_78, %c0_79] : memref<1x96xf32, #tpu.memory_space<vmem>>, vector<1x96xf32>
    %200 = vector.broadcast %199 : vector<1x96xf32> to vector<3x96xf32>
    %201 = arith.addf %198, %200 : vector<3x96xf32>
    %202 = vector.extract_strided_slice %195 {offsets = [0, 0], sizes = [3, 32], strides = [1, 1]} : vector<3x96xf32> to vector<3x32xf32>
    %203 = vector.extract_strided_slice %201 {offsets = [0, 0], sizes = [3, 32], strides = [1, 1]} : vector<3x96xf32> to vector<3x32xf32>
    %204 = arith.addf %202, %203 : vector<3x32xf32>
    %205 = arith.negf %204 : vector<3x32xf32>
    %206 = math.exp %205 : vector<3x32xf32>
    %cst_80 = arith.constant 1.000000e+00 : f32
    %207 = vector.broadcast %cst_80 : f32 to vector<3x32xf32>
    %208 = arith.addf %207, %206 : vector<3x32xf32>
    %209 = arith.divf %207, %208 : vector<3x32xf32>
    %210 = vector.extract_strided_slice %195 {offsets = [0, 32], sizes = [3, 32], strides = [1, 1]} : vector<3x96xf32> to vector<3x32xf32>
    %211 = vector.extract_strided_slice %201 {offsets = [0, 32], sizes = [3, 32], strides = [1, 1]} : vector<3x96xf32> to vector<3x32xf32>
    %212 = arith.addf %210, %211 : vector<3x32xf32>
    %213 = arith.negf %212 : vector<3x32xf32>
    %214 = math.exp %213 : vector<3x32xf32>
    %cst_81 = arith.constant 1.000000e+00 : f32
    %215 = vector.broadcast %cst_81 : f32 to vector<3x32xf32>
    %216 = arith.addf %215, %214 : vector<3x32xf32>
    %217 = arith.divf %215, %216 : vector<3x32xf32>
    %218 = vector.extract_strided_slice %195 {offsets = [0, 64], sizes = [3, 32], strides = [1, 1]} : vector<3x96xf32> to vector<3x32xf32>
    %219 = vector.extract_strided_slice %201 {offsets = [0, 64], sizes = [3, 32], strides = [1, 1]} : vector<3x96xf32> to vector<3x32xf32>
    %220 = arith.mulf %209, %219 : vector<3x32xf32>
    %221 = arith.addf %218, %220 : vector<3x32xf32>
    %222 = math.tanh %221 : vector<3x32xf32>
    %cst_82 = arith.constant 1.000000e+00 : f32
    %223 = vector.broadcast %cst_82 : f32 to vector<3x32xf32>
    %224 = arith.subf %223, %217 : vector<3x32xf32>
    %225 = arith.mulf %224, %222 : vector<3x32xf32>
    %226 = arith.mulf %217, %151 : vector<3x32xf32>
    %227 = arith.addf %225, %226 : vector<3x32xf32>
    %228 = arith.truncf %7 : vector<3x32xf32> to vector<3x32xbf16>
    %c0_83 = arith.constant 0 : index
    %c0_84 = arith.constant 0 : index
    %229 = vector.load %arg2[%c0_83, %c0_84] : memref<32x96xbf16, #tpu.memory_space<vmem>>, vector<32x96xbf16>
    %cst_85 = arith.constant dense<0.000000e+00> : vector<3x96xf32>
    %230 = tpu.matmul %228, %229, %cst_85 {dimension_numbers = #tpu.dot_dimension_numbers<[1], [0], [0], [1], [0, 0, 1, 1], [], []>} : vector<3x32xbf16>, vector<32x96xbf16>, vector<3x96xf32> -> vector<3x96xf32>
    %c0_86 = arith.constant 0 : index
    %c0_87 = arith.constant 0 : index
    %231 = vector.load %arg4[%c0_86, %c0_87] : memref<1x96xf32, #tpu.memory_space<vmem>>, vector<1x96xf32>
    %232 = vector.broadcast %231 : vector<1x96xf32> to vector<3x96xf32>
    %233 = arith.addf %230, %232 : vector<3x96xf32>
    %234 = arith.truncf %189 : vector<3x32xf32> to vector<3x32xbf16>
    %c0_88 = arith.constant 0 : index
    %c0_89 = arith.constant 0 : index
    %235 = vector.load %arg3[%c0_88, %c0_89] : memref<32x96xbf16, #tpu.memory_space<vmem>>, vector<32x96xbf16>
    %cst_90 = arith.constant dense<0.000000e+00> : vector<3x96xf32>
    %236 = tpu.matmul %234, %235, %cst_90 {dimension_numbers = #tpu.dot_dimension_numbers<[1], [0], [0], [1], [0, 0, 1, 1], [], []>} : vector<3x32xbf16>, vector<32x96xbf16>, vector<3x96xf32> -> vector<3x96xf32>
    %c0_91 = arith.constant 0 : index
    %c0_92 = arith.constant 0 : index
    %237 = vector.load %arg5[%c0_91, %c0_92] : memref<1x96xf32, #tpu.memory_space<vmem>>, vector<1x96xf32>
    %238 = vector.broadcast %237 : vector<1x96xf32> to vector<3x96xf32>
    %239 = arith.addf %236, %238 : vector<3x96xf32>
    %240 = vector.extract_strided_slice %233 {offsets = [0, 0], sizes = [3, 32], strides = [1, 1]} : vector<3x96xf32> to vector<3x32xf32>
    %241 = vector.extract_strided_slice %239 {offsets = [0, 0], sizes = [3, 32], strides = [1, 1]} : vector<3x96xf32> to vector<3x32xf32>
    %242 = arith.addf %240, %241 : vector<3x32xf32>
    %243 = arith.negf %242 : vector<3x32xf32>
    %244 = math.exp %243 : vector<3x32xf32>
    %cst_93 = arith.constant 1.000000e+00 : f32
    %245 = vector.broadcast %cst_93 : f32 to vector<3x32xf32>
    %246 = arith.addf %245, %244 : vector<3x32xf32>
    %247 = arith.divf %245, %246 : vector<3x32xf32>
    %248 = vector.extract_strided_slice %233 {offsets = [0, 32], sizes = [3, 32], strides = [1, 1]} : vector<3x96xf32> to vector<3x32xf32>
    %249 = vector.extract_strided_slice %239 {offsets = [0, 32], sizes = [3, 32], strides = [1, 1]} : vector<3x96xf32> to vector<3x32xf32>
    %250 = arith.addf %248, %249 : vector<3x32xf32>
    %251 = arith.negf %250 : vector<3x32xf32>
    %252 = math.exp %251 : vector<3x32xf32>
    %cst_94 = arith.constant 1.000000e+00 : f32
    %253 = vector.broadcast %cst_94 : f32 to vector<3x32xf32>
    %254 = arith.addf %253, %252 : vector<3x32xf32>
    %255 = arith.divf %253, %254 : vector<3x32xf32>
    %256 = vector.extract_strided_slice %233 {offsets = [0, 64], sizes = [3, 32], strides = [1, 1]} : vector<3x96xf32> to vector<3x32xf32>
    %257 = vector.extract_strided_slice %239 {offsets = [0, 64], sizes = [3, 32], strides = [1, 1]} : vector<3x96xf32> to vector<3x32xf32>
    %258 = arith.mulf %247, %257 : vector<3x32xf32>
    %259 = arith.addf %256, %258 : vector<3x32xf32>
    %260 = math.tanh %259 : vector<3x32xf32>
    %cst_95 = arith.constant 1.000000e+00 : f32
    %261 = vector.broadcast %cst_95 : f32 to vector<3x32xf32>
    %262 = arith.subf %261, %255 : vector<3x32xf32>
    %263 = arith.mulf %262, %260 : vector<3x32xf32>
    %264 = arith.mulf %255, %189 : vector<3x32xf32>
    %265 = arith.addf %263, %264 : vector<3x32xf32>
    %266 = arith.truncf %1 : vector<3x32xf32> to vector<3x32xbf16>
    %c0_96 = arith.constant 0 : index
    %c0_97 = arith.constant 0 : index
    %267 = vector.load %arg6[%c0_96, %c0_97] : memref<32x96xbf16, #tpu.memory_space<vmem>>, vector<32x96xbf16>
    %cst_98 = arith.constant dense<0.000000e+00> : vector<3x96xf32>
    %268 = tpu.matmul %266, %267, %cst_98 {dimension_numbers = #tpu.dot_dimension_numbers<[1], [0], [0], [1], [0, 0, 1, 1], [], []>} : vector<3x32xbf16>, vector<32x96xbf16>, vector<3x96xf32> -> vector<3x96xf32>
    %c0_99 = arith.constant 0 : index
    %c0_100 = arith.constant 0 : index
    %269 = vector.load %arg8[%c0_99, %c0_100] : memref<1x96xf32, #tpu.memory_space<vmem>>, vector<1x96xf32>
    %270 = vector.broadcast %269 : vector<1x96xf32> to vector<3x96xf32>
    %271 = arith.addf %268, %270 : vector<3x96xf32>
    %272 = arith.truncf %227 : vector<3x32xf32> to vector<3x32xbf16>
    %c0_101 = arith.constant 0 : index
    %c0_102 = arith.constant 0 : index
    %273 = vector.load %arg7[%c0_101, %c0_102] : memref<32x96xbf16, #tpu.memory_space<vmem>>, vector<32x96xbf16>
    %cst_103 = arith.constant dense<0.000000e+00> : vector<3x96xf32>
    %274 = tpu.matmul %272, %273, %cst_103 {dimension_numbers = #tpu.dot_dimension_numbers<[1], [0], [0], [1], [0, 0, 1, 1], [], []>} : vector<3x32xbf16>, vector<32x96xbf16>, vector<3x96xf32> -> vector<3x96xf32>
    %c0_104 = arith.constant 0 : index
    %c0_105 = arith.constant 0 : index
    %275 = vector.load %arg9[%c0_104, %c0_105] : memref<1x96xf32, #tpu.memory_space<vmem>>, vector<1x96xf32>
    %276 = vector.broadcast %275 : vector<1x96xf32> to vector<3x96xf32>
    %277 = arith.addf %274, %276 : vector<3x96xf32>
    %278 = vector.extract_strided_slice %271 {offsets = [0, 0], sizes = [3, 32], strides = [1, 1]} : vector<3x96xf32> to vector<3x32xf32>
    %279 = vector.extract_strided_slice %277 {offsets = [0, 0], sizes = [3, 32], strides = [1, 1]} : vector<3x96xf32> to vector<3x32xf32>
    %280 = arith.addf %278, %279 : vector<3x32xf32>
    %281 = arith.negf %280 : vector<3x32xf32>
    %282 = math.exp %281 : vector<3x32xf32>
    %cst_106 = arith.constant 1.000000e+00 : f32
    %283 = vector.broadcast %cst_106 : f32 to vector<3x32xf32>
    %284 = arith.addf %283, %282 : vector<3x32xf32>
    %285 = arith.divf %283, %284 : vector<3x32xf32>
    %286 = vector.extract_strided_slice %271 {offsets = [0, 32], sizes = [3, 32], strides = [1, 1]} : vector<3x96xf32> to vector<3x32xf32>
    %287 = vector.extract_strided_slice %277 {offsets = [0, 32], sizes = [3, 32], strides = [1, 1]} : vector<3x96xf32> to vector<3x32xf32>
    %288 = arith.addf %286, %287 : vector<3x32xf32>
    %289 = arith.negf %288 : vector<3x32xf32>
    %290 = math.exp %289 : vector<3x32xf32>
    %cst_107 = arith.constant 1.000000e+00 : f32
    %291 = vector.broadcast %cst_107 : f32 to vector<3x32xf32>
    %292 = arith.addf %291, %290 : vector<3x32xf32>
    %293 = arith.divf %291, %292 : vector<3x32xf32>
    %294 = vector.extract_strided_slice %271 {offsets = [0, 64], sizes = [3, 32], strides = [1, 1]} : vector<3x96xf32> to vector<3x32xf32>
    %295 = vector.extract_strided_slice %277 {offsets = [0, 64], sizes = [3, 32], strides = [1, 1]} : vector<3x96xf32> to vector<3x32xf32>
    %296 = arith.mulf %285, %295 : vector<3x32xf32>
    %297 = arith.addf %294, %296 : vector<3x32xf32>
    %298 = math.tanh %297 : vector<3x32xf32>
    %cst_108 = arith.constant 1.000000e+00 : f32
    %299 = vector.broadcast %cst_108 : f32 to vector<3x32xf32>
    %300 = arith.subf %299, %293 : vector<3x32xf32>
    %301 = arith.mulf %300, %298 : vector<3x32xf32>
    %302 = arith.mulf %293, %227 : vector<3x32xf32>
    %303 = arith.addf %301, %302 : vector<3x32xf32>
    %304 = tpu.concatenate %41, %303 in 1 : vector<3x32xf32>, vector<3x32xf32> -> vector<3x64xf32>
    %305 = arith.truncf %304 : vector<3x64xf32> to vector<3x64xbf16>
    %c0_109 = arith.constant 0 : index
    %c0_110 = arith.constant 0 : index
    %306 = vector.load %arg10[%c0_109, %c0_110] : memref<64x96xbf16, #tpu.memory_space<vmem>>, vector<64x96xbf16>
    %cst_111 = arith.constant dense<0.000000e+00> : vector<3x96xf32>
    %307 = tpu.matmul %305, %306, %cst_111 {dimension_numbers = #tpu.dot_dimension_numbers<[1], [0], [0], [1], [0, 0, 1, 1], [], []>} : vector<3x64xbf16>, vector<64x96xbf16>, vector<3x96xf32> -> vector<3x96xf32>
    %c0_112 = arith.constant 0 : index
    %c0_113 = arith.constant 0 : index
    %308 = vector.load %arg12[%c0_112, %c0_113] : memref<1x96xf32, #tpu.memory_space<vmem>>, vector<1x96xf32>
    %309 = vector.broadcast %308 : vector<1x96xf32> to vector<3x96xf32>
    %310 = arith.addf %307, %309 : vector<3x96xf32>
    %c0_114 = arith.constant 0 : index
    %c0_115 = arith.constant 0 : index
    %311 = vector.load %arg13[%c0_114, %c0_115] : memref<1x96xf32, #tpu.memory_space<vmem>>, vector<1x96xf32>
    %312 = vector.extract_strided_slice %310 {offsets = [0, 0], sizes = [3, 32], strides = [1, 1]} : vector<3x96xf32> to vector<3x32xf32>
    %313 = vector.extract_strided_slice %311 {offsets = [0, 0], sizes = [1, 32], strides = [1, 1]} : vector<1x96xf32> to vector<1x32xf32>
    %314 = vector.broadcast %313 : vector<1x32xf32> to vector<3x32xf32>
    %315 = arith.addf %312, %314 : vector<3x32xf32>
    %316 = arith.negf %315 : vector<3x32xf32>
    %317 = math.exp %316 : vector<3x32xf32>
    %cst_116 = arith.constant 1.000000e+00 : f32
    %318 = vector.broadcast %cst_116 : f32 to vector<3x32xf32>
    %319 = arith.addf %318, %317 : vector<3x32xf32>
    %320 = arith.divf %318, %319 : vector<3x32xf32>
    %321 = vector.extract_strided_slice %310 {offsets = [0, 32], sizes = [3, 32], strides = [1, 1]} : vector<3x96xf32> to vector<3x32xf32>
    %322 = vector.extract_strided_slice %311 {offsets = [0, 32], sizes = [1, 32], strides = [1, 1]} : vector<1x96xf32> to vector<1x32xf32>
    %323 = vector.broadcast %322 : vector<1x32xf32> to vector<3x32xf32>
    %324 = arith.addf %321, %323 : vector<3x32xf32>
    %325 = arith.negf %324 : vector<3x32xf32>
    %326 = math.exp %325 : vector<3x32xf32>
    %cst_117 = arith.constant 1.000000e+00 : f32
    %327 = vector.broadcast %cst_117 : f32 to vector<3x32xf32>
    %328 = arith.addf %327, %326 : vector<3x32xf32>
    %329 = arith.divf %327, %328 : vector<3x32xf32>
    %330 = vector.extract_strided_slice %310 {offsets = [0, 64], sizes = [3, 32], strides = [1, 1]} : vector<3x96xf32> to vector<3x32xf32>
    %331 = vector.extract_strided_slice %311 {offsets = [0, 64], sizes = [1, 32], strides = [1, 1]} : vector<1x96xf32> to vector<1x32xf32>
    %332 = vector.broadcast %331 : vector<1x32xf32> to vector<3x32xf32>
    %333 = arith.mulf %320, %332 : vector<3x32xf32>
    %334 = arith.addf %330, %333 : vector<3x32xf32>
    %335 = math.tanh %334 : vector<3x32xf32>
    %cst_118 = arith.constant 1.000000e+00 : f32
    %336 = vector.broadcast %cst_118 : f32 to vector<3x32xf32>
    %337 = arith.subf %336, %329 : vector<3x32xf32>
    %338 = arith.mulf %337, %335 : vector<3x32xf32>
    %339 = tpu.concatenate %265, %75 in 1 : vector<3x32xf32>, vector<3x32xf32> -> vector<3x64xf32>
    %340 = arith.truncf %339 : vector<3x64xf32> to vector<3x64xbf16>
    %c0_119 = arith.constant 0 : index
    %c0_120 = arith.constant 0 : index
    %341 = vector.load %arg14[%c0_119, %c0_120] : memref<64x96xbf16, #tpu.memory_space<vmem>>, vector<64x96xbf16>
    %cst_121 = arith.constant dense<0.000000e+00> : vector<3x96xf32>
    %342 = tpu.matmul %340, %341, %cst_121 {dimension_numbers = #tpu.dot_dimension_numbers<[1], [0], [0], [1], [0, 0, 1, 1], [], []>} : vector<3x64xbf16>, vector<64x96xbf16>, vector<3x96xf32> -> vector<3x96xf32>
    %c0_122 = arith.constant 0 : index
    %c0_123 = arith.constant 0 : index
    %343 = vector.load %arg16[%c0_122, %c0_123] : memref<1x96xf32, #tpu.memory_space<vmem>>, vector<1x96xf32>
    %344 = vector.broadcast %343 : vector<1x96xf32> to vector<3x96xf32>
    %345 = arith.addf %342, %344 : vector<3x96xf32>
    %c0_124 = arith.constant 0 : index
    %c0_125 = arith.constant 0 : index
    %346 = vector.load %arg17[%c0_124, %c0_125] : memref<1x96xf32, #tpu.memory_space<vmem>>, vector<1x96xf32>
    %347 = vector.extract_strided_slice %345 {offsets = [0, 0], sizes = [3, 32], strides = [1, 1]} : vector<3x96xf32> to vector<3x32xf32>
    %348 = vector.extract_strided_slice %346 {offsets = [0, 0], sizes = [1, 32], strides = [1, 1]} : vector<1x96xf32> to vector<1x32xf32>
    %349 = vector.broadcast %348 : vector<1x32xf32> to vector<3x32xf32>
    %350 = arith.addf %347, %349 : vector<3x32xf32>
    %351 = arith.negf %350 : vector<3x32xf32>
    %352 = math.exp %351 : vector<3x32xf32>
    %cst_126 = arith.constant 1.000000e+00 : f32
    %353 = vector.broadcast %cst_126 : f32 to vector<3x32xf32>
    %354 = arith.addf %353, %352 : vector<3x32xf32>
    %355 = arith.divf %353, %354 : vector<3x32xf32>
    %356 = vector.extract_strided_slice %345 {offsets = [0, 32], sizes = [3, 32], strides = [1, 1]} : vector<3x96xf32> to vector<3x32xf32>
    %357 = vector.extract_strided_slice %346 {offsets = [0, 32], sizes = [1, 32], strides = [1, 1]} : vector<1x96xf32> to vector<1x32xf32>
    %358 = vector.broadcast %357 : vector<1x32xf32> to vector<3x32xf32>
    %359 = arith.addf %356, %358 : vector<3x32xf32>
    %360 = arith.negf %359 : vector<3x32xf32>
    %361 = math.exp %360 : vector<3x32xf32>
    %cst_127 = arith.constant 1.000000e+00 : f32
    %362 = vector.broadcast %cst_127 : f32 to vector<3x32xf32>
    %363 = arith.addf %362, %361 : vector<3x32xf32>
    %364 = arith.divf %362, %363 : vector<3x32xf32>
    %365 = vector.extract_strided_slice %345 {offsets = [0, 64], sizes = [3, 32], strides = [1, 1]} : vector<3x96xf32> to vector<3x32xf32>
    %366 = vector.extract_strided_slice %346 {offsets = [0, 64], sizes = [1, 32], strides = [1, 1]} : vector<1x96xf32> to vector<1x32xf32>
    %367 = vector.broadcast %366 : vector<1x32xf32> to vector<3x32xf32>
    %368 = arith.mulf %355, %367 : vector<3x32xf32>
    %369 = arith.addf %365, %368 : vector<3x32xf32>
    %370 = math.tanh %369 : vector<3x32xf32>
    %cst_128 = arith.constant 1.000000e+00 : f32
    %371 = vector.broadcast %cst_128 : f32 to vector<3x32xf32>
    %372 = arith.subf %371, %364 : vector<3x32xf32>
    %373 = arith.mulf %372, %370 : vector<3x32xf32>
    %374 = tpu.concatenate %113, %227 in 1 : vector<3x32xf32>, vector<3x32xf32> -> vector<3x64xf32>
    %375 = arith.truncf %374 : vector<3x64xf32> to vector<3x64xbf16>
    %c0_129 = arith.constant 0 : index
    %c0_130 = arith.constant 0 : index
    %376 = vector.load %arg10[%c0_129, %c0_130] : memref<64x96xbf16, #tpu.memory_space<vmem>>, vector<64x96xbf16>
    %cst_131 = arith.constant dense<0.000000e+00> : vector<3x96xf32>
    %377 = tpu.matmul %375, %376, %cst_131 {dimension_numbers = #tpu.dot_dimension_numbers<[1], [0], [0], [1], [0, 0, 1, 1], [], []>} : vector<3x64xbf16>, vector<64x96xbf16>, vector<3x96xf32> -> vector<3x96xf32>
    %c0_132 = arith.constant 0 : index
    %c0_133 = arith.constant 0 : index
    %378 = vector.load %arg12[%c0_132, %c0_133] : memref<1x96xf32, #tpu.memory_space<vmem>>, vector<1x96xf32>
    %379 = vector.broadcast %378 : vector<1x96xf32> to vector<3x96xf32>
    %380 = arith.addf %377, %379 : vector<3x96xf32>
    %381 = arith.truncf %338 : vector<3x32xf32> to vector<3x32xbf16>
    %c0_134 = arith.constant 0 : index
    %c0_135 = arith.constant 0 : index
    %382 = vector.load %arg11[%c0_134, %c0_135] : memref<32x96xbf16, #tpu.memory_space<vmem>>, vector<32x96xbf16>
    %cst_136 = arith.constant dense<0.000000e+00> : vector<3x96xf32>
    %383 = tpu.matmul %381, %382, %cst_136 {dimension_numbers = #tpu.dot_dimension_numbers<[1], [0], [0], [1], [0, 0, 1, 1], [], []>} : vector<3x32xbf16>, vector<32x96xbf16>, vector<3x96xf32> -> vector<3x96xf32>
    %c0_137 = arith.constant 0 : index
    %c0_138 = arith.constant 0 : index
    %384 = vector.load %arg13[%c0_137, %c0_138] : memref<1x96xf32, #tpu.memory_space<vmem>>, vector<1x96xf32>
    %385 = vector.broadcast %384 : vector<1x96xf32> to vector<3x96xf32>
    %386 = arith.addf %383, %385 : vector<3x96xf32>
    %387 = vector.extract_strided_slice %380 {offsets = [0, 0], sizes = [3, 32], strides = [1, 1]} : vector<3x96xf32> to vector<3x32xf32>
    %388 = vector.extract_strided_slice %386 {offsets = [0, 0], sizes = [3, 32], strides = [1, 1]} : vector<3x96xf32> to vector<3x32xf32>
    %389 = arith.addf %387, %388 : vector<3x32xf32>
    %390 = arith.negf %389 : vector<3x32xf32>
    %391 = math.exp %390 : vector<3x32xf32>
    %cst_139 = arith.constant 1.000000e+00 : f32
    %392 = vector.broadcast %cst_139 : f32 to vector<3x32xf32>
    %393 = arith.addf %392, %391 : vector<3x32xf32>
    %394 = arith.divf %392, %393 : vector<3x32xf32>
    %395 = vector.extract_strided_slice %380 {offsets = [0, 32], sizes = [3, 32], strides = [1, 1]} : vector<3x96xf32> to vector<3x32xf32>
    %396 = vector.extract_strided_slice %386 {offsets = [0, 32], sizes = [3, 32], strides = [1, 1]} : vector<3x96xf32> to vector<3x32xf32>
    %397 = arith.addf %395, %396 : vector<3x32xf32>
    %398 = arith.negf %397 : vector<3x32xf32>
    %399 = math.exp %398 : vector<3x32xf32>
    %cst_140 = arith.constant 1.000000e+00 : f32
    %400 = vector.broadcast %cst_140 : f32 to vector<3x32xf32>
    %401 = arith.addf %400, %399 : vector<3x32xf32>
    %402 = arith.divf %400, %401 : vector<3x32xf32>
    %403 = vector.extract_strided_slice %380 {offsets = [0, 64], sizes = [3, 32], strides = [1, 1]} : vector<3x96xf32> to vector<3x32xf32>
    %404 = vector.extract_strided_slice %386 {offsets = [0, 64], sizes = [3, 32], strides = [1, 1]} : vector<3x96xf32> to vector<3x32xf32>
    %405 = arith.mulf %394, %404 : vector<3x32xf32>
    %406 = arith.addf %403, %405 : vector<3x32xf32>
    %407 = math.tanh %406 : vector<3x32xf32>
    %cst_141 = arith.constant 1.000000e+00 : f32
    %408 = vector.broadcast %cst_141 : f32 to vector<3x32xf32>
    %409 = arith.subf %408, %402 : vector<3x32xf32>
    %410 = arith.mulf %409, %407 : vector<3x32xf32>
    %411 = arith.mulf %402, %338 : vector<3x32xf32>
    %412 = arith.addf %410, %411 : vector<3x32xf32>
    %413 = tpu.concatenate %189, %151 in 1 : vector<3x32xf32>, vector<3x32xf32> -> vector<3x64xf32>
    %414 = arith.truncf %413 : vector<3x64xf32> to vector<3x64xbf16>
    %c0_142 = arith.constant 0 : index
    %c0_143 = arith.constant 0 : index
    %415 = vector.load %arg14[%c0_142, %c0_143] : memref<64x96xbf16, #tpu.memory_space<vmem>>, vector<64x96xbf16>
    %cst_144 = arith.constant dense<0.000000e+00> : vector<3x96xf32>
    %416 = tpu.matmul %414, %415, %cst_144 {dimension_numbers = #tpu.dot_dimension_numbers<[1], [0], [0], [1], [0, 0, 1, 1], [], []>} : vector<3x64xbf16>, vector<64x96xbf16>, vector<3x96xf32> -> vector<3x96xf32>
    %c0_145 = arith.constant 0 : index
    %c0_146 = arith.constant 0 : index
    %417 = vector.load %arg16[%c0_145, %c0_146] : memref<1x96xf32, #tpu.memory_space<vmem>>, vector<1x96xf32>
    %418 = vector.broadcast %417 : vector<1x96xf32> to vector<3x96xf32>
    %419 = arith.addf %416, %418 : vector<3x96xf32>
    %420 = arith.truncf %373 : vector<3x32xf32> to vector<3x32xbf16>
    %c0_147 = arith.constant 0 : index
    %c0_148 = arith.constant 0 : index
    %421 = vector.load %arg15[%c0_147, %c0_148] : memref<32x96xbf16, #tpu.memory_space<vmem>>, vector<32x96xbf16>
    %cst_149 = arith.constant dense<0.000000e+00> : vector<3x96xf32>
    %422 = tpu.matmul %420, %421, %cst_149 {dimension_numbers = #tpu.dot_dimension_numbers<[1], [0], [0], [1], [0, 0, 1, 1], [], []>} : vector<3x32xbf16>, vector<32x96xbf16>, vector<3x96xf32> -> vector<3x96xf32>
    %c0_150 = arith.constant 0 : index
    %c0_151 = arith.constant 0 : index
    %423 = vector.load %arg17[%c0_150, %c0_151] : memref<1x96xf32, #tpu.memory_space<vmem>>, vector<1x96xf32>
    %424 = vector.broadcast %423 : vector<1x96xf32> to vector<3x96xf32>
    %425 = arith.addf %422, %424 : vector<3x96xf32>
    %426 = vector.extract_strided_slice %419 {offsets = [0, 0], sizes = [3, 32], strides = [1, 1]} : vector<3x96xf32> to vector<3x32xf32>
    %427 = vector.extract_strided_slice %425 {offsets = [0, 0], sizes = [3, 32], strides = [1, 1]} : vector<3x96xf32> to vector<3x32xf32>
    %428 = arith.addf %426, %427 : vector<3x32xf32>
    %429 = arith.negf %428 : vector<3x32xf32>
    %430 = math.exp %429 : vector<3x32xf32>
    %cst_152 = arith.constant 1.000000e+00 : f32
    %431 = vector.broadcast %cst_152 : f32 to vector<3x32xf32>
    %432 = arith.addf %431, %430 : vector<3x32xf32>
    %433 = arith.divf %431, %432 : vector<3x32xf32>
    %434 = vector.extract_strided_slice %419 {offsets = [0, 32], sizes = [3, 32], strides = [1, 1]} : vector<3x96xf32> to vector<3x32xf32>
    %435 = vector.extract_strided_slice %425 {offsets = [0, 32], sizes = [3, 32], strides = [1, 1]} : vector<3x96xf32> to vector<3x32xf32>
    %436 = arith.addf %434, %435 : vector<3x32xf32>
    %437 = arith.negf %436 : vector<3x32xf32>
    %438 = math.exp %437 : vector<3x32xf32>
    %cst_153 = arith.constant 1.000000e+00 : f32
    %439 = vector.broadcast %cst_153 : f32 to vector<3x32xf32>
    %440 = arith.addf %439, %438 : vector<3x32xf32>
    %441 = arith.divf %439, %440 : vector<3x32xf32>
    %442 = vector.extract_strided_slice %419 {offsets = [0, 64], sizes = [3, 32], strides = [1, 1]} : vector<3x96xf32> to vector<3x32xf32>
    %443 = vector.extract_strided_slice %425 {offsets = [0, 64], sizes = [3, 32], strides = [1, 1]} : vector<3x96xf32> to vector<3x32xf32>
    %444 = arith.mulf %433, %443 : vector<3x32xf32>
    %445 = arith.addf %442, %444 : vector<3x32xf32>
    %446 = math.tanh %445 : vector<3x32xf32>
    %cst_154 = arith.constant 1.000000e+00 : f32
    %447 = vector.broadcast %cst_154 : f32 to vector<3x32xf32>
    %448 = arith.subf %447, %441 : vector<3x32xf32>
    %449 = arith.mulf %448, %446 : vector<3x32xf32>
    %450 = arith.mulf %441, %373 : vector<3x32xf32>
    %451 = arith.addf %449, %450 : vector<3x32xf32>
    %452 = tpu.concatenate %189, %151 in 1 : vector<3x32xf32>, vector<3x32xf32> -> vector<3x64xf32>
    %453 = arith.truncf %452 : vector<3x64xf32> to vector<3x64xbf16>
    %c0_155 = arith.constant 0 : index
    %c0_156 = arith.constant 0 : index
    %454 = vector.load %arg10[%c0_155, %c0_156] : memref<64x96xbf16, #tpu.memory_space<vmem>>, vector<64x96xbf16>
    %cst_157 = arith.constant dense<0.000000e+00> : vector<3x96xf32>
    %455 = tpu.matmul %453, %454, %cst_157 {dimension_numbers = #tpu.dot_dimension_numbers<[1], [0], [0], [1], [0, 0, 1, 1], [], []>} : vector<3x64xbf16>, vector<64x96xbf16>, vector<3x96xf32> -> vector<3x96xf32>
    %c0_158 = arith.constant 0 : index
    %c0_159 = arith.constant 0 : index
    %456 = vector.load %arg12[%c0_158, %c0_159] : memref<1x96xf32, #tpu.memory_space<vmem>>, vector<1x96xf32>
    %457 = vector.broadcast %456 : vector<1x96xf32> to vector<3x96xf32>
    %458 = arith.addf %455, %457 : vector<3x96xf32>
    %459 = arith.truncf %412 : vector<3x32xf32> to vector<3x32xbf16>
    %c0_160 = arith.constant 0 : index
    %c0_161 = arith.constant 0 : index
    %460 = vector.load %arg11[%c0_160, %c0_161] : memref<32x96xbf16, #tpu.memory_space<vmem>>, vector<32x96xbf16>
    %cst_162 = arith.constant dense<0.000000e+00> : vector<3x96xf32>
    %461 = tpu.matmul %459, %460, %cst_162 {dimension_numbers = #tpu.dot_dimension_numbers<[1], [0], [0], [1], [0, 0, 1, 1], [], []>} : vector<3x32xbf16>, vector<32x96xbf16>, vector<3x96xf32> -> vector<3x96xf32>
    %c0_163 = arith.constant 0 : index
    %c0_164 = arith.constant 0 : index
    %462 = vector.load %arg13[%c0_163, %c0_164] : memref<1x96xf32, #tpu.memory_space<vmem>>, vector<1x96xf32>
    %463 = vector.broadcast %462 : vector<1x96xf32> to vector<3x96xf32>
    %464 = arith.addf %461, %463 : vector<3x96xf32>
    %465 = vector.extract_strided_slice %458 {offsets = [0, 0], sizes = [3, 32], strides = [1, 1]} : vector<3x96xf32> to vector<3x32xf32>
    %466 = vector.extract_strided_slice %464 {offsets = [0, 0], sizes = [3, 32], strides = [1, 1]} : vector<3x96xf32> to vector<3x32xf32>
    %467 = arith.addf %465, %466 : vector<3x32xf32>
    %468 = arith.negf %467 : vector<3x32xf32>
    %469 = math.exp %468 : vector<3x32xf32>
    %cst_165 = arith.constant 1.000000e+00 : f32
    %470 = vector.broadcast %cst_165 : f32 to vector<3x32xf32>
    %471 = arith.addf %470, %469 : vector<3x32xf32>
    %472 = arith.divf %470, %471 : vector<3x32xf32>
    %473 = vector.extract_strided_slice %458 {offsets = [0, 32], sizes = [3, 32], strides = [1, 1]} : vector<3x96xf32> to vector<3x32xf32>
    %474 = vector.extract_strided_slice %464 {offsets = [0, 32], sizes = [3, 32], strides = [1, 1]} : vector<3x96xf32> to vector<3x32xf32>
    %475 = arith.addf %473, %474 : vector<3x32xf32>
    %476 = arith.negf %475 : vector<3x32xf32>
    %477 = math.exp %476 : vector<3x32xf32>
    %cst_166 = arith.constant 1.000000e+00 : f32
    %478 = vector.broadcast %cst_166 : f32 to vector<3x32xf32>
    %479 = arith.addf %478, %477 : vector<3x32xf32>
    %480 = arith.divf %478, %479 : vector<3x32xf32>
    %481 = vector.extract_strided_slice %458 {offsets = [0, 64], sizes = [3, 32], strides = [1, 1]} : vector<3x96xf32> to vector<3x32xf32>
    %482 = vector.extract_strided_slice %464 {offsets = [0, 64], sizes = [3, 32], strides = [1, 1]} : vector<3x96xf32> to vector<3x32xf32>
    %483 = arith.mulf %472, %482 : vector<3x32xf32>
    %484 = arith.addf %481, %483 : vector<3x32xf32>
    %485 = math.tanh %484 : vector<3x32xf32>
    %cst_167 = arith.constant 1.000000e+00 : f32
    %486 = vector.broadcast %cst_167 : f32 to vector<3x32xf32>
    %487 = arith.subf %486, %480 : vector<3x32xf32>
    %488 = arith.mulf %487, %485 : vector<3x32xf32>
    %489 = arith.mulf %480, %412 : vector<3x32xf32>
    %490 = arith.addf %488, %489 : vector<3x32xf32>
    %491 = tpu.concatenate %113, %227 in 1 : vector<3x32xf32>, vector<3x32xf32> -> vector<3x64xf32>
    %492 = arith.truncf %491 : vector<3x64xf32> to vector<3x64xbf16>
    %c0_168 = arith.constant 0 : index
    %c0_169 = arith.constant 0 : index
    %493 = vector.load %arg14[%c0_168, %c0_169] : memref<64x96xbf16, #tpu.memory_space<vmem>>, vector<64x96xbf16>
    %cst_170 = arith.constant dense<0.000000e+00> : vector<3x96xf32>
    %494 = tpu.matmul %492, %493, %cst_170 {dimension_numbers = #tpu.dot_dimension_numbers<[1], [0], [0], [1], [0, 0, 1, 1], [], []>} : vector<3x64xbf16>, vector<64x96xbf16>, vector<3x96xf32> -> vector<3x96xf32>
    %c0_171 = arith.constant 0 : index
    %c0_172 = arith.constant 0 : index
    %495 = vector.load %arg16[%c0_171, %c0_172] : memref<1x96xf32, #tpu.memory_space<vmem>>, vector<1x96xf32>
    %496 = vector.broadcast %495 : vector<1x96xf32> to vector<3x96xf32>
    %497 = arith.addf %494, %496 : vector<3x96xf32>
    %498 = arith.truncf %451 : vector<3x32xf32> to vector<3x32xbf16>
    %c0_173 = arith.constant 0 : index
    %c0_174 = arith.constant 0 : index
    %499 = vector.load %arg15[%c0_173, %c0_174] : memref<32x96xbf16, #tpu.memory_space<vmem>>, vector<32x96xbf16>
    %cst_175 = arith.constant dense<0.000000e+00> : vector<3x96xf32>
    %500 = tpu.matmul %498, %499, %cst_175 {dimension_numbers = #tpu.dot_dimension_numbers<[1], [0], [0], [1], [0, 0, 1, 1], [], []>} : vector<3x32xbf16>, vector<32x96xbf16>, vector<3x96xf32> -> vector<3x96xf32>
    %c0_176 = arith.constant 0 : index
    %c0_177 = arith.constant 0 : index
    %501 = vector.load %arg17[%c0_176, %c0_177] : memref<1x96xf32, #tpu.memory_space<vmem>>, vector<1x96xf32>
    %502 = vector.broadcast %501 : vector<1x96xf32> to vector<3x96xf32>
    %503 = arith.addf %500, %502 : vector<3x96xf32>
    %504 = vector.extract_strided_slice %497 {offsets = [0, 0], sizes = [3, 32], strides = [1, 1]} : vector<3x96xf32> to vector<3x32xf32>
    %505 = vector.extract_strided_slice %503 {offsets = [0, 0], sizes = [3, 32], strides = [1, 1]} : vector<3x96xf32> to vector<3x32xf32>
    %506 = arith.addf %504, %505 : vector<3x32xf32>
    %507 = arith.negf %506 : vector<3x32xf32>
    %508 = math.exp %507 : vector<3x32xf32>
    %cst_178 = arith.constant 1.000000e+00 : f32
    %509 = vector.broadcast %cst_178 : f32 to vector<3x32xf32>
    %510 = arith.addf %509, %508 : vector<3x32xf32>
    %511 = arith.divf %509, %510 : vector<3x32xf32>
    %512 = vector.extract_strided_slice %497 {offsets = [0, 32], sizes = [3, 32], strides = [1, 1]} : vector<3x96xf32> to vector<3x32xf32>
    %513 = vector.extract_strided_slice %503 {offsets = [0, 32], sizes = [3, 32], strides = [1, 1]} : vector<3x96xf32> to vector<3x32xf32>
    %514 = arith.addf %512, %513 : vector<3x32xf32>
    %515 = arith.negf %514 : vector<3x32xf32>
    %516 = math.exp %515 : vector<3x32xf32>
    %cst_179 = arith.constant 1.000000e+00 : f32
    %517 = vector.broadcast %cst_179 : f32 to vector<3x32xf32>
    %518 = arith.addf %517, %516 : vector<3x32xf32>
    %519 = arith.divf %517, %518 : vector<3x32xf32>
    %520 = vector.extract_strided_slice %497 {offsets = [0, 64], sizes = [3, 32], strides = [1, 1]} : vector<3x96xf32> to vector<3x32xf32>
    %521 = vector.extract_strided_slice %503 {offsets = [0, 64], sizes = [3, 32], strides = [1, 1]} : vector<3x96xf32> to vector<3x32xf32>
    %522 = arith.mulf %511, %521 : vector<3x32xf32>
    %523 = arith.addf %520, %522 : vector<3x32xf32>
    %524 = math.tanh %523 : vector<3x32xf32>
    %cst_180 = arith.constant 1.000000e+00 : f32
    %525 = vector.broadcast %cst_180 : f32 to vector<3x32xf32>
    %526 = arith.subf %525, %519 : vector<3x32xf32>
    %527 = arith.mulf %526, %524 : vector<3x32xf32>
    %528 = arith.mulf %519, %451 : vector<3x32xf32>
    %529 = arith.addf %527, %528 : vector<3x32xf32>
    %530 = tpu.concatenate %265, %75 in 1 : vector<3x32xf32>, vector<3x32xf32> -> vector<3x64xf32>
    %531 = arith.truncf %530 : vector<3x64xf32> to vector<3x64xbf16>
    %c0_181 = arith.constant 0 : index
    %c0_182 = arith.constant 0 : index
    %532 = vector.load %arg10[%c0_181, %c0_182] : memref<64x96xbf16, #tpu.memory_space<vmem>>, vector<64x96xbf16>
    %cst_183 = arith.constant dense<0.000000e+00> : vector<3x96xf32>
    %533 = tpu.matmul %531, %532, %cst_183 {dimension_numbers = #tpu.dot_dimension_numbers<[1], [0], [0], [1], [0, 0, 1, 1], [], []>} : vector<3x64xbf16>, vector<64x96xbf16>, vector<3x96xf32> -> vector<3x96xf32>
    %c0_184 = arith.constant 0 : index
    %c0_185 = arith.constant 0 : index
    %534 = vector.load %arg12[%c0_184, %c0_185] : memref<1x96xf32, #tpu.memory_space<vmem>>, vector<1x96xf32>
    %535 = vector.broadcast %534 : vector<1x96xf32> to vector<3x96xf32>
    %536 = arith.addf %533, %535 : vector<3x96xf32>
    %537 = arith.truncf %490 : vector<3x32xf32> to vector<3x32xbf16>
    %c0_186 = arith.constant 0 : index
    %c0_187 = arith.constant 0 : index
    %538 = vector.load %arg11[%c0_186, %c0_187] : memref<32x96xbf16, #tpu.memory_space<vmem>>, vector<32x96xbf16>
    %cst_188 = arith.constant dense<0.000000e+00> : vector<3x96xf32>
    %539 = tpu.matmul %537, %538, %cst_188 {dimension_numbers = #tpu.dot_dimension_numbers<[1], [0], [0], [1], [0, 0, 1, 1], [], []>} : vector<3x32xbf16>, vector<32x96xbf16>, vector<3x96xf32> -> vector<3x96xf32>
    %c0_189 = arith.constant 0 : index
    %c0_190 = arith.constant 0 : index
    %540 = vector.load %arg13[%c0_189, %c0_190] : memref<1x96xf32, #tpu.memory_space<vmem>>, vector<1x96xf32>
    %541 = vector.broadcast %540 : vector<1x96xf32> to vector<3x96xf32>
    %542 = arith.addf %539, %541 : vector<3x96xf32>
    %543 = vector.extract_strided_slice %536 {offsets = [0, 0], sizes = [3, 32], strides = [1, 1]} : vector<3x96xf32> to vector<3x32xf32>
    %544 = vector.extract_strided_slice %542 {offsets = [0, 0], sizes = [3, 32], strides = [1, 1]} : vector<3x96xf32> to vector<3x32xf32>
    %545 = arith.addf %543, %544 : vector<3x32xf32>
    %546 = arith.negf %545 : vector<3x32xf32>
    %547 = math.exp %546 : vector<3x32xf32>
    %cst_191 = arith.constant 1.000000e+00 : f32
    %548 = vector.broadcast %cst_191 : f32 to vector<3x32xf32>
    %549 = arith.addf %548, %547 : vector<3x32xf32>
    %550 = arith.divf %548, %549 : vector<3x32xf32>
    %551 = vector.extract_strided_slice %536 {offsets = [0, 32], sizes = [3, 32], strides = [1, 1]} : vector<3x96xf32> to vector<3x32xf32>
    %552 = vector.extract_strided_slice %542 {offsets = [0, 32], sizes = [3, 32], strides = [1, 1]} : vector<3x96xf32> to vector<3x32xf32>
    %553 = arith.addf %551, %552 : vector<3x32xf32>
    %554 = arith.negf %553 : vector<3x32xf32>
    %555 = math.exp %554 : vector<3x32xf32>
    %cst_192 = arith.constant 1.000000e+00 : f32
    %556 = vector.broadcast %cst_192 : f32 to vector<3x32xf32>
    %557 = arith.addf %556, %555 : vector<3x32xf32>
    %558 = arith.divf %556, %557 : vector<3x32xf32>
    %559 = vector.extract_strided_slice %536 {offsets = [0, 64], sizes = [3, 32], strides = [1, 1]} : vector<3x96xf32> to vector<3x32xf32>
    %560 = vector.extract_strided_slice %542 {offsets = [0, 64], sizes = [3, 32], strides = [1, 1]} : vector<3x96xf32> to vector<3x32xf32>
    %561 = arith.mulf %550, %560 : vector<3x32xf32>
    %562 = arith.addf %559, %561 : vector<3x32xf32>
    %563 = math.tanh %562 : vector<3x32xf32>
    %cst_193 = arith.constant 1.000000e+00 : f32
    %564 = vector.broadcast %cst_193 : f32 to vector<3x32xf32>
    %565 = arith.subf %564, %558 : vector<3x32xf32>
    %566 = arith.mulf %565, %563 : vector<3x32xf32>
    %567 = arith.mulf %558, %490 : vector<3x32xf32>
    %568 = arith.addf %566, %567 : vector<3x32xf32>
    %569 = tpu.concatenate %41, %303 in 1 : vector<3x32xf32>, vector<3x32xf32> -> vector<3x64xf32>
    %570 = arith.truncf %569 : vector<3x64xf32> to vector<3x64xbf16>
    %c0_194 = arith.constant 0 : index
    %c0_195 = arith.constant 0 : index
    %571 = vector.load %arg14[%c0_194, %c0_195] : memref<64x96xbf16, #tpu.memory_space<vmem>>, vector<64x96xbf16>
    %cst_196 = arith.constant dense<0.000000e+00> : vector<3x96xf32>
    %572 = tpu.matmul %570, %571, %cst_196 {dimension_numbers = #tpu.dot_dimension_numbers<[1], [0], [0], [1], [0, 0, 1, 1], [], []>} : vector<3x64xbf16>, vector<64x96xbf16>, vector<3x96xf32> -> vector<3x96xf32>
    %c0_197 = arith.constant 0 : index
    %c0_198 = arith.constant 0 : index
    %573 = vector.load %arg16[%c0_197, %c0_198] : memref<1x96xf32, #tpu.memory_space<vmem>>, vector<1x96xf32>
    %574 = vector.broadcast %573 : vector<1x96xf32> to vector<3x96xf32>
    %575 = arith.addf %572, %574 : vector<3x96xf32>
    %576 = arith.truncf %529 : vector<3x32xf32> to vector<3x32xbf16>
    %c0_199 = arith.constant 0 : index
    %c0_200 = arith.constant 0 : index
    %577 = vector.load %arg15[%c0_199, %c0_200] : memref<32x96xbf16, #tpu.memory_space<vmem>>, vector<32x96xbf16>
    %cst_201 = arith.constant dense<0.000000e+00> : vector<3x96xf32>
    %578 = tpu.matmul %576, %577, %cst_201 {dimension_numbers = #tpu.dot_dimension_numbers<[1], [0], [0], [1], [0, 0, 1, 1], [], []>} : vector<3x32xbf16>, vector<32x96xbf16>, vector<3x96xf32> -> vector<3x96xf32>
    %c0_202 = arith.constant 0 : index
    %c0_203 = arith.constant 0 : index
    %579 = vector.load %arg17[%c0_202, %c0_203] : memref<1x96xf32, #tpu.memory_space<vmem>>, vector<1x96xf32>
    %580 = vector.broadcast %579 : vector<1x96xf32> to vector<3x96xf32>
    %581 = arith.addf %578, %580 : vector<3x96xf32>
    %582 = vector.extract_strided_slice %575 {offsets = [0, 0], sizes = [3, 32], strides = [1, 1]} : vector<3x96xf32> to vector<3x32xf32>
    %583 = vector.extract_strided_slice %581 {offsets = [0, 0], sizes = [3, 32], strides = [1, 1]} : vector<3x96xf32> to vector<3x32xf32>
    %584 = arith.addf %582, %583 : vector<3x32xf32>
    %585 = arith.negf %584 : vector<3x32xf32>
    %586 = math.exp %585 : vector<3x32xf32>
    %cst_204 = arith.constant 1.000000e+00 : f32
    %587 = vector.broadcast %cst_204 : f32 to vector<3x32xf32>
    %588 = arith.addf %587, %586 : vector<3x32xf32>
    %589 = arith.divf %587, %588 : vector<3x32xf32>
    %590 = vector.extract_strided_slice %575 {offsets = [0, 32], sizes = [3, 32], strides = [1, 1]} : vector<3x96xf32> to vector<3x32xf32>
    %591 = vector.extract_strided_slice %581 {offsets = [0, 32], sizes = [3, 32], strides = [1, 1]} : vector<3x96xf32> to vector<3x32xf32>
    %592 = arith.addf %590, %591 : vector<3x32xf32>
    %593 = arith.negf %592 : vector<3x32xf32>
    %594 = math.exp %593 : vector<3x32xf32>
    %cst_205 = arith.constant 1.000000e+00 : f32
    %595 = vector.broadcast %cst_205 : f32 to vector<3x32xf32>
    %596 = arith.addf %595, %594 : vector<3x32xf32>
    %597 = arith.divf %595, %596 : vector<3x32xf32>
    %598 = vector.extract_strided_slice %575 {offsets = [0, 64], sizes = [3, 32], strides = [1, 1]} : vector<3x96xf32> to vector<3x32xf32>
    %599 = vector.extract_strided_slice %581 {offsets = [0, 64], sizes = [3, 32], strides = [1, 1]} : vector<3x96xf32> to vector<3x32xf32>
    %600 = arith.mulf %589, %599 : vector<3x32xf32>
    %601 = arith.addf %598, %600 : vector<3x32xf32>
    %602 = math.tanh %601 : vector<3x32xf32>
    %cst_206 = arith.constant 1.000000e+00 : f32
    %603 = vector.broadcast %cst_206 : f32 to vector<3x32xf32>
    %604 = arith.subf %603, %597 : vector<3x32xf32>
    %605 = arith.mulf %604, %602 : vector<3x32xf32>
    %606 = arith.mulf %597, %529 : vector<3x32xf32>
    %607 = arith.addf %605, %606 : vector<3x32xf32>
    %608 = tpu.concatenate %568, %607 in 1 : vector<3x32xf32>, vector<3x32xf32> -> vector<3x64xf32>
    %c0_207 = arith.constant 0 : index
    %c0_208 = arith.constant 0 : index
    %c0_209 = arith.constant 0 : index
    %609 = vector.load %arg18[%c0_207, %c0_208, %c0_209] : memref<1x3x64xf32, #tpu.memory_space<vmem>>, vector<1x3x64xf32>
    %610 = vector.shape_cast %609 : vector<1x3x64xf32> to vector<3x64xf32>
    %611 = vector.shape_cast %608 : vector<3x64xf32> to vector<1x3x64xf32>
    tpu.vector_store %arg18[%c0_207, %c0_208, %c0_209], %611 {strides = array<i32>} : memref<1x3x64xf32, #tpu.memory_space<vmem>>, vector<1x3x64xf32>,
    return
  }
  func.func @transform_0(%arg0: i32) -> (i32, i32, i32, i32) {
    %c0_i32 = arith.constant 0 : i32
    %c0_i32_0 = arith.constant 0 : i32
    %c0_i32_1 = arith.constant 0 : i32
    %c0_i32_2 = arith.constant 0 : i32
    return %arg0, %c0_i32, %c0_i32_0, %c0_i32_1 : i32, i32, i32, i32
  }
  func.func @transform_1(%arg0: i32) -> (i32, i32) {
    %c0_i32 = arith.constant 0 : i32
    %c0_i32_0 = arith.constant 0 : i32
    %c0_i32_1 = arith.constant 0 : i32
    return %c0_i32, %c0_i32_0 : i32, i32
  }
  func.func @transform_2(%arg0: i32) -> (i32, i32) {
    %c0_i32 = arith.constant 0 : i32
    %c0_i32_0 = arith.constant 0 : i32
    %c0_i32_1 = arith.constant 0 : i32
    return %c0_i32, %c0_i32_0 : i32, i32
  }
  func.func @transform_3(%arg0: i32) -> (i32, i32) {
    %c0_i32 = arith.constant 0 : i32
    %c0_i32_0 = arith.constant 0 : i32
    %c0_i32_1 = arith.constant 0 : i32
    return %c0_i32, %c0_i32_0 : i32, i32
  }
  func.func @transform_4(%arg0: i32) -> (i32, i32) {
    %c0_i32 = arith.constant 0 : i32
    %c0_i32_0 = arith.constant 0 : i32
    %c0_i32_1 = arith.constant 0 : i32
    return %c0_i32, %c0_i32_0 : i32, i32
  }
  func.func @transform_5(%arg0: i32) -> (i32, i32) {
    %c0_i32 = arith.constant 0 : i32
    %c0_i32_0 = arith.constant 0 : i32
    %c0_i32_1 = arith.constant 0 : i32
    return %c0_i32, %c0_i32_0 : i32, i32
  }
  func.func @transform_6(%arg0: i32) -> (i32, i32) {
    %c0_i32 = arith.constant 0 : i32
    %c0_i32_0 = arith.constant 0 : i32
    %c0_i32_1 = arith.constant 0 : i32
    return %c0_i32, %c0_i32_0 : i32, i32
  }
  func.func @transform_7(%arg0: i32) -> (i32, i32) {
    %c0_i32 = arith.constant 0 : i32
    %c0_i32_0 = arith.constant 0 : i32
    %c0_i32_1 = arith.constant 0 : i32
    return %c0_i32, %c0_i32_0 : i32, i32
  }
  func.func @transform_8(%arg0: i32) -> (i32, i32) {
    %c0_i32 = arith.constant 0 : i32
    %c0_i32_0 = arith.constant 0 : i32
    %c0_i32_1 = arith.constant 0 : i32
    return %c0_i32, %c0_i32_0 : i32, i32
  }
  func.func @transform_9(%arg0: i32) -> (i32, i32) {
    %c0_i32 = arith.constant 0 : i32
    %c0_i32_0 = arith.constant 0 : i32
    %c0_i32_1 = arith.constant 0 : i32
    return %c0_i32, %c0_i32_0 : i32, i32
  }
  func.func @transform_10(%arg0: i32) -> (i32, i32) {
    %c0_i32 = arith.constant 0 : i32
    %c0_i32_0 = arith.constant 0 : i32
    %c0_i32_1 = arith.constant 0 : i32
    return %c0_i32, %c0_i32_0 : i32, i32
  }
  func.func @transform_11(%arg0: i32) -> (i32, i32) {
    %c0_i32 = arith.constant 0 : i32
    %c0_i32_0 = arith.constant 0 : i32
    %c0_i32_1 = arith.constant 0 : i32
    return %c0_i32, %c0_i32_0 : i32, i32
  }
  func.func @transform_12(%arg0: i32) -> (i32, i32) {
    %c0_i32 = arith.constant 0 : i32
    %c0_i32_0 = arith.constant 0 : i32
    %c0_i32_1 = arith.constant 0 : i32
    return %c0_i32, %c0_i32_0 : i32, i32
  }
  func.func @transform_13(%arg0: i32) -> (i32, i32) {
    %c0_i32 = arith.constant 0 : i32
    %c0_i32_0 = arith.constant 0 : i32
    %c0_i32_1 = arith.constant 0 : i32
    return %c0_i32, %c0_i32_0 : i32, i32
  }
  func.func @transform_14(%arg0: i32) -> (i32, i32) {
    %c0_i32 = arith.constant 0 : i32
    %c0_i32_0 = arith.constant 0 : i32
    %c0_i32_1 = arith.constant 0 : i32
    return %c0_i32, %c0_i32_0 : i32, i32
  }
  func.func @transform_15(%arg0: i32) -> (i32, i32) {
    %c0_i32 = arith.constant 0 : i32
    %c0_i32_0 = arith.constant 0 : i32
    %c0_i32_1 = arith.constant 0 : i32
    return %c0_i32, %c0_i32_0 : i32, i32
  }
  func.func @transform_16(%arg0: i32) -> (i32, i32) {
    %c0_i32 = arith.constant 0 : i32
    %c0_i32_0 = arith.constant 0 : i32
    %c0_i32_1 = arith.constant 0 : i32
    return %c0_i32, %c0_i32_0 : i32, i32
  }
  func.func @transform_17(%arg0: i32) -> (i32, i32, i32) {
    %c0_i32 = arith.constant 0 : i32
    %c0_i32_0 = arith.constant 0 : i32
    %c0_i32_1 = arith.constant 0 : i32
    return %arg0, %c0_i32, %c0_i32_0 : i32, i32, i32
  }
}

</mosaic_0001>

<llo_original>
// kernel: _lambda_.3
$region0: #{_lambda_.3}
  #allocation0 [shape = 'u32[]', space=smem, size = 0x4, offset = 0x4, fixed_abs, tag = 'smem constant byte address 0x4 - core index']
  #allocation1 [shape = 'u32[72,128]{1,0:T(1,128)}', space=vmem, size = 0x9000, scoped, tag = 'internal scratch']
  %s0 = inlined_call_operand.vmem [shape: f32[2,4,3,32], index: 0, kind: input, shape index: {}]
  %s1 = inlined_call_operand.vmem [shape: bf16[32,96], index: 1, kind: input, shape index: {}]
  %s2 = inlined_call_operand.vmem [shape: bf16[32,96], index: 2, kind: input, shape index: {}]
  %s3 = inlined_call_operand.vmem [shape: f32[1,96], index: 3, kind: input, shape index: {}]
  %s4 = inlined_call_operand.vmem [shape: f32[1,96], index: 4, kind: input, shape index: {}]
  %s5 = inlined_call_operand.vmem [shape: bf16[32,96], index: 5, kind: input, shape index: {}]
  %s6 = inlined_call_operand.vmem [shape: bf16[32,96], index: 6, kind: input, shape index: {}]
  %s7 = inlined_call_operand.vmem [shape: f32[1,96], index: 7, kind: input, shape index: {}]
  %s8 = inlined_call_operand.vmem [shape: f32[1,96], index: 8, kind: input, shape index: {}]
  %s9 = inlined_call_operand.vmem [shape: bf16[64,96], index: 9, kind: input, shape index: {}]
  %s10 = inlined_call_operand.vmem [shape: bf16[32,96], index: 10, kind: input, shape index: {}]
  %s11 = inlined_call_operand.vmem [shape: f32[1,96], index: 11, kind: input, shape index: {}]
  %s12 = inlined_call_operand.vmem [shape: f32[1,96], index: 12, kind: input, shape index: {}]
  %s13 = inlined_call_operand.vmem [shape: bf16[64,96], index: 13, kind: input, shape index: {}]
  %s14 = inlined_call_operand.vmem [shape: bf16[32,96], index: 14, kind: input, shape index: {}]
  %s15 = inlined_call_operand.vmem [shape: f32[1,96], index: 15, kind: input, shape index: {}]
  %s16 = inlined_call_operand.vmem [shape: f32[1,96], index: 16, kind: input, shape index: {}]
  %s17 = inlined_call_operand.vmem [shape: f32[2,3,64], index: 17, kind: output, shape index: {}]
  %s18 = sld [smem:[#allocation0]]
  $region101: #{_lambda_.3} parent=0
    _
  %s20 = ssub.s32 1, %s18
  %s21 = scalar_select 0, %s20, %s18
  loop: start=0, step=1, limit=4
  $region2: #{_lambda_.3} parent=0 // loop_pre_header
    _
  $region3: #{_lambda_.3} parent=0 // loop_header
    %s23 = sphi 0, %s27
    %p24 = scmp.ge.s32.totalorder %s23, 4
    %s33 = sphi 0, %s35
    %s36 = sphi 0, %s33
    %s37 = sphi 0, %s36
    %s53 = sphi 0, %s37
    %s57 = sphi 0, %s57
    %s59 = sphi 0, %s57
    %s60 = sphi 0, %s59
    %s74 = sphi 0, %s60
    %s78 = sphi 0, %s78
    %s80 = sphi 0, %s78
    %s81 = sphi 0, %s80
    %s95 = sphi 0, %s81
    %s99 = sphi 0, %s99
    %s101 = sphi 0, %s99
    %s102 = sphi 0, %s101
    %s116 = sphi 0, %s102
    %s120 = sphi 0, %s120
    %s122 = sphi 0, %s120
    %s123 = sphi 0, %s122
    %s137 = sphi 0, %s123
    %s141 = sphi 0, %s141
    %s143 = sphi 0, %s141
    %s144 = sphi 0, %s143
    %s158 = sphi 0, %s144
    %s162 = sphi 0, %s162
    %s164 = sphi 0, %s162
    %s165 = sphi 0, %s164
    %s179 = sphi 0, %s165
    %s183 = sphi 0, %s183
    %s185 = sphi 0, %s183
    %s186 = sphi 0, %s185
    %s200 = sphi 0, %s186
    %s204 = sphi 0, %s204
    %s206 = sphi 0, %s204
    %s207 = sphi 0, %s206
    %s221 = sphi 0, %s207
    %s225 = sphi 0, %s225
    %s227 = sphi 0, %s225
    %s228 = sphi 0, %s227
    %s242 = sphi 0, %s228
    %s246 = sphi 0, %s246
    %s248 = sphi 0, %s246
    %s249 = sphi 0, %s248
    %s263 = sphi 0, %s249
    %s267 = sphi 0, %s267
    %s269 = sphi 0, %s267
    %s270 = sphi 0, %s269
    %s284 = sphi 0, %s270
    %s288 = sphi 0, %s288
    %s290 = sphi 0, %s288
    %s291 = sphi 0, %s290
    %s305 = sphi 0, %s291
    %s309 = sphi 0, %s309
    %s311 = sphi 0, %s309
    %s312 = sphi 0, %s311
    %s326 = sphi 0, %s312
    %s330 = sphi 0, %s330
    %s332 = sphi 0, %s330
    %s333 = sphi 0, %s332
    %s347 = sphi 0, %s333
    %s351 = sphi 0, %s351
    %s353 = sphi 0, %s351
    %s354 = sphi 0, %s353
    %s368 = sphi 0, %s354
    %s372 = sphi 0, %s372
    %s374 = sphi 0, %s372
    %s375 = sphi 0, %s374
    %s389 = sphi 0, %s375
    %s395 = sphi 0, %s397
    %s398 = sphi 0, %s395
    %s399 = sphi 0, %s398
    %s415 = sphi 0, %s399
  $region4: #{_lambda_.3} parent=0 // loop_header_branch
    %26 = sbr.rel (%p24) target = $region8
  $region5: #{_lambda_.3} parent=0 // loop_body
    %s28 = ssub.s32 %s23, 1
    %s29 = ssub.s32 %s23, 2
    %s30 = sadd.s32 %s23, 1
    %s31 = ssub.s32 %s23, %s30
    %p32 = scmp.eq.s32.totalorder %s31, 0
    %s34 = sadd.s32 %s33, 1
    %s35 = scalar_select %p32, %s33, %s34
    %p38 = pneg %p32
    %p39 = scmp.eq.s32.totalorder %s23, 1
    %p40 = por %p38, %p39
    %p41 = scmp.ne.s32.totalorder %s33, %s36
    %p42 = scmp.eq.s32.totalorder %s23, 0
    %p43 = por %p41, %p42
    %p44 = scmp.ne.s32.totalorder %s33, %s36
    %p45 = scmp.eq.s32.totalorder %s28, 1
    %p46 = por %p44, %p45
    %p47 = scmp.ne.s32.totalorder %s36, %s37
    %p48 = scmp.eq.s32.totalorder %s28, 0
    %p49 = por %p47, %p48
    %p50 = scmp.ne.s32.totalorder %s36, %s37
    %p51 = scmp.eq.s32.totalorder %s29, 1
    %p52 = por %p50, %p51
    %p54 = scmp.ne.s32.totalorder %s37, %s53
    %p55 = scmp.eq.s32.totalorder %s29, 0
    %p56 = por %p54, %p55
    %s58 = sadd.s32 %s57, 1
    %p61 = scmp.eq.s32.totalorder %s23, 1
    %p62 = scmp.ne.s32.totalorder %s57, %s59
    %p63 = scmp.eq.s32.totalorder %s23, 0
    %p64 = por %p62, %p63
    %p65 = scmp.ne.s32.totalorder %s57, %s59
    %p66 = scmp.eq.s32.totalorder %s28, 1
    %p67 = por %p65, %p66
    %p68 = scmp.ne.s32.totalorder %s59, %s60
    %p69 = scmp.eq.s32.totalorder %s28, 0
    %p70 = por %p68, %p69
    %p71 = scmp.ne.s32.totalorder %s59, %s60
    %p72 = scmp.eq.s32.totalorder %s29, 1
    %p73 = por %p71, %p72
    %p75 = scmp.ne.s32.totalorder %s60, %s74
    %p76 = scmp.eq.s32.totalorder %s29, 0
    %p77 = por %p75, %p76
    %s79 = sadd.s32 %s78, 1
    %p82 = scmp.eq.s32.totalorder %s23, 1
    %p83 = scmp.ne.s32.totalorder %s78, %s80
    %p84 = scmp.eq.s32.totalorder %s23, 0
    %p85 = por %p83, %p84
    %p86 = scmp.ne.s32.totalorder %s78, %s80
    %p87 = scmp.eq.s32.totalorder %s28, 1
    %p88 = por %p86, %p87
    %p89 = scmp.ne.s32.totalorder %s80, %s81
    %p90 = scmp.eq.s32.totalorder %s28, 0
    %p91 = por %p89, %p90
    %p92 = scmp.ne.s32.totalorder %s80, %s81
    %p93 = scmp.eq.s32.totalorder %s29, 1
    %p94 = por %p92, %p93
    %p96 = scmp.ne.s32.totalorder %s81, %s95
    %p97 = scmp.eq.s32.totalorder %s29, 0
    %p98 = por %p96, %p97
    %s100 = sadd.s32 %s99, 1
    %p103 = scmp.eq.s32.totalorder %s23, 1
    %p104 = scmp.ne.s32.totalorder %s99, %s101
    %p105 = scmp.eq.s32.totalorder %s23, 0
    %p106 = por %p104, %p105
    %p107 = scmp.ne.s32.totalorder %s99, %s101
    %p108 = scmp.eq.s32.totalorder %s28, 1
    %p109 = por %p107, %p108
    %p110 = scmp.ne.s32.totalorder %s101, %s102
    %p111 = scmp.eq.s32.totalorder %s28, 0
    %p112 = por %p110, %p111
    %p113 = scmp.ne.s32.totalorder %s101, %s102
    %p114 = scmp.eq.s32.totalorder %s29, 1
    %p115 = por %p113, %p114
    %p117 = scmp.ne.s32.totalorder %s102, %s116
    %p118 = scmp.eq.s32.totalorder %s29, 0
    %p119 = por %p117, %p118
    %s121 = sadd.s32 %s120, 1
    %p124 = scmp.eq.s32.totalorder %s23, 1
    %p125 = scmp.ne.s32.totalorder %s120, %s122
    %p126 = scmp.eq.s32.totalorder %s23, 0
    %p127 = por %p125, %p126
    %p128 = scmp.ne.s32.totalorder %s120, %s122
    %p129 = scmp.eq.s32.totalorder %s28, 1
    %p130 = por %p128, %p129
    %p131 = scmp.ne.s32.totalorder %s122, %s123
    %p132 = scmp.eq.s32.totalorder %s28, 0
    %p133 = por %p131, %p132
    %p134 = scmp.ne.s32.totalorder %s122, %s123
    %p135 = scmp.eq.s32.totalorder %s29, 1
    %p136 = por %p134, %p135
    %p138 = scmp.ne.s32.totalorder %s123, %s137
    %p139 = scmp.eq.s32.totalorder %s29, 0
    %p140 = por %p138, %p139
    %s142 = sadd.s32 %s141, 1
    %p145 = scmp.eq.s32.totalorder %s23, 1
    %p146 = scmp.ne.s32.totalorder %s141, %s143
    %p147 = scmp.eq.s32.totalorder %s23, 0
    %p148 = por %p146, %p147
    %p149 = scmp.ne.s32.totalorder %s141, %s143
    %p150 = scmp.eq.s32.totalorder %s28, 1
    %p151 = por %p149, %p150
    %p152 = scmp.ne.s32.totalorder %s143, %s144
    %p153 = scmp.eq.s32.totalorder %s28, 0
    %p154 = por %p152, %p153
    %p155 = scmp.ne.s32.totalorder %s143, %s144
    %p156 = scmp.eq.s32.totalorder %s29, 1
    %p157 = por %p155, %p156
    %p159 = scmp.ne.s32.totalorder %s144, %s158
    %p160 = scmp.eq.s32.totalorder %s29, 0
    %p161 = por %p159, %p160
    %s163 = sadd.s32 %s162, 1
    %p166 = scmp.eq.s32.totalorder %s23, 1
    %p167 = scmp.ne.s32.totalorder %s162, %s164
    %p168 = scmp.eq.s32.totalorder %s23, 0
    %p169 = por %p167, %p168
    %p170 = scmp.ne.s32.totalorder %s162, %s164
    %p171 = scmp.eq.s32.totalorder %s28, 1
    %p172 = por %p170, %p171
    %p173 = scmp.ne.s32.totalorder %s164, %s165
    %p174 = scmp.eq.s32.totalorder %s28, 0
    %p175 = por %p173, %p174
    %p176 = scmp.ne.s32.totalorder %s164, %s165
    %p177 = scmp.eq.s32.totalorder %s29, 1
    %p178 = por %p176, %p177
    %p180 = scmp.ne.s32.totalorder %s165, %s179
    %p181 = scmp.eq.s32.totalorder %s29, 0
    %p182 = por %p180, %p181
    %s184 = sadd.s32 %s183, 1
    %p187 = scmp.eq.s32.totalorder %s23, 1
    %p188 = scmp.ne.s32.totalorder %s183, %s185
    %p189 = scmp.eq.s32.totalorder %s23, 0
    %p190 = por %p188, %p189
    %p191 = scmp.ne.s32.totalorder %s183, %s185
    %p192 = scmp.eq.s32.totalorder %s28, 1
    %p193 = por %p191, %p192
    %p194 = scmp.ne.s32.totalorder %s185, %s186
    %p195 = scmp.eq.s32.totalorder %s28, 0
    %p196 = por %p194, %p195
    %p197 = scmp.ne.s32.totalorder %s185, %s186
    %p198 = scmp.eq.s32.totalorder %s29, 1
    %p199 = por %p197, %p198
    %p201 = scmp.ne.s32.totalorder %s186, %s200
    %p202 = scmp.eq.s32.totalorder %s29, 0
    %p203 = por %p201, %p202
    %s205 = sadd.s32 %s204, 1
    %p208 = scmp.eq.s32.totalorder %s23, 1
    %p209 = scmp.ne.s32.totalorder %s204, %s206
    %p210 = scmp.eq.s32.totalorder %s23, 0
    %p211 = por %p209, %p210
    %p212 = scmp.ne.s32.totalorder %s204, %s206
    %p213 = scmp.eq.s32.totalorder %s28, 1
    %p214 = por %p212, %p213
    %p215 = scmp.ne.s32.totalorder %s206, %s207
    %p216 = scmp.eq.s32.totalorder %s28, 0
    %p217 = por %p215, %p216
    %p218 = scmp.ne.s32.totalorder %s206, %s207
    %p219 = scmp.eq.s32.totalorder %s29, 1
    %p220 = por %p218, %p219
    %p222 = scmp.ne.s32.totalorder %s207, %s221
    %p223 = scmp.eq.s32.totalorder %s29, 0
    %p224 = por %p222, %p223
    %s226 = sadd.s32 %s225, 1
    %p229 = scmp.eq.s32.totalorder %s23, 1
    %p230 = scmp.ne.s32.totalorder %s225, %s227
    %p231 = scmp.eq.s32.totalorder %s23, 0
    %p232 = por %p230, %p231
    %p233 = scmp.ne.s32.totalorder %s225, %s227
    %p234 = scmp.eq.s32.totalorder %s28, 1
    %p235 = por %p233, %p234
    %p236 = scmp.ne.s32.totalorder %s227, %s228
    %p237 = scmp.eq.s32.totalorder %s28, 0
    %p238 = por %p236, %p237
    %p239 = scmp.ne.s32.totalorder %s227, %s228
    %p240 = scmp.eq.s32.totalorder %s29, 1
    %p241 = por %p239, %p240
    %p243 = scmp.ne.s32.totalorder %s228, %s242
    %p244 = scmp.eq.s32.totalorder %s29, 0
    %p245 = por %p243, %p244
    %s247 = sadd.s32 %s246, 1
    %p250 = scmp.eq.s32.totalorder %s23, 1
    %p251 = scmp.ne.s32.totalorder %s246, %s248
    %p252 = scmp.eq.s32.totalorder %s23, 0
    %p253 = por %p251, %p252
    %p254 = scmp.ne.s32.totalorder %s246, %s248
    %p255 = scmp.eq.s32.totalorder %s28, 1
    %p256 = por %p254, %p255
    %p257 = scmp.ne.s32.totalorder %s248, %s249
    %p258 = scmp.eq.s32.totalorder %s28, 0
    %p259 = por %p257, %p258
    %p260 = scmp.ne.s32.totalorder %s248, %s249
    %p261 = scmp.eq.s32.totalorder %s29, 1
    %p262 = por %p260, %p261
    %p264 = scmp.ne.s32.totalorder %s249, %s263
    %p265 = scmp.eq.s32.totalorder %s29, 0
    %p266 = por %p264, %p265
    %s268 = sadd.s32 %s267, 1
    %p271 = scmp.eq.s32.totalorder %s23, 1
    %p272 = scmp.ne.s32.totalorder %s267, %s269
    %p273 = scmp.eq.s32.totalorder %s23, 0
    %p274 = por %p272, %p273
    %p275 = scmp.ne.s32.totalorder %s267, %s269
    %p276 = scmp.eq.s32.totalorder %s28, 1
    %p277 = por %p275, %p276
    %p278 = scmp.ne.s32.totalorder %s269, %s270
    %p279 = scmp.eq.s32.totalorder %s28, 0
    %p280 = por %p278, %p279
    %p281 = scmp.ne.s32.totalorder %s269, %s270
    %p282 = scmp.eq.s32.totalorder %s29, 1
    %p283 = por %p281, %p282
    %p285 = scmp.ne.s32.totalorder %s270, %s284
    %p286 = scmp.eq.s32.totalorder %s29, 0
    %p287 = por %p285, %p286
    %s289 = sadd.s32 %s288, 1
    %p292 = scmp.eq.s32.totalorder %s23, 1
    %p293 = scmp.ne.s32.totalorder %s288, %s290
    %p294 = scmp.eq.s32.totalorder %s23, 0
    %p295 = por %p293, %p294
    %p296 = scmp.ne.s32.totalorder %s288, %s290
    %p297 = scmp.eq.s32.totalorder %s28, 1
    %p298 = por %p296, %p297
    %p299 = scmp.ne.s32.totalorder %s290, %s291
    %p300 = scmp.eq.s32.totalorder %s28, 0
    %p301 = por %p299, %p300
    %p302 = scmp.ne.s32.totalorder %s290, %s291
    %p303 = scmp.eq.s32.totalorder %s29, 1
    %p304 = por %p302, %p303
    %p306 = scmp.ne.s32.totalorder %s291, %s305
    %p307 = scmp.eq.s32.totalorder %s29, 0
    %p308 = por %p306, %p307
    %s310 = sadd.s32 %s309, 1
    %p313 = scmp.eq.s32.totalorder %s23, 1
    %p314 = scmp.ne.s32.totalorder %s309, %s311
    %p315 = scmp.eq.s32.totalorder %s23, 0
    %p316 = por %p314, %p315
    %p317 = scmp.ne.s32.totalorder %s309, %s311
    %p318 = scmp.eq.s32.totalorder %s28, 1
    %p319 = por %p317, %p318
    %p320 = scmp.ne.s32.totalorder %s311, %s312
    %p321 = scmp.eq.s32.totalorder %s28, 0
    %p322 = por %p320, %p321
    %p323 = scmp.ne.s32.totalorder %s311, %s312
    %p324 = scmp.eq.s32.totalorder %s29, 1
    %p325 = por %p323, %p324
    %p327 = scmp.ne.s32.totalorder %s312, %s326
    %p328 = scmp.eq.s32.totalorder %s29, 0
    %p329 = por %p327, %p328
    %s331 = sadd.s32 %s330, 1
    %p334 = scmp.eq.s32.totalorder %s23, 1
    %p335 = scmp.ne.s32.totalorder %s330, %s332
    %p336 = scmp.eq.s32.totalorder %s23, 0
    %p337 = por %p335, %p336
    %p338 = scmp.ne.s32.totalorder %s330, %s332
    %p339 = scmp.eq.s32.totalorder %s28, 1
    %p340 = por %p338, %p339
    %p341 = scmp.ne.s32.totalorder %s332, %s333
    %p342 = scmp.eq.s32.totalorder %s28, 0
    %p343 = por %p341, %p342
    %p344 = scmp.ne.s32.totalorder %s332, %s333
    %p345 = scmp.eq.s32.totalorder %s29, 1
    %p346 = por %p344, %p345
    %p348 = scmp.ne.s32.totalorder %s333, %s347
    %p349 = scmp.eq.s32.totalorder %s29, 0
    %p350 = por %p348, %p349
    %s352 = sadd.s32 %s351, 1
    %p355 = scmp.eq.s32.totalorder %s23, 1
    %p356 = scmp.ne.s32.totalorder %s351, %s353
    %p357 = scmp.eq.s32.totalorder %s23, 0
    %p358 = por %p356, %p357
    %p359 = scmp.ne.s32.totalorder %s351, %s353
    %p360 = scmp.eq.s32.totalorder %s28, 1
    %p361 = por %p359, %p360
    %p362 = scmp.ne.s32.totalorder %s353, %s354
    %p363 = scmp.eq.s32.totalorder %s28, 0
    %p364 = por %p362, %p363
    %p365 = scmp.ne.s32.totalorder %s353, %s354
    %p366 = scmp.eq.s32.totalorder %s29, 1
    %p367 = por %p365, %p366
    %p369 = scmp.ne.s32.totalorder %s354, %s368
    %p370 = scmp.eq.s32.totalorder %s29, 0
    %p371 = por %p369, %p370
    %s373 = sadd.s32 %s372, 1
    %p376 = scmp.eq.s32.totalorder %s23, 1
    %p377 = scmp.ne.s32.totalorder %s372, %s374
    %p378 = scmp.eq.s32.totalorder %s23, 0
    %p379 = por %p377, %p378
    %p380 = scmp.ne.s32.totalorder %s372, %s374
    %p381 = scmp.eq.s32.totalorder %s28, 1
    %p382 = por %p380, %p381
    %p383 = scmp.ne.s32.totalorder %s374, %s375
    %p384 = scmp.eq.s32.totalorder %s28, 0
    %p385 = por %p383, %p384
    %p386 = scmp.ne.s32.totalorder %s374, %s375
    %p387 = scmp.eq.s32.totalorder %s29, 1
    %p388 = por %p386, %p387
    %p390 = scmp.ne.s32.totalorder %s375, %s389
    %p391 = scmp.eq.s32.totalorder %s29, 0
    %p392 = por %p390, %p391
    %s393 = ssub.s32 %s23, %s30
    %p394 = scmp.eq.s32.totalorder %s393, 0
    %s396 = sadd.s32 %s395, 1
    %s397 = scalar_select %p394, %s395, %s396
    %p400 = pneg %p394
    %p401 = scmp.eq.s32.totalorder %s23, 1
    %p402 = por %p400, %p401
    %p403 = scmp.ne.s32.totalorder %s395, %s398
    %p404 = scmp.eq.s32.totalorder %s23, 0
    %p405 = por %p403, %p404
    %p406 = scmp.ne.s32.totalorder %s395, %s398
    %p407 = scmp.eq.s32.totalorder %s28, 1
    %p408 = por %p406, %p407
    %p409 = scmp.ne.s32.totalorder %s398, %s399
    %p410 = scmp.eq.s32.totalorder %s28, 0
    %p411 = por %p409, %p410
    %p412 = scmp.ne.s32.totalorder %s398, %s399
    %p413 = scmp.eq.s32.totalorder %s29, 1
    %p414 = por %p412, %p413
    %p416 = scmp.ne.s32.totalorder %s399, %s415
    %p417 = scmp.eq.s32.totalorder %s29, 0
    %p418 = por %p416, %p417
    %p419 = scmp.le.s32.totalorder 1, %s23
    %p420 = scmp.lt.s32.totalorder %s23, 3
    %p421 = pnand %p419, %p420
    %p422 = pneg %p421
    // Predicated region
    $region9: #{_lambda_.3} parent=5 // pred_check
      _
    $region10: #{_lambda_.3} parent=5 // pred_check_branch
      %424 = sbr.rel (%p421) target = $region12
    $region11: #{_lambda_.3} parent=5 // pred_region
      %s425 = ssub.s32 %s23, 1
      // Predicated region
      $region13: #{_lambda_.3} parent=11 // pred_check
        %p426 = pneg %p70
      $region14: #{_lambda_.3} parent=11 // pred_check_branch
        %428 = sbr.rel (%p426) target = $region16
      $region15: #{_lambda_.3} parent=11 // pred_region
        _
      $region16: #{_lambda_.3} parent=11 // pred_fallthru
        _
      // Predicated region
      $region17: #{_lambda_.3} parent=11 // pred_check
        %p429 = pneg %p91
      $region18: #{_lambda_.3} parent=11 // pred_check_branch
        %431 = sbr.rel (%p429) target = $region20
      $region19: #{_lambda_.3} parent=11 // pred_region
        _
      $region20: #{_lambda_.3} parent=11 // pred_fallthru
        _
      // Predicated region
      $region21: #{_lambda_.3} parent=11 // pred_check
        %p432 = pneg %p112
      $region22: #{_lambda_.3} parent=11 // pred_check_branch
        %434 = sbr.rel (%p432) target = $region24
      $region23: #{_lambda_.3} parent=11 // pred_region
        _
      $region24: #{_lambda_.3} parent=11 // pred_fallthru
        _
      // Predicated region
      $region25: #{_lambda_.3} parent=11 // pred_check
        %p435 = pneg %p133
      $region26: #{_lambda_.3} parent=11 // pred_check_branch
        %437 = sbr.rel (%p435) target = $region28
      $region27: #{_lambda_.3} parent=11 // pred_region
        _
      $region28: #{_lambda_.3} parent=11 // pred_fallthru
        _
      // Predicated region
      $region29: #{_lambda_.3} parent=11 // pred_check
        %p438 = pneg %p154
      $region30: #{_lambda_.3} parent=11 // pred_check_branch
        %440 = sbr.rel (%p438) target = $region32
      $region31: #{_lambda_.3} parent=11 // pred_region
        _
      $region32: #{_lambda_.3} parent=11 // pred_fallthru
        _
      // Predicated region
      $region33: #{_lambda_.3} parent=11 // pred_check
        %p441 = pneg %p175
      $region34: #{_lambda_.3} parent=11 // pred_check_branch
        %443 = sbr.rel (%p441) target = $region36
      $region35: #{_lambda_.3} parent=11 // pred_region
        _
      $region36: #{_lambda_.3} parent=11 // pred_fallthru
        _
      // Predicated region
      $region37: #{_lambda_.3} parent=11 // pred_check
        %p444 = pneg %p196
      $region38: #{_lambda_.3} parent=11 // pred_check_branch
        %446 = sbr.rel (%p444) target = $region40
      $region39: #{_lambda_.3} parent=11 // pred_region
        _
      $region40: #{_lambda_.3} parent=11 // pred_fallthru
        _
      // Predicated region
      $region41: #{_lambda_.3} parent=11 // pred_check
        %p447 = pneg %p217
      $region42: #{_lambda_.3} parent=11 // pred_check_branch
        %449 = sbr.rel (%p447) target = $region44
      $region43: #{_lambda_.3} parent=11 // pred_region
        _
      $region44: #{_lambda_.3} parent=11 // pred_fallthru
        _
      // Predicated region
      $region45: #{_lambda_.3} parent=11 // pred_check
        %p450 = pneg %p238
      $region46: #{_lambda_.3} parent=11 // pred_check_branch
        %452 = sbr.rel (%p450) target = $region48
      $region47: #{_lambda_.3} parent=11 // pred_region
        _
      $region48: #{_lambda_.3} parent=11 // pred_fallthru
        _
      // Predicated region
      $region49: #{_lambda_.3} parent=11 // pred_check
        %p453 = pneg %p259
      $region50: #{_lambda_.3} parent=11 // pred_check_branch
        %455 = sbr.rel (%p453) target = $region52
      $region51: #{_lambda_.3} parent=11 // pred_region
        _
      $region52: #{_lambda_.3} parent=11 // pred_fallthru
        _
      // Predicated region
      $region53: #{_lambda_.3} parent=11 // pred_check
        %p456 = pneg %p280
      $region54: #{_lambda_.3} parent=11 // pred_check_branch
        %458 = sbr.rel (%p456) target = $region56
      $region55: #{_lambda_.3} parent=11 // pred_region
        _
      $region56: #{_lambda_.3} parent=11 // pred_fallthru
        _
      // Predicated region
      $region57: #{_lambda_.3} parent=11 // pred_check
        %p459 = pneg %p301
      $region58: #{_lambda_.3} parent=11 // pred_check_branch
        %461 = sbr.rel (%p459) target = $region60
      $region59: #{_lambda_.3} parent=11 // pred_region
        _
      $region60: #{_lambda_.3} parent=11 // pred_fallthru
        _
      // Predicated region
      $region61: #{_lambda_.3} parent=11 // pred_check
        %p462 = pneg %p322
      $region62: #{_lambda_.3} parent=11 // pred_check_branch
        %464 = sbr.rel (%p462) target = $region64
      $region63: #{_lambda_.3} parent=11 // pred_region
        _
      $region64: #{_lambda_.3} parent=11 // pred_fallthru
        _
      // Predicated region
      $region65: #{_lambda_.3} parent=11 // pred_check
        %p465 = pneg %p343
      $region66: #{_lambda_.3} parent=11 // pred_check_branch
        %467 = sbr.rel (%p465) target = $region68
      $region67: #{_lambda_.3} parent=11 // pred_region
        _
      $region68: #{_lambda_.3} parent=11 // pred_fallthru
        _
      // Predicated region
      $region69: #{_lambda_.3} parent=11 // pred_check
        %p468 = pneg %p364
      $region70: #{_lambda_.3} parent=11 // pred_check_branch
        %470 = sbr.rel (%p468) target = $region72
      $region71: #{_lambda_.3} parent=11 // pred_region
        _
      $region72: #{_lambda_.3} parent=11 // pred_fallthru
        _
      // Predicated region
      $region73: #{_lambda_.3} parent=11 // pred_check
        %p471 = pneg %p385
      $region74: #{_lambda_.3} parent=11 // pred_check_branch
        %473 = sbr.rel (%p471) target = $region76
      $region75: #{_lambda_.3} parent=11 // pred_region
        _
      $region76: #{_lambda_.3} parent=11 // pred_fallthru
        _
    $region12: #{_lambda_.3} parent=5 // pred_fallthru
      _
    %p474 = scmp.lt.s32.totalorder %s23, 2
    // Predicated region
    $region77: #{_lambda_.3} parent=5 // pred_check
      %p475 = pneg %p474
    $region78: #{_lambda_.3} parent=5 // pred_check_branch
      %477 = sbr.rel (%p475) target = $region80
    $region79: #{_lambda_.3} parent=5 // pred_region
      // Predicated region
      $region81: #{_lambda_.3} parent=79 // pred_check
        %p478 = pneg %p43
      $region82: #{_lambda_.3} parent=79 // pred_check_branch
        %480 = sbr.rel (%p478) target = $region84
      $region83: #{_lambda_.3} parent=79 // pred_region
        %p481 = scmp.lt.s32.totalorder %s23, 1
        %s482 = scalar_select %p481, %s23, 1
        %s483 = smul.addr %s482, 4
        %s484 = smul.addr %s483, 4
        %s485 = scalar_lea.vmem %s0, %s484
      $region84: #{_lambda_.3} parent=79 // pred_fallthru
        _
    $region80: #{_lambda_.3} parent=5 // pred_fallthru
      _
    %p486 = scmp.le.s32.totalorder 1, %s23
    %p487 = scmp.lt.s32.totalorder %s23, 3
    %p488 = pnand %p486, %p487
    %p489 = pneg %p488
    // Predicated region
    $region85: #{_lambda_.3} parent=5 // pred_check
      _
    $region86: #{_lambda_.3} parent=5 // pred_check_branch
      %491 = sbr.rel (%p488) target = $region88
    $region87: #{_lambda_.3} parent=5 // pred_region
      %s492 = ssub.s32 %s23, 1
      %p493 = scmp.lt.s32.totalorder %s28, 1
      %s494 = scalar_select %p493, %s28, 1
      %s495 = smul.addr %s494, 4
      %s496 = smul.addr %s495, 4
      %s497 = scalar_lea.vmem %s0, %s496
      %p498 = pneg %p49
      %p499 = pneg %p46
      %p500 = pneg %p70
      %p501 = pneg %p67
      %p502 = pneg %p91
      %p503 = pneg %p88
      %p504 = pneg %p112
      %p505 = pneg %p109
      %p506 = pneg %p133
      %p507 = pneg %p130
      %p508 = pneg %p154
      %p509 = pneg %p151
      %p510 = pneg %p175
      %p511 = pneg %p172
      %p512 = pneg %p196
      %p513 = pneg %p193
      %p514 = pneg %p217
      %p515 = pneg %p214
      %p516 = pneg %p238
      %p517 = pneg %p235
      %p518 = pneg %p259
      %p519 = pneg %p256
      %p520 = pneg %p280
      %p521 = pneg %p277
      %p522 = pneg %p301
      %p523 = pneg %p298
      %p524 = pneg %p322
      %p525 = pneg %p319
      %p526 = pneg %p343
      %p527 = pneg %p340
      %p528 = pneg %p364
      %p529 = pneg %p361
      %p530 = pneg %p385
      %p531 = pneg %p382
      %p532 = pneg %p411
      %p533 = pneg %p408
      %p534 = scmp.lt.s32.totalorder %s28, 1
      %s535 = scalar_select %p534, %s28, 1
      %s536 = smul.addr %s535, 4
      %s537 = scalar_lea.vmem %s17, %s536
      %p538 = scmp.lt.s32.totalorder %s28, 1
      %s539 = scalar_select %p538, %s28, 1
      %s540 = smul.addr %s539, 4
      %s541 = smul.addr %s540, 4
      %s542 = scalar_lea.vmem %s0, %s541
      %p543 = scmp.lt.s32.totalorder %s28, 1
      %s544 = scalar_select %p543, %s28, 1
      %s545 = smul.addr %s544, 4
      %s546 = scalar_lea.vmem %s17, %s545
      %v548 = vld [vmem:[%s542] sm:$0x7]
      %s549 = scalar_lea.vmem %s542, 4
      %v550 = vld [vmem:[%s549] sm:$0x7]
      %s551 = scalar_lea.vmem %s542, 8
      %v552 = vld [vmem:[%s551] sm:$0x7]
      %s553 = scalar_lea.vmem %s542, 12
      %v554 = vld [vmem:[%s553] sm:$0x7]
      %v555 = vpack.c.bf16 %v548, %v548
      %v556 = vld [vmem:[%s1] sm:$0xf]
      %v557 = vld [vmem:[%s1 + $0x4] sm:$0xf]
      %v558 = vld [vmem:[%s1 + $0x8] sm:$0xf]
      %v559 = vld [vmem:[%s1 + $0xc] sm:$0xf]
      %v560 = vld [vmem:[%s3] sm:$0x1]
      %v562 = vperm.slane %v560, 0
      %v568 = vunpack.c.l.b16 %v556
      %v569 = vunpack.c.l.b16 %v557
      %v570 = vunpack.c.l.b16 %v558
      %v571 = vunpack.c.l.b16 %v559
      %v572 = vpack.c.b16 %v569, %v568
      %v573 = vpack.c.b16 %v571, %v570
      %vm576 = vcmask 261120
      %v578 = vsel %vm576, %v555, 0
      %580 = vmatpush.bf16.msra.mxu0 0
      %581 = vmatpush.bf16.msra.mxu0 0
      %582 = vmatpush.bf16.msra.mxu0 0
      %583 = vmatpush.bf16.msra.mxu0 0
      %584 = vmatpush.bf16.msra.mxu0 0
      %585 = vmatpush.bf16.msra.mxu0 0
      %586 = vmatpush.bf16.msra.mxu0 %v573
      %587 = vmatpush.bf16.msra.mxu0 %v572
      %588 = vmatmul.bf16.gmra.mxu0 %v578
      %v589 = vpop.f32.mrf.mxu0
      %v590 = vadd.f32 %v562, %v589
      %v591 = vpop.f32.mrf.mxu0
      %592 = vdwg.mxu0
      %v593 = vld [vmem:[%s4] sm:$0x1]
      %v595 = vperm.slane %v593, 0
      %v597 = vadd.f32 %v590, %v595
      %v598 = vxor.u32 %v597, 2147483648
      %v599 = vmul.f32 %v598, 1.442695
      %v600 = vpow.pop %v599
      %v601 = vadd.f32 %v600, 1.0
      %v602 = vrcp.pop %v601
      %v603 = vmul.f32 %v601, %v602
      %v604 = vsub.f32 1.0, %v603
      %v605 = vmul.f32 %v602, %v604
      %v606 = vadd.f32 %v602, %v605
      %vm607 = vweird.f32 %v601
      %vm608 = vweird.f32 %v602
      %vm609 = vmor %vm607, %vm608
      %v610 = vsel %vm609, %v602, %v606
      %v611 = vand.u32 2147483647, %v601
      %vm612 = vcmp.eq.f32.partialorder %v611, 8.507059e+37
      %v613 = vand.u32 %v601, 2147483648
      %v614 = vor.u32 1.1754944e-38, %v613
      %v615 = vsel %vm612, %v614, %v610
      %v616 = vmul.f32 1.0, %v615
      %617 = vrot.lane.b32.xlu0 %v595, 64
      %v618 = vpop.permute.xlu0 %617
      %v620 = vmul.f32 %v616, %v618
      %622 = vrot.lane.b32.xlu0 %v620, 64
      %v623 = vpop.permute.xlu0 %622
      %v625 = vadd.f32 %v590, %v623
      %v626 = vtanh.pop %v625
      %v627 = vsub.f32 1.0, %v616
      %629 = vrot.lane.b32.xlu0 %v626, 96
      %v630 = vpop.permute.xlu0 %629
      %v632 = vmul.f32 %v627, %v630
      %v633 = vpack.c.bf16 %v554, %v554
      %v634 = vld [vmem:[%s5] sm:$0xf]
      %v635 = vld [vmem:[%s5 + $0x4] sm:$0xf]
      %v636 = vld [vmem:[%s5 + $0x8] sm:$0xf]
      %v637 = vld [vmem:[%s5 + $0xc] sm:$0xf]
      %v638 = vld [vmem:[%s7] sm:$0x1]
      %v640 = vperm.slane %v638, 0
      %v646 = vunpack.c.l.b16 %v634
      %v647 = vunpack.c.l.b16 %v635
      %v648 = vunpack.c.l.b16 %v636
      %v649 = vunpack.c.l.b16 %v637
      %v650 = vpack.c.b16 %v647, %v646
      %v651 = vpack.c.b16 %v649, %v648
      %v655 = vsel %vm576, %v633, 0
      %657 = vmatpush.bf16.msra.mxu0 0
      %658 = vmatpush.bf16.msra.mxu0 0
      %659 = vmatpush.bf16.msra.mxu0 0
      %660 = vmatpush.bf16.msra.mxu0 0
      %661 = vmatpush.bf16.msra.mxu0 0
      %662 = vmatpush.bf16.msra.mxu0 0
      %663 = vmatpush.bf16.msra.mxu0 %v651
      %664 = vmatpush.bf16.msra.mxu0 %v650
      %665 = vmatmul.bf16.gmra.mxu0 %v655
      %v666 = vpop.f32.mrf.mxu0
      %v667 = vadd.f32 %v640, %v666
      %v668 = vpop.f32.mrf.mxu0
      %669 = vdwg.mxu0
      %v670 = vld [vmem:[%s8] sm:$0x1]
      %v672 = vperm.slane %v670, 0
      %v674 = vadd.f32 %v667, %v672
      %v675 = vxor.u32 %v674, 2147483648
      %v676 = vmul.f32 %v675, 1.442695
      %v677 = vpow.pop %v676
      %v678 = vadd.f32 %v677, 1.0
      %v679 = vrcp.pop %v678
      %v680 = vmul.f32 %v678, %v679
      %v681 = vsub.f32 1.0, %v680
      %v682 = vmul.f32 %v679, %v681
      %v683 = vadd.f32 %v679, %v682
      %vm684 = vweird.f32 %v678
      %vm685 = vweird.f32 %v679
      %vm686 = vmor %vm684, %vm685
      %v687 = vsel %vm686, %v679, %v683
      %v688 = vand.u32 2147483647, %v678
      %vm689 = vcmp.eq.f32.partialorder %v688, 8.507059e+37
      %v690 = vand.u32 %v678, 2147483648
      %v691 = vor.u32 1.1754944e-38, %v690
      %v692 = vsel %vm689, %v691, %v687
      %v693 = vmul.f32 1.0, %v692
      %694 = vrot.lane.b32.xlu0 %v672, 64
      %v695 = vpop.permute.xlu0 %694
      %v697 = vmul.f32 %v693, %v695
      %699 = vrot.lane.b32.xlu0 %v697, 64
      %v700 = vpop.permute.xlu0 %699
      %v702 = vadd.f32 %v667, %v700
      %v703 = vtanh.pop %v702
      %v704 = vsub.f32 1.0, %v693
      %706 = vrot.lane.b32.xlu0 %v703, 96
      %v707 = vpop.permute.xlu0 %706
      %v709 = vmul.f32 %v704, %v707
      %v710 = vpack.c.bf16 %v550, %v550
      %v712 = vsel %vm576, %v710, 0
      %714 = vmatpush.bf16.msra.mxu0 0
      %715 = vmatpush.bf16.msra.mxu0 0
      %716 = vmatpush.bf16.msra.mxu0 0
      %717 = vmatpush.bf16.msra.mxu0 0
      %718 = vmatpush.bf16.msra.mxu0 0
      %719 = vmatpush.bf16.msra.mxu0 0
      %720 = vmatpush.bf16.msra.mxu0 %v573
      %721 = vmatpush.bf16.msra.mxu0 %v572
      %722 = vmatmul.bf16.gmra.mxu0 %v712
      %v723 = vpop.f32.mrf.mxu0
      %v724 = vadd.f32 %v562, %v723
      %v725 = vpop.f32.mrf.mxu0
      %726 = vdwg.mxu0
      %v727 = vpack.c.bf16 %v632, %v632
      %v728 = vld [vmem:[%s2] sm:$0xf]
      %v729 = vld [vmem:[%s2 + $0x4] sm:$0xf]
      %v730 = vld [vmem:[%s2 + $0x8] sm:$0xf]
      %v731 = vld [vmem:[%s2 + $0xc] sm:$0xf]
      %733 = vrot.lane.b32.xlu0 %v727, 96
      %v734 = vpop.permute.xlu0 %733
      %v739 = vunpack.c.l.b16 %v728
      %v740 = vunpack.c.l.b16 %v729
      %v741 = vunpack.c.l.b16 %v730
      %v742 = vunpack.c.l.b16 %v731
      %v743 = vpack.c.b16 %v740, %v739
      %v744 = vpack.c.b16 %v742, %v741
      %v748 = vsel %vm576, %v734, 0
      %750 = vmatpush.bf16.msra.mxu0 0
      %751 = vmatpush.bf16.msra.mxu0 0
      %752 = vmatpush.bf16.msra.mxu0 0
      %753 = vmatpush.bf16.msra.mxu0 0
      %754 = vmatpush.bf16.msra.mxu0 0
      %755 = vmatpush.bf16.msra.mxu0 0
      %756 = vmatpush.bf16.msra.mxu0 %v744
      %757 = vmatpush.bf16.msra.mxu0 %v743
      %758 = vmatmul.bf16.gmra.mxu0 %v748
      %v759 = vpop.f32.mrf.mxu0
      %v760 = vadd.f32 %v595, %v759
      %v761 = vpop.f32.mrf.mxu0
      %762 = vdwg.mxu0
      %v763 = vadd.f32 %v724, %v760
      %v764 = vxor.u32 %v763, 2147483648
      %v765 = vmul.f32 %v764, 1.442695
      %v766 = vpow.pop %v765
      %v767 = vadd.f32 %v766, 1.0
      %v768 = vrcp.pop %v767
      %v769 = vmul.f32 %v767, %v768
      %v770 = vsub.f32 1.0, %v769
      %v771 = vmul.f32 %v768, %v770
      %v772 = vadd.f32 %v768, %v771
      %vm773 = vweird.f32 %v767
      %vm774 = vweird.f32 %v768
      %vm775 = vmor %vm773, %vm774
      %v776 = vsel %vm775, %v768, %v772
      %v777 = vand.u32 2147483647, %v767
      %vm778 = vcmp.eq.f32.partialorder %v777, 8.507059e+37
      %v779 = vand.u32 %v767, 2147483648
      %v780 = vor.u32 1.1754944e-38, %v779
      %v781 = vsel %vm778, %v780, %v776
      %v782 = vmul.f32 1.0, %v781
      %784 = vrot.lane.b32.xlu0 %v760, 64
      %v785 = vpop.permute.xlu0 %784
      %v787 = vmul.f32 %v782, %v785
      %789 = vrot.lane.b32.xlu0 %v787, 64
      %v790 = vpop.permute.xlu0 %789
      %v792 = vadd.f32 %v724, %v790
      %v793 = vtanh.pop %v792
      %v794 = vsub.f32 1.0, %v782
      %796 = vrot.lane.b32.xlu0 %v793, 96
      %v797 = vpop.permute.xlu0 %796
      %v799 = vmul.f32 %v794, %v797
      %v800 = vmul.f32 %v782, %v632
      %v801 = vadd.f32 %v799, %v800
      %v802 = vpack.c.bf16 %v552, %v552
      %v804 = vsel %vm576, %v802, 0
      %806 = vmatpush.bf16.msra.mxu0 0
      %807 = vmatpush.bf16.msra.mxu0 0
      %808 = vmatpush.bf16.msra.mxu0 0
      %809 = vmatpush.bf16.msra.mxu0 0
      %810 = vmatpush.bf16.msra.mxu0 0
      %811 = vmatpush.bf16.msra.mxu0 0
      %812 = vmatpush.bf16.msra.mxu0 %v651
      %813 = vmatpush.bf16.msra.mxu0 %v650
      %814 = vmatmul.bf16.gmra.mxu0 %v804
      %v815 = vpop.f32.mrf.mxu0
      %v816 = vadd.f32 %v640, %v815
      %v817 = vpop.f32.mrf.mxu0
      %818 = vdwg.mxu0
      %v819 = vpack.c.bf16 %v709, %v709
      %v820 = vld [vmem:[%s6] sm:$0xf]
      %v821 = vld [vmem:[%s6 + $0x4] sm:$0xf]
      %v822 = vld [vmem:[%s6 + $0x8] sm:$0xf]
      %v823 = vld [vmem:[%s6 + $0xc] sm:$0xf]
      %825 = vrot.lane.b32.xlu0 %v819, 96
      %v826 = vpop.permute.xlu0 %825
      %v831 = vunpack.c.l.b16 %v820
      %v832 = vunpack.c.l.b16 %v821
      %v833 = vunpack.c.l.b16 %v822
      %v834 = vunpack.c.l.b16 %v823
      %v835 = vpack.c.b16 %v832, %v831
      %v836 = vpack.c.b16 %v834, %v833
      %v840 = vsel %vm576, %v826, 0
      %842 = vmatpush.bf16.msra.mxu0 0
      %843 = vmatpush.bf16.msra.mxu0 0
      %844 = vmatpush.bf16.msra.mxu0 0
      %845 = vmatpush.bf16.msra.mxu0 0
      %846 = vmatpush.bf16.msra.mxu0 0
      %847 = vmatpush.bf16.msra.mxu0 0
      %848 = vmatpush.bf16.msra.mxu0 %v836
      %849 = vmatpush.bf16.msra.mxu0 %v835
      %850 = vmatmul.bf16.gmra.mxu0 %v840
      %v851 = vpop.f32.mrf.mxu0
      %v852 = vadd.f32 %v672, %v851
      %v853 = vpop.f32.mrf.mxu0
      %854 = vdwg.mxu0
      %v855 = vadd.f32 %v816, %v852
      %v856 = vxor.u32 %v855, 2147483648
      %v857 = vmul.f32 %v856, 1.442695
      %v858 = vpow.pop %v857
      %v859 = vadd.f32 %v858, 1.0
      %v860 = vrcp.pop %v859
      %v861 = vmul.f32 %v859, %v860
      %v862 = vsub.f32 1.0, %v861
      %v863 = vmul.f32 %v860, %v862
      %v864 = vadd.f32 %v860, %v863
      %vm865 = vweird.f32 %v859
      %vm866 = vweird.f32 %v860
      %vm867 = vmor %vm865, %vm866
      %v868 = vsel %vm867, %v860, %v864
      %v869 = vand.u32 2147483647, %v859
      %vm870 = vcmp.eq.f32.partialorder %v869, 8.507059e+37
      %v871 = vand.u32 %v859, 2147483648
      %v872 = vor.u32 1.1754944e-38, %v871
      %v873 = vsel %vm870, %v872, %v868
      %v874 = vmul.f32 1.0, %v873
      %876 = vrot.lane.b32.xlu0 %v852, 64
      %v877 = vpop.permute.xlu0 %876
      %v879 = vmul.f32 %v874, %v877
      %881 = vrot.lane.b32.xlu0 %v879, 64
      %v882 = vpop.permute.xlu0 %881
      %v884 = vadd.f32 %v816, %v882
      %v885 = vtanh.pop %v884
      %v886 = vsub.f32 1.0, %v874
      %888 = vrot.lane.b32.xlu0 %v885, 96
      %v889 = vpop.permute.xlu0 %888
      %v891 = vmul.f32 %v886, %v889
      %v892 = vmul.f32 %v874, %v709
      %v893 = vadd.f32 %v891, %v892
      %894 = vmatpush.bf16.msra.mxu0 0
      %895 = vmatpush.bf16.msra.mxu0 0
      %896 = vmatpush.bf16.msra.mxu0 0
      %897 = vmatpush.bf16.msra.mxu0 0
      %898 = vmatpush.bf16.msra.mxu0 0
      %899 = vmatpush.bf16.msra.mxu0 0
      %900 = vmatpush.bf16.msra.mxu0 %v573
      %901 = vmatpush.bf16.msra.mxu0 %v572
      %902 = vmatmul.bf16.gmra.mxu0 %v804
      %v903 = vpop.f32.mrf.mxu0
      %v904 = vadd.f32 %v562, %v903
      %v905 = vpop.f32.mrf.mxu0
      %906 = vdwg.mxu0
      %v907 = vpack.c.bf16 %v801, %v801
      %909 = vrot.lane.b32.xlu0 %v907, 96
      %v910 = vpop.permute.xlu0 %909
      %v912 = vsel %vm576, %v910, 0
      %914 = vmatpush.bf16.msra.mxu0 0
      %915 = vmatpush.bf16.msra.mxu0 0
      %916 = vmatpush.bf16.msra.mxu0 0
      %917 = vmatpush.bf16.msra.mxu0 0
      %918 = vmatpush.bf16.msra.mxu0 0
      %919 = vmatpush.bf16.msra.mxu0 0
      %920 = vmatpush.bf16.msra.mxu0 %v744
      %921 = vmatpush.bf16.msra.mxu0 %v743
      %922 = vmatmul.bf16.gmra.mxu0 %v912
      %v923 = vpop.f32.mrf.mxu0
      %v924 = vadd.f32 %v595, %v923
      %v925 = vpop.f32.mrf.mxu0
      %926 = vdwg.mxu0
      %v927 = vadd.f32 %v904, %v924
      %v928 = vxor.u32 %v927, 2147483648
      %v929 = vmul.f32 %v928, 1.442695
      %v930 = vpow.pop %v929
      %v931 = vadd.f32 %v930, 1.0
      %v932 = vrcp.pop %v931
      %v933 = vmul.f32 %v931, %v932
      %v934 = vsub.f32 1.0, %v933
      %v935 = vmul.f32 %v932, %v934
      %v936 = vadd.f32 %v932, %v935
      %vm937 = vweird.f32 %v931
      %vm938 = vweird.f32 %v932
      %vm939 = vmor %vm937, %vm938
      %v940 = vsel %vm939, %v932, %v936
      %v941 = vand.u32 2147483647, %v931
      %vm942 = vcmp.eq.f32.partialorder %v941, 8.507059e+37
      %v943 = vand.u32 %v931, 2147483648
      %v944 = vor.u32 1.1754944e-38, %v943
      %v945 = vsel %vm942, %v944, %v940
      %v946 = vmul.f32 1.0, %v945
      %948 = vrot.lane.b32.xlu0 %v924, 64
      %v949 = vpop.permute.xlu0 %948
      %v951 = vmul.f32 %v946, %v949
      %953 = vrot.lane.b32.xlu0 %v951, 64
      %v954 = vpop.permute.xlu0 %953
      %v956 = vadd.f32 %v904, %v954
      %v957 = vtanh.pop %v956
      %v958 = vsub.f32 1.0, %v946
      %960 = vrot.lane.b32.xlu0 %v957, 96
      %v961 = vpop.permute.xlu0 %960
      %v963 = vmul.f32 %v958, %v961
      %v964 = vmul.f32 %v946, %v801
      %v965 = vadd.f32 %v963, %v964
      %966 = vmatpush.bf16.msra.mxu0 0
      %967 = vmatpush.bf16.msra.mxu0 0
      %968 = vmatpush.bf16.msra.mxu0 0
      %969 = vmatpush.bf16.msra.mxu0 0
      %970 = vmatpush.bf16.msra.mxu0 0
      %971 = vmatpush.bf16.msra.mxu0 0
      %972 = vmatpush.bf16.msra.mxu0 %v651
      %973 = vmatpush.bf16.msra.mxu0 %v650
      %974 = vmatmul.bf16.gmra.mxu0 %v712
      %v975 = vpop.f32.mrf.mxu0
      %v976 = vadd.f32 %v640, %v975
      %v977 = vpop.f32.mrf.mxu0
      %978 = vdwg.mxu0
      %v979 = vpack.c.bf16 %v893, %v893
      %981 = vrot.lane.b32.xlu0 %v979, 96
      %v982 = vpop.permute.xlu0 %981
      %v984 = vsel %vm576, %v982, 0
      %986 = vmatpush.bf16.msra.mxu0 0
      %987 = vmatpush.bf16.msra.mxu0 0
      %988 = vmatpush.bf16.msra.mxu0 0
      %989 = vmatpush.bf16.msra.mxu0 0
      %990 = vmatpush.bf16.msra.mxu0 0
      %991 = vmatpush.bf16.msra.mxu0 0
      %992 = vmatpush.bf16.msra.mxu0 %v836
      %993 = vmatpush.bf16.msra.mxu0 %v835
      %994 = vmatmul.bf16.gmra.mxu0 %v984
      %v995 = vpop.f32.mrf.mxu0
      %v996 = vadd.f32 %v672, %v995
      %v997 = vpop.f32.mrf.mxu0
      %998 = vdwg.mxu0
      %v999 = vadd.f32 %v976, %v996
      %v1000 = vxor.u32 %v999, 2147483648
      %v1001 = vmul.f32 %v1000, 1.442695
      %v1002 = vpow.pop %v1001
      %v1003 = vadd.f32 %v1002, 1.0
      %v1004 = vrcp.pop %v1003
      %v1005 = vmul.f32 %v1003, %v1004
      %v1006 = vsub.f32 1.0, %v1005
      %v1007 = vmul.f32 %v1004, %v1006
      %v1008 = vadd.f32 %v1004, %v1007
      %vm1009 = vweird.f32 %v1003
      %vm1010 = vweird.f32 %v1004
      %vm1011 = vmor %vm1009, %vm1010
      %v1012 = vsel %vm1011, %v1004, %v1008
      %v1013 = vand.u32 2147483647, %v1003
      %vm1014 = vcmp.eq.f32.partialorder %v1013, 8.507059e+37
      %v1015 = vand.u32 %v1003, 2147483648
      %v1016 = vor.u32 1.1754944e-38, %v1015
      %v1017 = vsel %vm1014, %v1016, %v1012
      %v1018 = vmul.f32 1.0, %v1017
      %1020 = vrot.lane.b32.xlu0 %v996, 64
      %v1021 = vpop.permute.xlu0 %1020
      %v1023 = vmul.f32 %v1018, %v1021
      %1025 = vrot.lane.b32.xlu0 %v1023, 64
      %v1026 = vpop.permute.xlu0 %1025
      %v1028 = vadd.f32 %v976, %v1026
      %v1029 = vtanh.pop %v1028
      %v1030 = vsub.f32 1.0, %v1018
      %1032 = vrot.lane.b32.xlu0 %v1029, 96
      %v1033 = vpop.permute.xlu0 %1032
      %v1035 = vmul.f32 %v1030, %v1033
      %v1036 = vmul.f32 %v1018, %v893
      %v1037 = vadd.f32 %v1035, %v1036
      %1038 = vmatpush.bf16.msra.mxu0 0
      %1039 = vmatpush.bf16.msra.mxu0 0
      %1040 = vmatpush.bf16.msra.mxu0 0
      %1041 = vmatpush.bf16.msra.mxu0 0
      %1042 = vmatpush.bf16.msra.mxu0 0
      %1043 = vmatpush.bf16.msra.mxu0 0
      %1044 = vmatpush.bf16.msra.mxu0 %v573
      %1045 = vmatpush.bf16.msra.mxu0 %v572
      %1046 = vmatmul.bf16.gmra.mxu0 %v655
      %v1047 = vpop.f32.mrf.mxu0
      %v1048 = vadd.f32 %v562, %v1047
      %v1049 = vpop.f32.mrf.mxu0
      %1050 = vdwg.mxu0
      %v1051 = vpack.c.bf16 %v965, %v965
      %1053 = vrot.lane.b32.xlu0 %v1051, 96
      %v1054 = vpop.permute.xlu0 %1053
      %v1056 = vsel %vm576, %v1054, 0
      %1058 = vmatpush.bf16.msra.mxu0 0
      %1059 = vmatpush.bf16.msra.mxu0 0
      %1060 = vmatpush.bf16.msra.mxu0 0
      %1061 = vmatpush.bf16.msra.mxu0 0
      %1062 = vmatpush.bf16.msra.mxu0 0
      %1063 = vmatpush.bf16.msra.mxu0 0
      %1064 = vmatpush.bf16.msra.mxu0 %v744
      %1065 = vmatpush.bf16.msra.mxu0 %v743
      %1066 = vmatmul.bf16.gmra.mxu0 %v1056
      %v1067 = vpop.f32.mrf.mxu0
      %v1068 = vadd.f32 %v595, %v1067
      %v1069 = vpop.f32.mrf.mxu0
      %1070 = vdwg.mxu0
      %v1071 = vadd.f32 %v1048, %v1068
      %v1072 = vxor.u32 %v1071, 2147483648
      %v1073 = vmul.f32 %v1072, 1.442695
      %v1074 = vpow.pop %v1073
      %v1075 = vadd.f32 %v1074, 1.0
      %v1076 = vrcp.pop %v1075
      %v1077 = vmul.f32 %v1075, %v1076
      %v1078 = vsub.f32 1.0, %v1077
      %v1079 = vmul.f32 %v1076, %v1078
      %v1080 = vadd.f32 %v1076, %v1079
      %vm1081 = vweird.f32 %v1075
      %vm1082 = vweird.f32 %v1076
      %vm1083 = vmor %vm1081, %vm1082
      %v1084 = vsel %vm1083, %v1076, %v1080
      %v1085 = vand.u32 2147483647, %v1075
      %vm1086 = vcmp.eq.f32.partialorder %v1085, 8.507059e+37
      %v1087 = vand.u32 %v1075, 2147483648
      %v1088 = vor.u32 1.1754944e-38, %v1087
      %v1089 = vsel %vm1086, %v1088, %v1084
      %v1090 = vmul.f32 1.0, %v1089
      %1092 = vrot.lane.b32.xlu0 %v1068, 64
      %v1093 = vpop.permute.xlu0 %1092
      %v1095 = vmul.f32 %v1090, %v1093
      %1097 = vrot.lane.b32.xlu0 %v1095, 64
      %v1098 = vpop.permute.xlu0 %1097
      %v1100 = vadd.f32 %v1048, %v1098
      %v1101 = vtanh.pop %v1100
      %v1102 = vsub.f32 1.0, %v1090
      %1104 = vrot.lane.b32.xlu0 %v1101, 96
      %v1105 = vpop.permute.xlu0 %1104
      %v1107 = vmul.f32 %v1102, %v1105
      %v1108 = vmul.f32 %v1090, %v965
      %v1109 = vadd.f32 %v1107, %v1108
      %1110 = vmatpush.bf16.msra.mxu0 0
      %1111 = vmatpush.bf16.msra.mxu0 0
      %1112 = vmatpush.bf16.msra.mxu0 0
      %1113 = vmatpush.bf16.msra.mxu0 0
      %1114 = vmatpush.bf16.msra.mxu0 0
      %1115 = vmatpush.bf16.msra.mxu0 0
      %1116 = vmatpush.bf16.msra.mxu0 %v651
      %1117 = vmatpush.bf16.msra.mxu0 %v650
      %1118 = vmatmul.bf16.gmra.mxu0 %v578
      %v1119 = vpop.f32.mrf.mxu0
      %v1120 = vadd.f32 %v640, %v1119
      %v1121 = vpop.f32.mrf.mxu0
      %1122 = vdwg.mxu0
      %v1123 = vpack.c.bf16 %v1037, %v1037
      %1125 = vrot.lane.b32.xlu0 %v1123, 96
      %v1126 = vpop.permute.xlu0 %1125
      %v1128 = vsel %vm576, %v1126, 0
      %1130 = vmatpush.bf16.msra.mxu0 0
      %1131 = vmatpush.bf16.msra.mxu0 0
      %1132 = vmatpush.bf16.msra.mxu0 0
      %1133 = vmatpush.bf16.msra.mxu0 0
      %1134 = vmatpush.bf16.msra.mxu0 0
      %1135 = vmatpush.bf16.msra.mxu0 0
      %1136 = vmatpush.bf16.msra.mxu0 %v836
      %1137 = vmatpush.bf16.msra.mxu0 %v835
      %1138 = vmatmul.bf16.gmra.mxu0 %v1128
      %v1139 = vpop.f32.mrf.mxu0
      %v1140 = vadd.f32 %v672, %v1139
      %v1141 = vpop.f32.mrf.mxu0
      %1142 = vdwg.mxu0
      %v1143 = vadd.f32 %v1120, %v1140
      %v1144 = vxor.u32 %v1143, 2147483648
      %v1145 = vmul.f32 %v1144, 1.442695
      %v1146 = vpow.pop %v1145
      %v1147 = vadd.f32 %v1146, 1.0
      %v1148 = vrcp.pop %v1147
      %v1149 = vmul.f32 %v1147, %v1148
      %v1150 = vsub.f32 1.0, %v1149
      %v1151 = vmul.f32 %v1148, %v1150
      %v1152 = vadd.f32 %v1148, %v1151
      %vm1153 = vweird.f32 %v1147
      %vm1154 = vweird.f32 %v1148
      %vm1155 = vmor %vm1153, %vm1154
      %v1156 = vsel %vm1155, %v1148, %v1152
      %v1157 = vand.u32 2147483647, %v1147
      %vm1158 = vcmp.eq.f32.partialorder %v1157, 8.507059e+37
      %v1159 = vand.u32 %v1147, 2147483648
      %v1160 = vor.u32 1.1754944e-38, %v1159
      %v1161 = vsel %vm1158, %v1160, %v1156
      %v1162 = vmul.f32 1.0, %v1161
      %1164 = vrot.lane.b32.xlu0 %v1140, 64
      %v1165 = vpop.permute.xlu0 %1164
      %v1167 = vmul.f32 %v1162, %v1165
      %1169 = vrot.lane.b32.xlu0 %v1167, 64
      %v1170 = vpop.permute.xlu0 %1169
      %v1172 = vadd.f32 %v1120, %v1170
      %v1173 = vtanh.pop %v1172
      %v1174 = vsub.f32 1.0, %v1162
      %1176 = vrot.lane.b32.xlu0 %v1173, 96
      %v1177 = vpop.permute.xlu0 %1176
      %v1179 = vmul.f32 %v1174, %v1177
      %v1180 = vmul.f32 %v1162, %v1037
      %v1181 = vadd.f32 %v1179, %v1180
      %1183 = vrot.lane.b32.xlu0 %v632, 96
      %v1184 = vpop.permute.xlu0 %1183
      %v1186 = vsel %vm576, %v1184, %v1181
      %v1187 = vpack.c.bf16 %v1186, %v1186
      %v1188 = vld [vmem:[%s9] sm:$0xf]
      %v1189 = vld [vmem:[%s9 + $0x4] sm:$0xf]
      %v1190 = vld [vmem:[%s9 + $0x8] sm:$0xf]
      %v1191 = vld [vmem:[%s9 + $0xc] sm:$0xf]
      %v1192 = vld [vmem:[%s9 + $0x10] sm:$0xf]
      %v1193 = vld [vmem:[%s9 + $0x14] sm:$0xf]
      %v1194 = vld [vmem:[%s9 + $0x18] sm:$0xf]
      %v1195 = vld [vmem:[%s9 + $0x1c] sm:$0xf]
      %v1196 = vld [vmem:[%s11] sm:$0x1]
      %v1198 = vperm.slane %v1196, 0
      %v1208 = vunpack.c.l.b16 %v1188
      %v1209 = vunpack.c.l.b16 %v1189
      %v1210 = vunpack.c.l.b16 %v1190
      %v1211 = vunpack.c.l.b16 %v1191
      %v1212 = vunpack.c.l.b16 %v1192
      %v1213 = vunpack.c.l.b16 %v1193
      %v1214 = vunpack.c.l.b16 %v1194
      %v1215 = vunpack.c.l.b16 %v1195
      %v1216 = vpack.c.b16 %v1209, %v1208
      %v1217 = vpack.c.b16 %v1211, %v1210
      %v1218 = vpack.c.b16 %v1213, %v1212
      %v1219 = vpack.c.b16 %v1215, %v1214
      %vm1224 = vcmask 523264
      %v1226 = vsel %vm1224, %v1187, 0
      %1228 = vmatpush.bf16.msra.mxu0 0
      %1229 = vmatpush.bf16.msra.mxu0 0
      %1230 = vmatpush.bf16.msra.mxu0 0
      %1231 = vmatpush.bf16.msra.mxu0 0
      %1232 = vmatpush.bf16.msra.mxu0 %v1219
      %1233 = vmatpush.bf16.msra.mxu0 %v1218
      %1234 = vmatpush.bf16.msra.mxu0 %v1217
      %1235 = vmatpush.bf16.msra.mxu0 %v1216
      %1236 = vmatmul.bf16.gmra.mxu0 %v1226
      %v1237 = vpop.f32.mrf.mxu0
      %v1238 = vadd.f32 %v1198, %v1237
      %v1239 = vpop.f32.mrf.mxu0
      %1240 = vdwg.mxu0
      %v1241 = vld [vmem:[%s12] sm:$0x1]
      %v1243 = vperm.slane %v1241, 0
      %v1245 = vadd.f32 %v1238, %v1243
      %v1246 = vxor.u32 %v1245, 2147483648
      %v1247 = vmul.f32 %v1246, 1.442695
      %v1248 = vpow.pop %v1247
      %v1249 = vadd.f32 %v1248, 1.0
      %v1250 = vrcp.pop %v1249
      %v1251 = vmul.f32 %v1249, %v1250
      %v1252 = vsub.f32 1.0, %v1251
      %v1253 = vmul.f32 %v1250, %v1252
      %v1254 = vadd.f32 %v1250, %v1253
      %vm1255 = vweird.f32 %v1249
      %vm1256 = vweird.f32 %v1250
      %vm1257 = vmor %vm1255, %vm1256
      %v1258 = vsel %vm1257, %v1250, %v1254
      %v1259 = vand.u32 2147483647, %v1249
      %vm1260 = vcmp.eq.f32.partialorder %v1259, 8.507059e+37
      %v1261 = vand.u32 %v1249, 2147483648
      %v1262 = vor.u32 1.1754944e-38, %v1261
      %v1263 = vsel %vm1260, %v1262, %v1258
      %v1264 = vmul.f32 1.0, %v1263
      %1265 = vrot.lane.b32.xlu0 %v1243, 64
      %v1266 = vpop.permute.xlu0 %1265
      %v1268 = vmul.f32 %v1264, %v1266
      %1270 = vrot.lane.b32.xlu0 %v1268, 64
      %v1271 = vpop.permute.xlu0 %1270
      %v1273 = vadd.f32 %v1238, %v1271
      %v1274 = vtanh.pop %v1273
      %v1275 = vsub.f32 1.0, %v1264
      %1277 = vrot.lane.b32.xlu0 %v1274, 96
      %v1278 = vpop.permute.xlu0 %1277
      %v1280 = vmul.f32 %v1275, %v1278
      %1282 = vrot.lane.b32.xlu0 %v1109, 96
      %v1283 = vpop.permute.xlu0 %1282
      %v1285 = vsel %vm576, %v1283, %v709
      %v1286 = vpack.c.bf16 %v1285, %v1285
      %v1287 = vld [vmem:[%s13] sm:$0xf]
      %v1288 = vld [vmem:[%s13 + $0x4] sm:$0xf]
      %v1289 = vld [vmem:[%s13 + $0x8] sm:$0xf]
      %v1290 = vld [vmem:[%s13 + $0xc] sm:$0xf]
      %v1291 = vld [vmem:[%s13 + $0x10] sm:$0xf]
      %v1292 = vld [vmem:[%s13 + $0x14] sm:$0xf]
      %v1293 = vld [vmem:[%s13 + $0x18] sm:$0xf]
      %v1294 = vld [vmem:[%s13 + $0x1c] sm:$0xf]
      %v1295 = vld [vmem:[%s15] sm:$0x1]
      %v1297 = vperm.slane %v1295, 0
      %v1307 = vunpack.c.l.b16 %v1287
      %v1308 = vunpack.c.l.b16 %v1288
      %v1309 = vunpack.c.l.b16 %v1289
      %v1310 = vunpack.c.l.b16 %v1290
      %v1311 = vunpack.c.l.b16 %v1291
      %v1312 = vunpack.c.l.b16 %v1292
      %v1313 = vunpack.c.l.b16 %v1293
      %v1314 = vunpack.c.l.b16 %v1294
      %v1315 = vpack.c.b16 %v1308, %v1307
      %v1316 = vpack.c.b16 %v1310, %v1309
      %v1317 = vpack.c.b16 %v1312, %v1311
      %v1318 = vpack.c.b16 %v1314, %v1313
      %v1324 = vsel %vm1224, %v1286, 0
      %1326 = vmatpush.bf16.msra.mxu0 0
      %1327 = vmatpush.bf16.msra.mxu0 0
      %1328 = vmatpush.bf16.msra.mxu0 0
      %1329 = vmatpush.bf16.msra.mxu0 0
      %1330 = vmatpush.bf16.msra.mxu0 %v1318
      %1331 = vmatpush.bf16.msra.mxu0 %v1317
      %1332 = vmatpush.bf16.msra.mxu0 %v1316
      %1333 = vmatpush.bf16.msra.mxu0 %v1315
      %1334 = vmatmul.bf16.gmra.mxu0 %v1324
      %v1335 = vpop.f32.mrf.mxu0
      %v1336 = vadd.f32 %v1297, %v1335
      %v1337 = vpop.f32.mrf.mxu0
      %1338 = vdwg.mxu0
      %v1339 = vld [vmem:[%s16] sm:$0x1]
      %v1341 = vperm.slane %v1339, 0
      %v1343 = vadd.f32 %v1336, %v1341
      %v1344 = vxor.u32 %v1343, 2147483648
      %v1345 = vmul.f32 %v1344, 1.442695
      %v1346 = vpow.pop %v1345
      %v1347 = vadd.f32 %v1346, 1.0
      %v1348 = vrcp.pop %v1347
      %v1349 = vmul.f32 %v1347, %v1348
      %v1350 = vsub.f32 1.0, %v1349
      %v1351 = vmul.f32 %v1348, %v1350
      %v1352 = vadd.f32 %v1348, %v1351
      %vm1353 = vweird.f32 %v1347
      %vm1354 = vweird.f32 %v1348
      %vm1355 = vmor %vm1353, %vm1354
      %v1356 = vsel %vm1355, %v1348, %v1352
      %v1357 = vand.u32 2147483647, %v1347
      %vm1358 = vcmp.eq.f32.partialorder %v1357, 8.507059e+37
      %v1359 = vand.u32 %v1347, 2147483648
      %v1360 = vor.u32 1.1754944e-38, %v1359
      %v1361 = vsel %vm1358, %v1360, %v1356
      %v1362 = vmul.f32 1.0, %v1361
      %1363 = vrot.lane.b32.xlu0 %v1341, 64
      %v1364 = vpop.permute.xlu0 %1363
      %v1366 = vmul.f32 %v1362, %v1364
      %1368 = vrot.lane.b32.xlu0 %v1366, 64
      %v1369 = vpop.permute.xlu0 %1368
      %v1371 = vadd.f32 %v1336, %v1369
      %v1372 = vtanh.pop %v1371
      %v1373 = vsub.f32 1.0, %v1362
      %1375 = vrot.lane.b32.xlu0 %v1372, 96
      %v1376 = vpop.permute.xlu0 %1375
      %v1378 = vmul.f32 %v1373, %v1376
      %1380 = vrot.lane.b32.xlu0 %v801, 96
      %v1381 = vpop.permute.xlu0 %1380
      %v1383 = vsel %vm576, %v1381, %v1037
      %v1384 = vpack.c.bf16 %v1383, %v1383
      %v1386 = vsel %vm1224, %v1384, 0
      %1388 = vmatpush.bf16.msra.mxu0 0
      %1389 = vmatpush.bf16.msra.mxu0 0
      %1390 = vmatpush.bf16.msra.mxu0 0
      %1391 = vmatpush.bf16.msra.mxu0 0
      %1392 = vmatpush.bf16.msra.mxu0 %v1219
      %1393 = vmatpush.bf16.msra.mxu0 %v1218
      %1394 = vmatpush.bf16.msra.mxu0 %v1217
      %1395 = vmatpush.bf16.msra.mxu0 %v1216
      %1396 = vmatmul.bf16.gmra.mxu0 %v1386
      %v1397 = vpop.f32.mrf.mxu0
      %v1398 = vadd.f32 %v1198, %v1397
      %v1399 = vpop.f32.mrf.mxu0
      %1400 = vdwg.mxu0
      %v1401 = vpack.c.bf16 %v1280, %v1280
      %v1402 = vld [vmem:[%s10] sm:$0xf]
      %v1403 = vld [vmem:[%s10 + $0x4] sm:$0xf]
      %v1404 = vld [vmem:[%s10 + $0x8] sm:$0xf]
      %v1405 = vld [vmem:[%s10 + $0xc] sm:$0xf]
      %1407 = vrot.lane.b32.xlu0 %v1401, 96
      %v1408 = vpop.permute.xlu0 %1407
      %v1413 = vunpack.c.l.b16 %v1402
      %v1414 = vunpack.c.l.b16 %v1403
      %v1415 = vunpack.c.l.b16 %v1404
      %v1416 = vunpack.c.l.b16 %v1405
      %v1417 = vpack.c.b16 %v1414, %v1413
      %v1418 = vpack.c.b16 %v1416, %v1415
      %v1422 = vsel %vm576, %v1408, 0
      %1424 = vmatpush.bf16.msra.mxu0 0
      %1425 = vmatpush.bf16.msra.mxu0 0
      %1426 = vmatpush.bf16.msra.mxu0 0
      %1427 = vmatpush.bf16.msra.mxu0 0
      %1428 = vmatpush.bf16.msra.mxu0 0
      %1429 = vmatpush.bf16.msra.mxu0 0
      %1430 = vmatpush.bf16.msra.mxu0 %v1418
      %1431 = vmatpush.bf16.msra.mxu0 %v1417
      %1432 = vmatmul.bf16.gmra.mxu0 %v1422
      %v1433 = vpop.f32.mrf.mxu0
      %v1434 = vadd.f32 %v1243, %v1433
      %v1435 = vpop.f32.mrf.mxu0
      %1436 = vdwg.mxu0
      %v1437 = vadd.f32 %v1398, %v1434
      %v1438 = vxor.u32 %v1437, 2147483648
      %v1439 = vmul.f32 %v1438, 1.442695
      %v1440 = vpow.pop %v1439
      %v1441 = vadd.f32 %v1440, 1.0
      %v1442 = vrcp.pop %v1441
      %v1443 = vmul.f32 %v1441, %v1442
      %v1444 = vsub.f32 1.0, %v1443
      %v1445 = vmul.f32 %v1442, %v1444
      %v1446 = vadd.f32 %v1442, %v1445
      %vm1447 = vweird.f32 %v1441
      %vm1448 = vweird.f32 %v1442
      %vm1449 = vmor %vm1447, %vm1448
      %v1450 = vsel %vm1449, %v1442, %v1446
      %v1451 = vand.u32 2147483647, %v1441
      %vm1452 = vcmp.eq.f32.partialorder %v1451, 8.507059e+37
      %v1453 = vand.u32 %v1441, 2147483648
      %v1454 = vor.u32 1.1754944e-38, %v1453
      %v1455 = vsel %vm1452, %v1454, %v1450
      %v1456 = vmul.f32 1.0, %v1455
      %1458 = vrot.lane.b32.xlu0 %v1434, 64
      %v1459 = vpop.permute.xlu0 %1458
      %v1461 = vmul.f32 %v1456, %v1459
      %1463 = vrot.lane.b32.xlu0 %v1461, 64
      %v1464 = vpop.permute.xlu0 %1463
      %v1466 = vadd.f32 %v1398, %v1464
      %v1467 = vtanh.pop %v1466
      %v1468 = vsub.f32 1.0, %v1456
      %1470 = vrot.lane.b32.xlu0 %v1467, 96
      %v1471 = vpop.permute.xlu0 %1470
      %v1473 = vmul.f32 %v1468, %v1471
      %v1474 = vmul.f32 %v1456, %v1280
      %v1475 = vadd.f32 %v1473, %v1474
      %1477 = vrot.lane.b32.xlu0 %v965, 96
      %v1478 = vpop.permute.xlu0 %1477
      %v1480 = vsel %vm576, %v1478, %v893
      %v1481 = vpack.c.bf16 %v1480, %v1480
      %v1483 = vsel %vm1224, %v1481, 0
      %1485 = vmatpush.bf16.msra.mxu0 0
      %1486 = vmatpush.bf16.msra.mxu0 0
      %1487 = vmatpush.bf16.msra.mxu0 0
      %1488 = vmatpush.bf16.msra.mxu0 0
      %1489 = vmatpush.bf16.msra.mxu0 %v1318
      %1490 = vmatpush.bf16.msra.mxu0 %v1317
      %1491 = vmatpush.bf16.msra.mxu0 %v1316
      %1492 = vmatpush.bf16.msra.mxu0 %v1315
      %1493 = vmatmul.bf16.gmra.mxu0 %v1483
      %v1494 = vpop.f32.mrf.mxu0
      %v1495 = vadd.f32 %v1297, %v1494
      %v1496 = vpop.f32.mrf.mxu0
      %1497 = vdwg.mxu0
      %v1498 = vpack.c.bf16 %v1378, %v1378
      %v1499 = vld [vmem:[%s14] sm:$0xf]
      %v1500 = vld [vmem:[%s14 + $0x4] sm:$0xf]
      %v1501 = vld [vmem:[%s14 + $0x8] sm:$0xf]
      %v1502 = vld [vmem:[%s14 + $0xc] sm:$0xf]
      %1504 = vrot.lane.b32.xlu0 %v1498, 96
      %v1505 = vpop.permute.xlu0 %1504
      %v1510 = vunpack.c.l.b16 %v1499
      %v1511 = vunpack.c.l.b16 %v1500
      %v1512 = vunpack.c.l.b16 %v1501
      %v1513 = vunpack.c.l.b16 %v1502
      %v1514 = vpack.c.b16 %v1511, %v1510
      %v1515 = vpack.c.b16 %v1513, %v1512
      %v1519 = vsel %vm576, %v1505, 0
      %1521 = vmatpush.bf16.msra.mxu0 0
      %1522 = vmatpush.bf16.msra.mxu0 0
      %1523 = vmatpush.bf16.msra.mxu0 0
      %1524 = vmatpush.bf16.msra.mxu0 0
      %1525 = vmatpush.bf16.msra.mxu0 0
      %1526 = vmatpush.bf16.msra.mxu0 0
      %1527 = vmatpush.bf16.msra.mxu0 %v1515
      %1528 = vmatpush.bf16.msra.mxu0 %v1514
      %1529 = vmatmul.bf16.gmra.mxu0 %v1519
      %v1530 = vpop.f32.mrf.mxu0
      %v1531 = vadd.f32 %v1341, %v1530
      %v1532 = vpop.f32.mrf.mxu0
      %1533 = vdwg.mxu0
      %v1534 = vadd.f32 %v1495, %v1531
      %v1535 = vxor.u32 %v1534, 2147483648
      %v1536 = vmul.f32 %v1535, 1.442695
      %v1537 = vpow.pop %v1536
      %v1538 = vadd.f32 %v1537, 1.0
      %v1539 = vrcp.pop %v1538
      %v1540 = vmul.f32 %v1538, %v1539
      %v1541 = vsub.f32 1.0, %v1540
      %v1542 = vmul.f32 %v1539, %v1541
      %v1543 = vadd.f32 %v1539, %v1542
      %vm1544 = vweird.f32 %v1538
      %vm1545 = vweird.f32 %v1539
      %vm1546 = vmor %vm1544, %vm1545
      %v1547 = vsel %vm1546, %v1539, %v1543
      %v1548 = vand.u32 2147483647, %v1538
      %vm1549 = vcmp.eq.f32.partialorder %v1548, 8.507059e+37
      %v1550 = vand.u32 %v1538, 2147483648
      %v1551 = vor.u32 1.1754944e-38, %v1550
      %v1552 = vsel %vm1549, %v1551, %v1547
      %v1553 = vmul.f32 1.0, %v1552
      %1555 = vrot.lane.b32.xlu0 %v1531, 64
      %v1556 = vpop.permute.xlu0 %1555
      %v1558 = vmul.f32 %v1553, %v1556
      %1560 = vrot.lane.b32.xlu0 %v1558, 64
      %v1561 = vpop.permute.xlu0 %1560
      %v1563 = vadd.f32 %v1495, %v1561
      %v1564 = vtanh.pop %v1563
      %v1565 = vsub.f32 1.0, %v1553
      %1567 = vrot.lane.b32.xlu0 %v1564, 96
      %v1568 = vpop.permute.xlu0 %1567
      %v1570 = vmul.f32 %v1565, %v1568
      %v1571 = vmul.f32 %v1553, %v1378
      %v1572 = vadd.f32 %v1570, %v1571
      %1573 = vmatpush.bf16.msra.mxu0 0
      %1574 = vmatpush.bf16.msra.mxu0 0
      %1575 = vmatpush.bf16.msra.mxu0 0
      %1576 = vmatpush.bf16.msra.mxu0 0
      %1577 = vmatpush.bf16.msra.mxu0 %v1219
      %1578 = vmatpush.bf16.msra.mxu0 %v1218
      %1579 = vmatpush.bf16.msra.mxu0 %v1217
      %1580 = vmatpush.bf16.msra.mxu0 %v1216
      %1581 = vmatmul.bf16.gmra.mxu0 %v1483
      %v1582 = vpop.f32.mrf.mxu0
      %v1583 = vadd.f32 %v1198, %v1582
      %v1584 = vpop.f32.mrf.mxu0
      %1585 = vdwg.mxu0
      %v1586 = vpack.c.bf16 %v1475, %v1475
      %1588 = vrot.lane.b32.xlu0 %v1586, 96
      %v1589 = vpop.permute.xlu0 %1588
      %v1591 = vsel %vm576, %v1589, 0
      %1593 = vmatpush.bf16.msra.mxu0 0
      %1594 = vmatpush.bf16.msra.mxu0 0
      %1595 = vmatpush.bf16.msra.mxu0 0
      %1596 = vmatpush.bf16.msra.mxu0 0
      %1597 = vmatpush.bf16.msra.mxu0 0
      %1598 = vmatpush.bf16.msra.mxu0 0
      %1599 = vmatpush.bf16.msra.mxu0 %v1418
      %1600 = vmatpush.bf16.msra.mxu0 %v1417
      %1601 = vmatmul.bf16.gmra.mxu0 %v1591
      %v1602 = vpop.f32.mrf.mxu0
      %v1603 = vadd.f32 %v1243, %v1602
      %v1604 = vpop.f32.mrf.mxu0
      %1605 = vdwg.mxu0
      %v1606 = vadd.f32 %v1583, %v1603
      %v1607 = vxor.u32 %v1606, 2147483648
      %v1608 = vmul.f32 %v1607, 1.442695
      %v1609 = vpow.pop %v1608
      %v1610 = vadd.f32 %v1609, 1.0
      %v1611 = vrcp.pop %v1610
      %v1612 = vmul.f32 %v1610, %v1611
      %v1613 = vsub.f32 1.0, %v1612
      %v1614 = vmul.f32 %v1611, %v1613
      %v1615 = vadd.f32 %v1611, %v1614
      %vm1616 = vweird.f32 %v1610
      %vm1617 = vweird.f32 %v1611
      %vm1618 = vmor %vm1616, %vm1617
      %v1619 = vsel %vm1618, %v1611, %v1615
      %v1620 = vand.u32 2147483647, %v1610
      %vm1621 = vcmp.eq.f32.partialorder %v1620, 8.507059e+37
      %v1622 = vand.u32 %v1610, 2147483648
      %v1623 = vor.u32 1.1754944e-38, %v1622
      %v1624 = vsel %vm1621, %v1623, %v1619
      %v1625 = vmul.f32 1.0, %v1624
      %1627 = vrot.lane.b32.xlu0 %v1603, 64
      %v1628 = vpop.permute.xlu0 %1627
      %v1630 = vmul.f32 %v1625, %v1628
      %1632 = vrot.lane.b32.xlu0 %v1630, 64
      %v1633 = vpop.permute.xlu0 %1632
      %v1635 = vadd.f32 %v1583, %v1633
      %v1636 = vtanh.pop %v1635
      %v1637 = vsub.f32 1.0, %v1625
      %1639 = vrot.lane.b32.xlu0 %v1636, 96
      %v1640 = vpop.permute.xlu0 %1639
      %v1642 = vmul.f32 %v1637, %v1640
      %v1643 = vmul.f32 %v1625, %v1475
      %v1644 = vadd.f32 %v1642, %v1643
      %1645 = vmatpush.bf16.msra.mxu0 0
      %1646 = vmatpush.bf16.msra.mxu0 0
      %1647 = vmatpush.bf16.msra.mxu0 0
      %1648 = vmatpush.bf16.msra.mxu0 0
      %1649 = vmatpush.bf16.msra.mxu0 %v1318
      %1650 = vmatpush.bf16.msra.mxu0 %v1317
      %1651 = vmatpush.bf16.msra.mxu0 %v1316
      %1652 = vmatpush.bf16.msra.mxu0 %v1315
      %1653 = vmatmul.bf16.gmra.mxu0 %v1386
      %v1654 = vpop.f32.mrf.mxu0
      %v1655 = vadd.f32 %v1297, %v1654
      %v1656 = vpop.f32.mrf.mxu0
      %1657 = vdwg.mxu0
      %v1658 = vpack.c.bf16 %v1572, %v1572
      %1660 = vrot.lane.b32.xlu0 %v1658, 96
      %v1661 = vpop.permute.xlu0 %1660
      %v1663 = vsel %vm576, %v1661, 0
      %1665 = vmatpush.bf16.msra.mxu0 0
      %1666 = vmatpush.bf16.msra.mxu0 0
      %1667 = vmatpush.bf16.msra.mxu0 0
      %1668 = vmatpush.bf16.msra.mxu0 0
      %1669 = vmatpush.bf16.msra.mxu0 0
      %1670 = vmatpush.bf16.msra.mxu0 0
      %1671 = vmatpush.bf16.msra.mxu0 %v1515
      %1672 = vmatpush.bf16.msra.mxu0 %v1514
      %1673 = vmatmul.bf16.gmra.mxu0 %v1663
      %v1674 = vpop.f32.mrf.mxu0
      %v1675 = vadd.f32 %v1341, %v1674
      %v1676 = vpop.f32.mrf.mxu0
      %1677 = vdwg.mxu0
      %v1678 = vadd.f32 %v1655, %v1675
      %v1679 = vxor.u32 %v1678, 2147483648
      %v1680 = vmul.f32 %v1679, 1.442695
      %v1681 = vpow.pop %v1680
      %v1682 = vadd.f32 %v1681, 1.0
      %v1683 = vrcp.pop %v1682
      %v1684 = vmul.f32 %v1682, %v1683
      %v1685 = vsub.f32 1.0, %v1684
      %v1686 = vmul.f32 %v1683, %v1685
      %v1687 = vadd.f32 %v1683, %v1686
      %vm1688 = vweird.f32 %v1682
      %vm1689 = vweird.f32 %v1683
      %vm1690 = vmor %vm1688, %vm1689
      %v1691 = vsel %vm1690, %v1683, %v1687
      %v1692 = vand.u32 2147483647, %v1682
      %vm1693 = vcmp.eq.f32.partialorder %v1692, 8.507059e+37
      %v1694 = vand.u32 %v1682, 2147483648
      %v1695 = vor.u32 1.1754944e-38, %v1694
      %v1696 = vsel %vm1693, %v1695, %v1691
      %v1697 = vmul.f32 1.0, %v1696
      %1699 = vrot.lane.b32.xlu0 %v1675, 64
      %v1700 = vpop.permute.xlu0 %1699
      %v1702 = vmul.f32 %v1697, %v1700
      %1704 = vrot.lane.b32.xlu0 %v1702, 64
      %v1705 = vpop.permute.xlu0 %1704
      %v1707 = vadd.f32 %v1655, %v1705
      %v1708 = vtanh.pop %v1707
      %v1709 = vsub.f32 1.0, %v1697
      %1711 = vrot.lane.b32.xlu0 %v1708, 96
      %v1712 = vpop.permute.xlu0 %1711
      %v1714 = vmul.f32 %v1709, %v1712
      %v1715 = vmul.f32 %v1697, %v1572
      %v1716 = vadd.f32 %v1714, %v1715
      %1717 = vmatpush.bf16.msra.mxu0 0
      %1718 = vmatpush.bf16.msra.mxu0 0
      %1719 = vmatpush.bf16.msra.mxu0 0
      %1720 = vmatpush.bf16.msra.mxu0 0
      %1721 = vmatpush.bf16.msra.mxu0 %v1219
      %1722 = vmatpush.bf16.msra.mxu0 %v1218
      %1723 = vmatpush.bf16.msra.mxu0 %v1217
      %1724 = vmatpush.bf16.msra.mxu0 %v1216
      %1725 = vmatmul.bf16.gmra.mxu0 %v1324
      %v1726 = vpop.f32.mrf.mxu0
      %v1727 = vadd.f32 %v1198, %v1726
      %v1728 = vpop.f32.mrf.mxu0
      %1729 = vdwg.mxu0
      %v1730 = vpack.c.bf16 %v1644, %v1644
      %1732 = vrot.lane.b32.xlu0 %v1730, 96
      %v1733 = vpop.permute.xlu0 %1732
      %v1735 = vsel %vm576, %v1733, 0
      %1737 = vmatpush.bf16.msra.mxu0 0
      %1738 = vmatpush.bf16.msra.mxu0 0
      %1739 = vmatpush.bf16.msra.mxu0 0
      %1740 = vmatpush.bf16.msra.mxu0 0
      %1741 = vmatpush.bf16.msra.mxu0 0
      %1742 = vmatpush.bf16.msra.mxu0 0
      %1743 = vmatpush.bf16.msra.mxu0 %v1418
      %1744 = vmatpush.bf16.msra.mxu0 %v1417
      %1745 = vmatmul.bf16.gmra.mxu0 %v1735
      %v1746 = vpop.f32.mrf.mxu0
      %v1747 = vadd.f32 %v1243, %v1746
      %v1748 = vpop.f32.mrf.mxu0
      %1749 = vdwg.mxu0
      %v1750 = vadd.f32 %v1727, %v1747
      %v1751 = vxor.u32 %v1750, 2147483648
      %v1752 = vmul.f32 %v1751, 1.442695
      %v1753 = vpow.pop %v1752
      %v1754 = vadd.f32 %v1753, 1.0
      %v1755 = vrcp.pop %v1754
      %v1756 = vmul.f32 %v1754, %v1755
      %v1757 = vsub.f32 1.0, %v1756
      %v1758 = vmul.f32 %v1755, %v1757
      %v1759 = vadd.f32 %v1755, %v1758
      %vm1760 = vweird.f32 %v1754
      %vm1761 = vweird.f32 %v1755
      %vm1762 = vmor %vm1760, %vm1761
      %v1763 = vsel %vm1762, %v1755, %v1759
      %v1764 = vand.u32 2147483647, %v1754
      %vm1765 = vcmp.eq.f32.partialorder %v1764, 8.507059e+37
      %v1766 = vand.u32 %v1754, 2147483648
      %v1767 = vor.u32 1.1754944e-38, %v1766
      %v1768 = vsel %vm1765, %v1767, %v1763
      %v1769 = vmul.f32 1.0, %v1768
      %1771 = vrot.lane.b32.xlu0 %v1747, 64
      %v1772 = vpop.permute.xlu0 %1771
      %v1774 = vmul.f32 %v1769, %v1772
      %1776 = vrot.lane.b32.xlu0 %v1774, 64
      %v1777 = vpop.permute.xlu0 %1776
      %v1779 = vadd.f32 %v1727, %v1777
      %v1780 = vtanh.pop %v1779
      %v1781 = vsub.f32 1.0, %v1769
      %1783 = vrot.lane.b32.xlu0 %v1780, 96
      %v1784 = vpop.permute.xlu0 %1783
      %v1786 = vmul.f32 %v1781, %v1784
      %v1787 = vmul.f32 %v1769, %v1644
      %v1788 = vadd.f32 %v1786, %v1787
      %1789 = vmatpush.bf16.msra.mxu0 0
      %1790 = vmatpush.bf16.msra.mxu0 0
      %1791 = vmatpush.bf16.msra.mxu0 0
      %1792 = vmatpush.bf16.msra.mxu0 0
      %1793 = vmatpush.bf16.msra.mxu0 %v1318
      %1794 = vmatpush.bf16.msra.mxu0 %v1317
      %1795 = vmatpush.bf16.msra.mxu0 %v1316
      %1796 = vmatpush.bf16.msra.mxu0 %v1315
      %1797 = vmatmul.bf16.gmra.mxu0 %v1226
      %v1798 = vpop.f32.mrf.mxu0
      %v1799 = vadd.f32 %v1297, %v1798
      %v1800 = vpop.f32.mrf.mxu0
      %1801 = vdwg.mxu0
      %v1802 = vpack.c.bf16 %v1716, %v1716
      %1804 = vrot.lane.b32.xlu0 %v1802, 96
      %v1805 = vpop.permute.xlu0 %1804
      %v1807 = vsel %vm576, %v1805, 0
      %1809 = vmatpush.bf16.msra.mxu0 0
      %1810 = vmatpush.bf16.msra.mxu0 0
      %1811 = vmatpush.bf16.msra.mxu0 0
      %1812 = vmatpush.bf16.msra.mxu0 0
      %1813 = vmatpush.bf16.msra.mxu0 0
      %1814 = vmatpush.bf16.msra.mxu0 0
      %1815 = vmatpush.bf16.msra.mxu0 %v1515
      %1816 = vmatpush.bf16.msra.mxu0 %v1514
      %1817 = vmatmul.bf16.gmra.mxu0 %v1807
      %v1818 = vpop.f32.mrf.mxu0
      %v1819 = vadd.f32 %v1341, %v1818
      %v1820 = vpop.f32.mrf.mxu0
      %1821 = vdwg.mxu0
      %v1822 = vadd.f32 %v1799, %v1819
      %v1823 = vxor.u32 %v1822, 2147483648
      %v1824 = vmul.f32 %v1823, 1.442695
      %v1825 = vpow.pop %v1824
      %v1826 = vadd.f32 %v1825, 1.0
      %v1827 = vrcp.pop %v1826
      %v1828 = vmul.f32 %v1826, %v1827
      %v1829 = vsub.f32 1.0, %v1828
      %v1830 = vmul.f32 %v1827, %v1829
      %v1831 = vadd.f32 %v1827, %v1830
      %vm1832 = vweird.f32 %v1826
      %vm1833 = vweird.f32 %v1827
      %vm1834 = vmor %vm1832, %vm1833
      %v1835 = vsel %vm1834, %v1827, %v1831
      %v1836 = vand.u32 2147483647, %v1826
      %vm1837 = vcmp.eq.f32.partialorder %v1836, 8.507059e+37
      %v1838 = vand.u32 %v1826, 2147483648
      %v1839 = vor.u32 1.1754944e-38, %v1838
      %v1840 = vsel %vm1837, %v1839, %v1835
      %v1841 = vmul.f32 1.0, %v1840
      %1843 = vrot.lane.b32.xlu0 %v1819, 64
      %v1844 = vpop.permute.xlu0 %1843
      %v1846 = vmul.f32 %v1841, %v1844
      %1848 = vrot.lane.b32.xlu0 %v1846, 64
      %v1849 = vpop.permute.xlu0 %1848
      %v1851 = vadd.f32 %v1799, %v1849
      %v1852 = vtanh.pop %v1851
      %v1853 = vsub.f32 1.0, %v1841
      %1855 = vrot.lane.b32.xlu0 %v1852, 96
      %v1856 = vpop.permute.xlu0 %1855
      %v1858 = vmul.f32 %v1853, %v1856
      %v1859 = vmul.f32 %v1841, %v1716
      %v1860 = vadd.f32 %v1858, %v1859
      %1862 = vrot.lane.b32.xlu0 %v1788, 96
      %v1863 = vpop.permute.xlu0 %1862
      %v1865 = vsel %vm576, %v1863, %v1860
      %vm1866 = vcmask 518144
      %1867 = vst.msk [vmem:[%s546] sm:$0x7] %vm1866, %v1865
      %p1868 = scmp.lt.s32.totalorder %s28, 1
      %s1869 = scalar_select %p1868, %s28, 1
      %s1870 = smul.addr %s1869, 4
      %s1871 = scalar_lea.vmem %s17, %s1870
      // Predicated region
      $region89: #{_lambda_.3} parent=87 // pred_check
        %p1872 = pneg %p408
      $region90: #{_lambda_.3} parent=87 // pred_check_branch
        %1874 = sbr.rel (%p1872) target = $region92
      $region91: #{_lambda_.3} parent=87 // pred_region
        _
      $region92: #{_lambda_.3} parent=87 // pred_fallthru
        _
    $region88: #{_lambda_.3} parent=5 // pred_fallthru
      _
    %p1875 = scmp.le.s32.totalorder 2, %s23
    // Predicated region
    $region93: #{_lambda_.3} parent=5 // pred_check
      %p1876 = pneg %p1875
    $region94: #{_lambda_.3} parent=5 // pred_check_branch
      %1878 = sbr.rel (%p1876) target = $region96
    $region95: #{_lambda_.3} parent=5 // pred_region
      %s1879 = ssub.s32 %s23, 2
      // Predicated region
      $region97: #{_lambda_.3} parent=95 // pred_check
        %p1880 = pneg %p414
      $region98: #{_lambda_.3} parent=95 // pred_check_branch
        %1882 = sbr.rel (%p1880) target = $region100
      $region99: #{_lambda_.3} parent=95 // pred_region
        %p1883 = scmp.lt.s32.totalorder %s29, 1
        %s1884 = scalar_select %p1883, %s29, 1
        %s1885 = smul.addr %s1884, 4
        %s1886 = scalar_lea.vmem %s17, %s1885
      $region100: #{_lambda_.3} parent=95 // pred_fallthru
        _
    $region96: #{_lambda_.3} parent=5 // pred_fallthru
      _
  $region6: #{_lambda_.3} parent=0 // loop_footer
    %s27 = sadd.s32 1, %s23
  $region7: #{_lambda_.3} parent=0 // loop_footer_branch
    %22 = sbr.rel target = $region3
  $region8: #{_lambda_.3} parent=0 // loop_exit
    _

// kernel: _lambda_.2
$region0: #{_lambda_.2}
  #allocation0 [shape = 'u32[]', space=smem, size = 0x4, offset = 0x4, fixed_abs, tag = 'smem constant byte address 0x4 - core index']
  #allocation1 [shape = 'u32[72,128]{1,0:T(1,128)}', space=vmem, size = 0x9000, scoped, tag = 'internal scratch']
  %s0 = inlined_call_operand.vmem [shape: f32[40,8], index: 0, kind: input, shape index: {}]
  %s1 = inlined_call_operand.vmem [shape: bf16[1,80,40], index: 1, kind: input, shape index: {}]
  %s2 = inlined_call_operand.vmem [shape: bf16[1,80,40], index: 2, kind: input, shape index: {}]
  %s3 = inlined_call_operand.vmem [shape: bf16[1,40,80], index: 3, kind: input, shape index: {}]
  %s4 = inlined_call_operand.vmem [shape: bf16[8,32], index: 4, kind: input, shape index: {}]
  %s5 = inlined_call_operand.vmem [shape: f32[1,32], index: 5, kind: input, shape index: {}]
  %s6 = inlined_call_operand.vmem [shape: bf16[32,32], index: 6, kind: input, shape index: {}]
  %s7 = inlined_call_operand.vmem [shape: f32[1,32], index: 7, kind: input, shape index: {}]
  %s8 = inlined_call_operand.vmem [shape: bf16[32,32], index: 8, kind: input, shape index: {}]
  %s9 = inlined_call_operand.vmem [shape: f32[1,32], index: 9, kind: input, shape index: {}]
  %s10 = inlined_call_operand.vmem [shape: bf16[16,32], index: 10, kind: input, shape index: {}]
  %s11 = inlined_call_operand.vmem [shape: f32[1,32], index: 11, kind: input, shape index: {}]
  %s12 = inlined_call_operand.vmem [shape: bf16[32,32], index: 12, kind: input, shape index: {}]
  %s13 = inlined_call_operand.vmem [shape: f32[1,32], index: 13, kind: input, shape index: {}]
  %s14 = inlined_call_operand.vmem [shape: bf16[32,32], index: 14, kind: input, shape index: {}]
  %s15 = inlined_call_operand.vmem [shape: f32[1,32], index: 15, kind: input, shape index: {}]
  %s16 = inlined_call_operand.vmem [shape: bf16[96,32], index: 16, kind: input, shape index: {}]
  %s17 = inlined_call_operand.vmem [shape: f32[1,32], index: 17, kind: input, shape index: {}]
  %s18 = inlined_call_operand.vmem [shape: bf16[64,32], index: 18, kind: input, shape index: {}]
  %s19 = inlined_call_operand.vmem [shape: f32[1,32], index: 19, kind: input, shape index: {}]
  %s20 = inlined_call_operand.vmem [shape: bf16[64,32], index: 20, kind: input, shape index: {}]
  %s21 = inlined_call_operand.vmem [shape: f32[1,32], index: 21, kind: input, shape index: {}]
  %s22 = inlined_call_operand.vmem [shape: bf16[32,32], index: 22, kind: input, shape index: {}]
  %s23 = inlined_call_operand.vmem [shape: f32[1,32], index: 23, kind: input, shape index: {}]
  %s24 = inlined_call_operand.vmem [shape: bf16[32,32], index: 24, kind: input, shape index: {}]
  %s25 = inlined_call_operand.vmem [shape: f32[1,32], index: 25, kind: input, shape index: {}]
  %s26 = inlined_call_operand.vmem [shape: f32[40,32], index: 26, kind: output, shape index: {}]
  %s27 = sld [smem:[#allocation0]]
  $region114: #{_lambda_.2} parent=0
    _
  %s29 = ssub.s32 1, %s27
  %s30 = scalar_select 0, %s29, %s27
  // Predicated region
  $region2: #{_lambda_.2} parent=0 // pred_check
    _
  $region3: #{_lambda_.2} parent=0 // pred_check_branch
    %32 = sbr.rel (0) target = $region5
  $region4: #{_lambda_.2} parent=0 // pred_region
    _
  $region5: #{_lambda_.2} parent=0 // pred_fallthru
    _
  // Predicated region
  $region6: #{_lambda_.2} parent=0 // pred_check
    _
  $region7: #{_lambda_.2} parent=0 // pred_check_branch
    %34 = sbr.rel (0) target = $region9
  $region8: #{_lambda_.2} parent=0 // pred_region
    _
  $region9: #{_lambda_.2} parent=0 // pred_fallthru
    _
  // Predicated region
  $region10: #{_lambda_.2} parent=0 // pred_check
    _
  $region11: #{_lambda_.2} parent=0 // pred_check_branch
    %36 = sbr.rel (0) target = $region13
  $region12: #{_lambda_.2} parent=0 // pred_region
    _
  $region13: #{_lambda_.2} parent=0 // pred_fallthru
    _
  // Predicated region
  $region14: #{_lambda_.2} parent=0 // pred_check
    _
  $region15: #{_lambda_.2} parent=0 // pred_check_branch
    %38 = sbr.rel (0) target = $region17
  $region16: #{_lambda_.2} parent=0 // pred_region
    _
  $region17: #{_lambda_.2} parent=0 // pred_fallthru
    _
  // Predicated region
  $region18: #{_lambda_.2} parent=0 // pred_check
    _
  $region19: #{_lambda_.2} parent=0 // pred_check_branch
    %40 = sbr.rel (0) target = $region21
  $region20: #{_lambda_.2} parent=0 // pred_region
    _
  $region21: #{_lambda_.2} parent=0 // pred_fallthru
    _
  // Predicated region
  $region22: #{_lambda_.2} parent=0 // pred_check
    _
  $region23: #{_lambda_.2} parent=0 // pred_check_branch
    %42 = sbr.rel (0) target = $region25
  $region24: #{_lambda_.2} parent=0 // pred_region
    _
  $region25: #{_lambda_.2} parent=0 // pred_fallthru
    _
  // Predicated region
  $region26: #{_lambda_.2} parent=0 // pred_check
    _
  $region27: #{_lambda_.2} parent=0 // pred_check_branch
    %44 = sbr.rel (0) target = $region29
  $region28: #{_lambda_.2} parent=0 // pred_region
    _
  $region29: #{_lambda_.2} parent=0 // pred_fallthru
    _
  // Predicated region
  $region30: #{_lambda_.2} parent=0 // pred_check
    _
  $region31: #{_lambda_.2} parent=0 // pred_check_branch
    %46 = sbr.rel (0) target = $region33
  $region32: #{_lambda_.2} parent=0 // pred_region
    _
  $region33: #{_lambda_.2} parent=0 // pred_fallthru
    _
  // Predicated region
  $region34: #{_lambda_.2} parent=0 // pred_check
    _
  $region35: #{_lambda_.2} parent=0 // pred_check_branch
    %48 = sbr.rel (0) target = $region37
  $region36: #{_lambda_.2} parent=0 // pred_region
    _
  $region37: #{_lambda_.2} parent=0 // pred_fallthru
    _
  // Predicated region
  $region38: #{_lambda_.2} parent=0 // pred_check
    _
  $region39: #{_lambda_.2} parent=0 // pred_check_branch
    %50 = sbr.rel (0) target = $region41
  $region40: #{_lambda_.2} parent=0 // pred_region
    _
  $region41: #{_lambda_.2} parent=0 // pred_fallthru
    _
  // Predicated region
  $region42: #{_lambda_.2} parent=0 // pred_check
    _
  $region43: #{_lambda_.2} parent=0 // pred_check_branch
    %52 = sbr.rel (0) target = $region45
  $region44: #{_lambda_.2} parent=0 // pred_region
    _
  $region45: #{_lambda_.2} parent=0 // pred_fallthru
    _
  // Predicated region
  $region46: #{_lambda_.2} parent=0 // pred_check
    _
  $region47: #{_lambda_.2} parent=0 // pred_check_branch
    %54 = sbr.rel (0) target = $region49
  $region48: #{_lambda_.2} parent=0 // pred_region
    _
  $region49: #{_lambda_.2} parent=0 // pred_fallthru
    _
  // Predicated region
  $region50: #{_lambda_.2} parent=0 // pred_check
    _
  $region51: #{_lambda_.2} parent=0 // pred_check_branch
    %56 = sbr.rel (0) target = $region53
  $region52: #{_lambda_.2} parent=0 // pred_region
    _
  $region53: #{_lambda_.2} parent=0 // pred_fallthru
    _
  // Predicated region
  $region54: #{_lambda_.2} parent=0 // pred_check
    _
  $region55: #{_lambda_.2} parent=0 // pred_check_branch
    %58 = sbr.rel (0) target = $region57
  $region56: #{_lambda_.2} parent=0 // pred_region
    _
  $region57: #{_lambda_.2} parent=0 // pred_fallthru
    _
  // Predicated region
  $region58: #{_lambda_.2} parent=0 // pred_check
    _
  $region59: #{_lambda_.2} parent=0 // pred_check_branch
    %60 = sbr.rel (0) target = $region61
  $region60: #{_lambda_.2} parent=0 // pred_region
    _
  $region61: #{_lambda_.2} parent=0 // pred_fallthru
    _
  // Predicated region
  $region62: #{_lambda_.2} parent=0 // pred_check
    _
  $region63: #{_lambda_.2} parent=0 // pred_check_branch
    %62 = sbr.rel (0) target = $region65
  $region64: #{_lambda_.2} parent=0 // pred_region
    _
  $region65: #{_lambda_.2} parent=0 // pred_fallthru
    _
  // Predicated region
  $region66: #{_lambda_.2} parent=0 // pred_check
    _
  $region67: #{_lambda_.2} parent=0 // pred_check_branch
    %64 = sbr.rel (0) target = $region69
  $region68: #{_lambda_.2} parent=0 // pred_region
    _
  $region69: #{_lambda_.2} parent=0 // pred_fallthru
    _
  // Predicated region
  $region70: #{_lambda_.2} parent=0 // pred_check
    _
  $region71: #{_lambda_.2} parent=0 // pred_check_branch
    %66 = sbr.rel (0) target = $region73
  $region72: #{_lambda_.2} parent=0 // pred_region
    _
  $region73: #{_lambda_.2} parent=0 // pred_fallthru
    _
  // Predicated region
  $region74: #{_lambda_.2} parent=0 // pred_check
    _
  $region75: #{_lambda_.2} parent=0 // pred_check_branch
    %68 = sbr.rel (0) target = $region77
  $region76: #{_lambda_.2} parent=0 // pred_region
    _
  $region77: #{_lambda_.2} parent=0 // pred_fallthru
    _
  // Predicated region
  $region78: #{_lambda_.2} parent=0 // pred_check
    _
  $region79: #{_lambda_.2} parent=0 // pred_check_branch
    %70 = sbr.rel (0) target = $region81
  $region80: #{_lambda_.2} parent=0 // pred_region
    _
  $region81: #{_lambda_.2} parent=0 // pred_fallthru
    _
  // Predicated region
  $region82: #{_lambda_.2} parent=0 // pred_check
    _
  $region83: #{_lambda_.2} parent=0 // pred_check_branch
    %72 = sbr.rel (0) target = $region85
  $region84: #{_lambda_.2} parent=0 // pred_region
    _
  $region85: #{_lambda_.2} parent=0 // pred_fallthru
    _
  // Predicated region
  $region86: #{_lambda_.2} parent=0 // pred_check
    _
  $region87: #{_lambda_.2} parent=0 // pred_check_branch
    %74 = sbr.rel (0) target = $region89
  $region88: #{_lambda_.2} parent=0 // pred_region
    _
  $region89: #{_lambda_.2} parent=0 // pred_fallthru
    _
  // Predicated region
  $region90: #{_lambda_.2} parent=0 // pred_check
    _
  $region91: #{_lambda_.2} parent=0 // pred_check_branch
    %76 = sbr.rel (0) target = $region93
  $region92: #{_lambda_.2} parent=0 // pred_region
    _
  $region93: #{_lambda_.2} parent=0 // pred_fallthru
    _
  // Predicated region
  $region94: #{_lambda_.2} parent=0 // pred_check
    _
  $region95: #{_lambda_.2} parent=0 // pred_check_branch
    %78 = sbr.rel (0) target = $region97
  $region96: #{_lambda_.2} parent=0 // pred_region
    _
  $region97: #{_lambda_.2} parent=0 // pred_fallthru
    _
  // Predicated region
  $region98: #{_lambda_.2} parent=0 // pred_check
    _
  $region99: #{_lambda_.2} parent=0 // pred_check_branch
    %80 = sbr.rel (0) target = $region101
  $region100: #{_lambda_.2} parent=0 // pred_region
    _
  $region101: #{_lambda_.2} parent=0 // pred_fallthru
    _
  // Predicated region
  $region102: #{_lambda_.2} parent=0 // pred_check
    _
  $region103: #{_lambda_.2} parent=0 // pred_check_branch
    %82 = sbr.rel (0) target = $region105
  $region104: #{_lambda_.2} parent=0 // pred_region
    _
  $region105: #{_lambda_.2} parent=0 // pred_fallthru
    _
  %v84 = vld [vmem:[%s0] sm:$0xff]
  %v85 = vld [vmem:[%s0 + $0x8] sm:$0xff]
  %v86 = vld [vmem:[%s0 + $0x10] sm:$0xff]
  %v87 = vld [vmem:[%s0 + $0x18] sm:$0xff]
  %v88 = vld [vmem:[%s0 + $0x20] sm:$0xff]
  %v89 = vld [vmem:[%s1] sm:$0xf]
  %v90 = vld [vmem:[%s1 + $0x4] sm:$0xf]
  %v91 = vld [vmem:[%s1 + $0x8] sm:$0xf]
  %v92 = vld [vmem:[%s1 + $0xc] sm:$0xf]
  %v93 = vld [vmem:[%s1 + $0x10] sm:$0xf]
  %v94 = vld [vmem:[%s1 + $0x14] sm:$0xf]
  %v95 = vld [vmem:[%s1 + $0x18] sm:$0xf]
  %v96 = vld [vmem:[%s1 + $0x1c] sm:$0xf]
  %v97 = vld [vmem:[%s1 + $0x20] sm:$0xf]
  %v98 = vld [vmem:[%s1 + $0x24] sm:$0xf]
  %v99 = vld [vmem:[%s2] sm:$0xf]
  %v100 = vld [vmem:[%s2 + $0x4] sm:$0xf]
  %v101 = vld [vmem:[%s2 + $0x8] sm:$0xf]
  %v102 = vld [vmem:[%s2 + $0xc] sm:$0xf]
  %v103 = vld [vmem:[%s2 + $0x10] sm:$0xf]
  %v104 = vld [vmem:[%s2 + $0x14] sm:$0xf]
  %v105 = vld [vmem:[%s2 + $0x18] sm:$0xf]
  %v106 = vld [vmem:[%s2 + $0x1c] sm:$0xf]
  %v107 = vld [vmem:[%s2 + $0x20] sm:$0xf]
  %v108 = vld [vmem:[%s2 + $0x24] sm:$0xf]
  %v109 = vld [vmem:[%s3] sm:$0xf]
  %v110 = vld [vmem:[%s3 + $0x4] sm:$0xf]
  %v111 = vld [vmem:[%s3 + $0x8] sm:$0xf]
  %v112 = vld [vmem:[%s3 + $0xc] sm:$0xf]
  %v113 = vld [vmem:[%s3 + $0x10] sm:$0xf]
  %v114 = vld [vmem:[%s4] sm:$0xf]
  %v115 = vpack.c.bf16 %v85, %v84
  %v116 = vpack.c.bf16 %v87, %v86
  %v117 = vpack.c.bf16 %v88, %v88
  %v118 = vld [vmem:[%s5] sm:$0x1]
  %v120 = vperm.slane %v118, 0
  %vm122 = vcmask 64512
  %v124 = vsel %vm122, %v115, 0
  %v127 = vsel %vm122, %v116, 0
  %v130 = vsel %vm122, %v117, 0
  %vm132 = vcmask 1043456
  %v134 = vsel %vm132, %v114, 0
  %136 = vmatpush.bf16.msra.mxu0 0
  %137 = vmatpush.bf16.msra.mxu0 0
  %138 = vmatpush.bf16.msra.mxu0 0
  %139 = vmatpush.bf16.msra.mxu0 0
  %140 = vmatpush.bf16.msra.mxu0 0
  %141 = vmatpush.bf16.msra.mxu0 0
  %142 = vmatpush.bf16.msra.mxu0 0
  %143 = vmatpush.bf16.msra.mxu0 %v134
  %144 = vmatmul.bf16.gmra.mxu0 %v124
  %v145 = vpop.f32.mrf.mxu0
  %v146 = vadd.f32 %v120, %v145
  %v147 = vpop.f32.mrf.mxu0
  %v148 = vadd.f32 %v120, %v147
  %149 = vmatmul.bf16.gmra.mxu0 %v127
  %v150 = vpop.f32.mrf.mxu0
  %v151 = vadd.f32 %v120, %v150
  %v152 = vpop.f32.mrf.mxu0
  %v153 = vadd.f32 %v120, %v152
  %154 = vmatmul.bf16.gmra.mxu0 %v130
  %v155 = vpop.f32.mrf.mxu0
  %v156 = vadd.f32 %v120, %v155
  %v157 = vpop.f32.mrf.mxu0
  %158 = vdwg.mxu0
  %v159 = vmax.f32 %v146, 0.0
  %v160 = vmax.f32 %v148, 0.0
  %v161 = vmax.f32 %v151, 0.0
  %v162 = vmax.f32 %v153, 0.0
  %v163 = vmax.f32 %v156, 0.0
  %v164 = vld [vmem:[%s6] sm:$0xf]
  %v165 = vld [vmem:[%s6 + $0x4] sm:$0xf]
  %v166 = vld [vmem:[%s6 + $0x8] sm:$0xf]
  %v167 = vld [vmem:[%s6 + $0xc] sm:$0xf]
  %v168 = vpack.c.bf16 %v160, %v159
  %v169 = vpack.c.bf16 %v162, %v161
  %v170 = vpack.c.bf16 %v163, %v163
  %v171 = vld [vmem:[%s7] sm:$0x1]
  %v173 = vperm.slane %v171, 0
  %v179 = vunpack.c.l.b16 %v164
  %v180 = vunpack.c.l.b16 %v165
  %v181 = vunpack.c.l.b16 %v166
  %v182 = vunpack.c.l.b16 %v167
  %v183 = vpack.c.b16 %v180, %v179
  %v184 = vpack.c.b16 %v182, %v181
  %vm187 = vcmask 261120
  %v189 = vsel %vm187, %v168, 0
  %v192 = vsel %vm187, %v169, 0
  %v195 = vsel %vm187, %v170, 0
  %197 = vmatpush.bf16.msra.mxu0 0
  %198 = vmatpush.bf16.msra.mxu0 0
  %199 = vmatpush.bf16.msra.mxu0 0
  %200 = vmatpush.bf16.msra.mxu0 0
  %201 = vmatpush.bf16.msra.mxu0 0
  %202 = vmatpush.bf16.msra.mxu0 0
  %203 = vmatpush.bf16.msra.mxu0 %v184
  %204 = vmatpush.bf16.msra.mxu0 %v183
  %205 = vmatmul.bf16.gmra.mxu0 %v189
  %v206 = vpop.f32.mrf.mxu0
  %v207 = vadd.f32 %v173, %v206
  %v208 = vpop.f32.mrf.mxu0
  %v209 = vadd.f32 %v173, %v208
  %210 = vmatmul.bf16.gmra.mxu0 %v192
  %v211 = vpop.f32.mrf.mxu0
  %v212 = vadd.f32 %v173, %v211
  %v213 = vpop.f32.mrf.mxu0
  %v214 = vadd.f32 %v173, %v213
  %215 = vmatmul.bf16.gmra.mxu0 %v195
  %v216 = vpop.f32.mrf.mxu0
  %v217 = vadd.f32 %v173, %v216
  %v218 = vpop.f32.mrf.mxu0
  %219 = vdwg.mxu0
  %v220 = vmax.f32 %v207, 0.0
  %v221 = vmax.f32 %v209, 0.0
  %v222 = vmax.f32 %v212, 0.0
  %v223 = vmax.f32 %v214, 0.0
  %v224 = vmax.f32 %v217, 0.0
  %v225 = vld [vmem:[%s8] sm:$0xf]
  %v226 = vld [vmem:[%s8 + $0x4] sm:$0xf]
  %v227 = vld [vmem:[%s8 + $0x8] sm:$0xf]
  %v228 = vld [vmem:[%s8 + $0xc] sm:$0xf]
  %v229 = vpack.c.bf16 %v221, %v220
  %v230 = vpack.c.bf16 %v223, %v222
  %v231 = vpack.c.bf16 %v224, %v224
  %v232 = vld [vmem:[%s9] sm:$0x1]
  %v234 = vperm.slane %v232, 0
  %v240 = vunpack.c.l.b16 %v225
  %v241 = vunpack.c.l.b16 %v226
  %v242 = vunpack.c.l.b16 %v227
  %v243 = vunpack.c.l.b16 %v228
  %v244 = vpack.c.b16 %v241, %v240
  %v245 = vpack.c.b16 %v243, %v242
  %v249 = vsel %vm187, %v229, 0
  %v252 = vsel %vm187, %v230, 0
  %v255 = vsel %vm187, %v231, 0
  %257 = vmatpush.bf16.msra.mxu0 0
  %258 = vmatpush.bf16.msra.mxu0 0
  %259 = vmatpush.bf16.msra.mxu0 0
  %260 = vmatpush.bf16.msra.mxu0 0
  %261 = vmatpush.bf16.msra.mxu0 0
  %262 = vmatpush.bf16.msra.mxu0 0
  %263 = vmatpush.bf16.msra.mxu0 %v245
  %264 = vmatpush.bf16.msra.mxu0 %v244
  %265 = vmatmul.bf16.gmra.mxu0 %v249
  %v266 = vpop.f32.mrf.mxu0
  %v267 = vadd.f32 %v234, %v266
  %v268 = vpop.f32.mrf.mxu0
  %v269 = vadd.f32 %v234, %v268
  %270 = vmatmul.bf16.gmra.mxu0 %v252
  %v271 = vpop.f32.mrf.mxu0
  %v272 = vadd.f32 %v234, %v271
  %v273 = vpop.f32.mrf.mxu0
  %v274 = vadd.f32 %v234, %v273
  %275 = vmatmul.bf16.gmra.mxu0 %v255
  %v276 = vpop.f32.mrf.mxu0
  %v277 = vadd.f32 %v234, %v276
  %v278 = vpop.f32.mrf.mxu0
  %279 = vdwg.mxu0
  %v280 = vmax.f32 %v267, 0.0
  %v281 = vmax.f32 %v269, 0.0
  %v282 = vmax.f32 %v272, 0.0
  %v283 = vmax.f32 %v274, 0.0
  %v284 = vmax.f32 %v277, 0.0
  %v295 = vunpack.c.l.b16 %v89
  %v296 = vunpack.c.l.b16 %v90
  %v297 = vunpack.c.l.b16 %v91
  %v298 = vunpack.c.l.b16 %v92
  %v299 = vunpack.c.l.b16 %v93
  %v300 = vunpack.c.l.b16 %v94
  %v301 = vunpack.c.l.b16 %v95
  %v302 = vunpack.c.l.b16 %v96
  %v303 = vunpack.c.l.b16 %v97
  %v304 = vunpack.c.l.b16 %v98
  %v305 = vpack.c.b16 %v296, %v295
  %v306 = vpack.c.b16 %v298, %v297
  %v307 = vpack.c.b16 %v300, %v299
  %v308 = vpack.c.b16 %v302, %v301
  %v309 = vpack.c.b16 %v304, %v303
  %vm310 = vcmask 326656
  %v312 = vsel %vm310, %v305, 0
  %v315 = vsel %vm310, %v306, 0
  %v318 = vsel %vm310, %v307, 0
  %v321 = vsel %vm310, %v308, 0
  %v324 = vsel %vm310, %v309, 0
  %v326 = vsel %vm132, %v117, 0
  %328 = vmatpush.bf16.msra.mxu0 0
  %329 = vmatpush.bf16.msra.mxu0 0
  %330 = vmatpush.bf16.msra.mxu0 0
  %331 = vmatpush.bf16.msra.mxu0 0
  %332 = vmatpush.bf16.msra.mxu0 0
  %333 = vmatpush.bf16.msra.mxu0 %v326
  %334 = vmatpush.bf16.msra.mxu0 %v116
  %335 = vmatpush.bf16.msra.mxu0 %v115
  %336 = vmatmul.bf16.gmra.mxu0 %v312
  %v337 = vpop.f32.mrf.mxu0
  %v338 = vadd.f32 0.0, %v337
  %v339 = vpop.f32.mrf.mxu0
  %v340 = vadd.f32 0.0, %v339
  %341 = vmatmul.bf16.gmra.mxu0 %v315
  %v342 = vpop.f32.mrf.mxu0
  %v343 = vadd.f32 0.0, %v342
  %v344 = vpop.f32.mrf.mxu0
  %v345 = vadd.f32 0.0, %v344
  %346 = vmatmul.bf16.gmra.mxu0 %v318
  %v347 = vpop.f32.mrf.mxu0
  %v348 = vadd.f32 0.0, %v347
  %v349 = vpop.f32.mrf.mxu0
  %v350 = vadd.f32 0.0, %v349
  %351 = vmatmul.bf16.gmra.mxu0 %v321
  %v352 = vpop.f32.mrf.mxu0
  %v353 = vadd.f32 0.0, %v352
  %v354 = vpop.f32.mrf.mxu0
  %v355 = vadd.f32 0.0, %v354
  %356 = vmatmul.bf16.gmra.mxu0 %v324
  %v357 = vpop.f32.mrf.mxu0
  %v358 = vadd.f32 0.0, %v357
  %v359 = vpop.f32.mrf.mxu0
  %v360 = vadd.f32 0.0, %v359
  %361 = vdwg.mxu0
  %v372 = vunpack.c.l.b16 %v99
  %v373 = vunpack.c.l.b16 %v100
  %v374 = vunpack.c.l.b16 %v101
  %v375 = vunpack.c.l.b16 %v102
  %v376 = vunpack.c.l.b16 %v103
  %v377 = vunpack.c.l.b16 %v104
  %v378 = vunpack.c.l.b16 %v105
  %v379 = vunpack.c.l.b16 %v106
  %v380 = vunpack.c.l.b16 %v107
  %v381 = vunpack.c.l.b16 %v108
  %v382 = vpack.c.b16 %v373, %v372
  %v383 = vpack.c.b16 %v375, %v374
  %v384 = vpack.c.b16 %v377, %v376
  %v385 = vpack.c.b16 %v379, %v378
  %v386 = vpack.c.b16 %v381, %v380
  %v388 = vsel %vm310, %v382, 0
  %v391 = vsel %vm310, %v383, 0
  %v394 = vsel %vm310, %v384, 0
  %v397 = vsel %vm310, %v385, 0
  %v400 = vsel %vm310, %v386, 0
  %402 = vmatpush.bf16.msra.mxu0 0
  %403 = vmatpush.bf16.msra.mxu0 0
  %404 = vmatpush.bf16.msra.mxu0 0
  %405 = vmatpush.bf16.msra.mxu0 0
  %406 = vmatpush.bf16.msra.mxu0 0
  %407 = vmatpush.bf16.msra.mxu0 %v326
  %408 = vmatpush.bf16.msra.mxu0 %v116
  %409 = vmatpush.bf16.msra.mxu0 %v115
  %410 = vmatmul.bf16.gmra.mxu0 %v388
  %v411 = vpop.f32.mrf.mxu0
  %v412 = vadd.f32 0.0, %v411
  %v413 = vpop.f32.mrf.mxu0
  %v414 = vadd.f32 0.0, %v413
  %415 = vmatmul.bf16.gmra.mxu0 %v391
  %v416 = vpop.f32.mrf.mxu0
  %v417 = vadd.f32 0.0, %v416
  %v418 = vpop.f32.mrf.mxu0
  %v419 = vadd.f32 0.0, %v418
  %420 = vmatmul.bf16.gmra.mxu0 %v394
  %v421 = vpop.f32.mrf.mxu0
  %v422 = vadd.f32 0.0, %v421
  %v423 = vpop.f32.mrf.mxu0
  %v424 = vadd.f32 0.0, %v423
  %425 = vmatmul.bf16.gmra.mxu0 %v397
  %v426 = vpop.f32.mrf.mxu0
  %v427 = vadd.f32 0.0, %v426
  %v428 = vpop.f32.mrf.mxu0
  %v429 = vadd.f32 0.0, %v428
  %430 = vmatmul.bf16.gmra.mxu0 %v400
  %v431 = vpop.f32.mrf.mxu0
  %v432 = vadd.f32 0.0, %v431
  %v433 = vpop.f32.mrf.mxu0
  %v434 = vadd.f32 0.0, %v433
  %435 = vdwg.mxu0
  %v436 = vld [vmem:[%s10] sm:$0xf]
  %v437 = vld [vmem:[%s10 + $0x4] sm:$0xf]
  %v438 = vpack.c.bf16 %v340, %v338
  %v439 = vpack.c.bf16 %v345, %v343
  %v440 = vpack.c.bf16 %v350, %v348
  %v441 = vpack.c.bf16 %v355, %v353
  %v442 = vpack.c.bf16 %v360, %v358
  %v443 = vpack.c.bf16 %v414, %v412
  %v444 = vpack.c.bf16 %v419, %v417
  %v445 = vpack.c.bf16 %v424, %v422
  %v446 = vpack.c.bf16 %v429, %v427
  %v447 = vpack.c.bf16 %v434, %v432
  %v449 = vsel %vm122, %v443, 0
  %v452 = vsel %vm122, %v444, 0
  %v455 = vsel %vm122, %v445, 0
  %v458 = vsel %vm122, %v446, 0
  %v461 = vsel %vm122, %v447, 0
  %v464 = vsel %vm132, %v437, 0
  %466 = vmatpush.bf16.msra.mxu0 0
  %467 = vmatpush.bf16.msra.mxu0 0
  %468 = vmatpush.bf16.msra.mxu0 0
  %469 = vmatpush.bf16.msra.mxu0 0
  %470 = vmatpush.bf16.msra.mxu0 0
  %471 = vmatpush.bf16.msra.mxu0 0
  %472 = vmatpush.bf16.msra.mxu0 0
  %473 = vmatpush.bf16.msra.mxu0 %v464
  %474 = vmatmul.bf16.gmra.mxu0 %v449
  %v475 = vpop.f32.mrf.mxu0
  %v476 = vadd.f32 0.0, %v475
  %v477 = vpop.f32.mrf.mxu0
  %v478 = vadd.f32 0.0, %v477
  %479 = vmatmul.bf16.gmra.mxu0 %v452
  %v480 = vpop.f32.mrf.mxu0
  %v481 = vadd.f32 0.0, %v480
  %v482 = vpop.f32.mrf.mxu0
  %v483 = vadd.f32 0.0, %v482
  %484 = vmatmul.bf16.gmra.mxu0 %v455
  %v485 = vpop.f32.mrf.mxu0
  %v486 = vadd.f32 0.0, %v485
  %v487 = vpop.f32.mrf.mxu0
  %v488 = vadd.f32 0.0, %v487
  %489 = vmatmul.bf16.gmra.mxu0 %v458
  %v490 = vpop.f32.mrf.mxu0
  %v491 = vadd.f32 0.0, %v490
  %v492 = vpop.f32.mrf.mxu0
  %v493 = vadd.f32 0.0, %v492
  %494 = vmatmul.bf16.gmra.mxu0 %v461
  %v495 = vpop.f32.mrf.mxu0
  %v496 = vadd.f32 0.0, %v495
  %v497 = vpop.f32.mrf.mxu0
  %v498 = vadd.f32 0.0, %v497
  %499 = vdwg.mxu0
  %v501 = vsel %vm122, %v438, 0
  %v504 = vsel %vm122, %v439, 0
  %v507 = vsel %vm122, %v440, 0
  %v510 = vsel %vm122, %v441, 0
  %v513 = vsel %vm122, %v442, 0
  %v516 = vsel %vm132, %v436, 0
  %518 = vmatpush.bf16.msra.mxu0 0
  %519 = vmatpush.bf16.msra.mxu0 0
  %520 = vmatpush.bf16.msra.mxu0 0
  %521 = vmatpush.bf16.msra.mxu0 0
  %522 = vmatpush.bf16.msra.mxu0 0
  %523 = vmatpush.bf16.msra.mxu0 0
  %524 = vmatpush.bf16.msra.mxu0 0
  %525 = vmatpush.bf16.msra.mxu0 %v516
  %526 = vmatmul.bf16.gmra.mxu0 %v501
  %v527 = vpop.f32.mrf.mxu0
  %v528 = vadd.f32 %v476, %v527
  %v529 = vpop.f32.mrf.mxu0
  %v530 = vadd.f32 %v478, %v529
  %531 = vmatmul.bf16.gmra.mxu0 %v504
  %v532 = vpop.f32.mrf.mxu0
  %v533 = vadd.f32 %v481, %v532
  %v534 = vpop.f32.mrf.mxu0
  %v535 = vadd.f32 %v483, %v534
  %536 = vmatmul.bf16.gmra.mxu0 %v507
  %v537 = vpop.f32.mrf.mxu0
  %v538 = vadd.f32 %v486, %v537
  %v539 = vpop.f32.mrf.mxu0
  %v540 = vadd.f32 %v488, %v539
  %541 = vmatmul.bf16.gmra.mxu0 %v510
  %v542 = vpop.f32.mrf.mxu0
  %v543 = vadd.f32 %v491, %v542
  %v544 = vpop.f32.mrf.mxu0
  %v545 = vadd.f32 %v493, %v544
  %546 = vmatmul.bf16.gmra.mxu0 %v513
  %v547 = vpop.f32.mrf.mxu0
  %v548 = vadd.f32 %v496, %v547
  %v549 = vpop.f32.mrf.mxu0
  %v550 = vadd.f32 %v498, %v549
  %551 = vdwg.mxu0
  %v552 = vld [vmem:[%s11] sm:$0x1]
  %v554 = vperm.slane %v552, 0
  %v556 = vadd.f32 %v528, %v554
  %v557 = vadd.f32 %v530, %v554
  %v558 = vadd.f32 %v533, %v554
  %v559 = vadd.f32 %v535, %v554
  %v560 = vadd.f32 %v538, %v554
  %v561 = vadd.f32 %v540, %v554
  %v562 = vadd.f32 %v543, %v554
  %v563 = vadd.f32 %v545, %v554
  %v564 = vadd.f32 %v548, %v554
  %v565 = vadd.f32 %v550, %v554
  %v566 = vmax.f32 %v556, 0.0
  %v567 = vmax.f32 %v557, 0.0
  %v568 = vmax.f32 %v558, 0.0
  %v569 = vmax.f32 %v559, 0.0
  %v570 = vmax.f32 %v560, 0.0
  %v571 = vmax.f32 %v561, 0.0
  %v572 = vmax.f32 %v562, 0.0
  %v573 = vmax.f32 %v563, 0.0
  %v574 = vmax.f32 %v564, 0.0
  %v575 = vmax.f32 %v565, 0.0
  %v576 = vld [vmem:[%s12] sm:$0xf]
  %v577 = vld [vmem:[%s12 + $0x4] sm:$0xf]
  %v578 = vld [vmem:[%s12 + $0x8] sm:$0xf]
  %v579 = vld [vmem:[%s12 + $0xc] sm:$0xf]
  %v580 = vpack.c.bf16 %v567, %v566
  %v581 = vpack.c.bf16 %v569, %v568
  %v582 = vpack.c.bf16 %v571, %v570
  %v583 = vpack.c.bf16 %v573, %v572
  %v584 = vpack.c.bf16 %v575, %v574
  %v585 = vld [vmem:[%s13] sm:$0x1]
  %v587 = vperm.slane %v585, 0
  %v593 = vunpack.c.l.b16 %v576
  %v594 = vunpack.c.l.b16 %v577
  %v595 = vunpack.c.l.b16 %v578
  %v596 = vunpack.c.l.b16 %v579
  %v597 = vpack.c.b16 %v594, %v593
  %v598 = vpack.c.b16 %v596, %v595
  %v602 = vsel %vm187, %v580, 0
  %v605 = vsel %vm187, %v581, 0
  %v608 = vsel %vm187, %v582, 0
  %v611 = vsel %vm187, %v583, 0
  %v614 = vsel %vm187, %v584, 0
  %616 = vmatpush.bf16.msra.mxu0 0
  %617 = vmatpush.bf16.msra.mxu0 0
  %618 = vmatpush.bf16.msra.mxu0 0
  %619 = vmatpush.bf16.msra.mxu0 0
  %620 = vmatpush.bf16.msra.mxu0 0
  %621 = vmatpush.bf16.msra.mxu0 0
  %622 = vmatpush.bf16.msra.mxu0 %v598
  %623 = vmatpush.bf16.msra.mxu0 %v597
  %624 = vmatmul.bf16.gmra.mxu0 %v602
  %v625 = vpop.f32.mrf.mxu0
  %v626 = vadd.f32 %v587, %v625
  %v627 = vpop.f32.mrf.mxu0
  %v628 = vadd.f32 %v587, %v627
  %629 = vmatmul.bf16.gmra.mxu0 %v605
  %v630 = vpop.f32.mrf.mxu0
  %v631 = vadd.f32 %v587, %v630
  %v632 = vpop.f32.mrf.mxu0
  %v633 = vadd.f32 %v587, %v632
  %634 = vmatmul.bf16.gmra.mxu0 %v608
  %v635 = vpop.f32.mrf.mxu0
  %v636 = vadd.f32 %v587, %v635
  %v637 = vpop.f32.mrf.mxu0
  %v638 = vadd.f32 %v587, %v637
  %639 = vmatmul.bf16.gmra.mxu0 %v611
  %v640 = vpop.f32.mrf.mxu0
  %v641 = vadd.f32 %v587, %v640
  %v642 = vpop.f32.mrf.mxu0
  %v643 = vadd.f32 %v587, %v642
  %644 = vmatmul.bf16.gmra.mxu0 %v614
  %v645 = vpop.f32.mrf.mxu0
  %v646 = vadd.f32 %v587, %v645
  %v647 = vpop.f32.mrf.mxu0
  %v648 = vadd.f32 %v587, %v647
  %649 = vdwg.mxu0
  %v650 = vmax.f32 %v626, 0.0
  %v651 = vmax.f32 %v628, 0.0
  %v652 = vmax.f32 %v631, 0.0
  %v653 = vmax.f32 %v633, 0.0
  %v654 = vmax.f32 %v636, 0.0
  %v655 = vmax.f32 %v638, 0.0
  %v656 = vmax.f32 %v641, 0.0
  %v657 = vmax.f32 %v643, 0.0
  %v658 = vmax.f32 %v646, 0.0
  %v659 = vmax.f32 %v648, 0.0
  %v660 = vld [vmem:[%s14] sm:$0xf]
  %v661 = vld [vmem:[%s14 + $0x4] sm:$0xf]
  %v662 = vld [vmem:[%s14 + $0x8] sm:$0xf]
  %v663 = vld [vmem:[%s14 + $0xc] sm:$0xf]
  %v664 = vpack.c.bf16 %v651, %v650
  %v665 = vpack.c.bf16 %v653, %v652
  %v666 = vpack.c.bf16 %v655, %v654
  %v667 = vpack.c.bf16 %v657, %v656
  %v668 = vpack.c.bf16 %v659, %v658
  %v669 = vld [vmem:[%s15] sm:$0x1]
  %v671 = vperm.slane %v669, 0
  %v677 = vunpack.c.l.b16 %v660
  %v678 = vunpack.c.l.b16 %v661
  %v679 = vunpack.c.l.b16 %v662
  %v680 = vunpack.c.l.b16 %v663
  %v681 = vpack.c.b16 %v678, %v677
  %v682 = vpack.c.b16 %v680, %v679
  %v686 = vsel %vm187, %v664, 0
  %v689 = vsel %vm187, %v665, 0
  %v692 = vsel %vm187, %v666, 0
  %v695 = vsel %vm187, %v667, 0
  %v698 = vsel %vm187, %v668, 0
  %700 = vmatpush.bf16.msra.mxu0 0
  %701 = vmatpush.bf16.msra.mxu0 0
  %702 = vmatpush.bf16.msra.mxu0 0
  %703 = vmatpush.bf16.msra.mxu0 0
  %704 = vmatpush.bf16.msra.mxu0 0
  %705 = vmatpush.bf16.msra.mxu0 0
  %706 = vmatpush.bf16.msra.mxu0 %v682
  %707 = vmatpush.bf16.msra.mxu0 %v681
  %708 = vmatmul.bf16.gmra.mxu0 %v686
  %v709 = vpop.f32.mrf.mxu0
  %v710 = vadd.f32 %v671, %v709
  %v711 = vpop.f32.mrf.mxu0
  %v712 = vadd.f32 %v671, %v711
  %713 = vmatmul.bf16.gmra.mxu0 %v689
  %v714 = vpop.f32.mrf.mxu0
  %v715 = vadd.f32 %v671, %v714
  %v716 = vpop.f32.mrf.mxu0
  %v717 = vadd.f32 %v671, %v716
  %718 = vmatmul.bf16.gmra.mxu0 %v692
  %v719 = vpop.f32.mrf.mxu0
  %v720 = vadd.f32 %v671, %v719
  %v721 = vpop.f32.mrf.mxu0
  %v722 = vadd.f32 %v671, %v721
  %723 = vmatmul.bf16.gmra.mxu0 %v695
  %v724 = vpop.f32.mrf.mxu0
  %v725 = vadd.f32 %v671, %v724
  %v726 = vpop.f32.mrf.mxu0
  %v727 = vadd.f32 %v671, %v726
  %728 = vmatmul.bf16.gmra.mxu0 %v698
  %v729 = vpop.f32.mrf.mxu0
  %v730 = vadd.f32 %v671, %v729
  %v731 = vpop.f32.mrf.mxu0
  %v732 = vadd.f32 %v671, %v731
  %733 = vdwg.mxu0
  %v734 = vmax.f32 %v710, 0.0
  %v735 = vmax.f32 %v712, 0.0
  %v736 = vmax.f32 %v715, 0.0
  %v737 = vmax.f32 %v717, 0.0
  %v738 = vmax.f32 %v720, 0.0
  %v739 = vmax.f32 %v722, 0.0
  %v740 = vmax.f32 %v725, 0.0
  %v741 = vmax.f32 %v727, 0.0
  %v742 = vmax.f32 %v730, 0.0
  %v743 = vmax.f32 %v732, 0.0
  %v744 = vpack.c.bf16 %v281, %v280
  %v745 = vpack.c.bf16 %v283, %v282
  %v746 = vpack.c.bf16 %v284, %v284
  %v748 = vsel %vm132, %v746, 0
  %750 = vmatpush.bf16.msra.mxu0 0
  %751 = vmatpush.bf16.msra.mxu0 0
  %752 = vmatpush.bf16.msra.mxu0 0
  %753 = vmatpush.bf16.msra.mxu0 0
  %754 = vmatpush.bf16.msra.mxu0 0
  %755 = vmatpush.bf16.msra.mxu0 %v748
  %756 = vmatpush.bf16.msra.mxu0 %v745
  %757 = vmatpush.bf16.msra.mxu0 %v744
  %758 = vmatmul.bf16.gmra.mxu0 %v312
  %v759 = vpop.f32.mrf.mxu0
  %v760 = vadd.f32 0.0, %v759
  %v761 = vpop.f32.mrf.mxu0
  %v762 = vadd.f32 0.0, %v761
  %763 = vmatmul.bf16.gmra.mxu0 %v315
  %v764 = vpop.f32.mrf.mxu0
  %v765 = vadd.f32 0.0, %v764
  %v766 = vpop.f32.mrf.mxu0
  %v767 = vadd.f32 0.0, %v766
  %768 = vmatmul.bf16.gmra.mxu0 %v318
  %v769 = vpop.f32.mrf.mxu0
  %v770 = vadd.f32 0.0, %v769
  %v771 = vpop.f32.mrf.mxu0
  %v772 = vadd.f32 0.0, %v771
  %773 = vmatmul.bf16.gmra.mxu0 %v321
  %v774 = vpop.f32.mrf.mxu0
  %v775 = vadd.f32 0.0, %v774
  %v776 = vpop.f32.mrf.mxu0
  %v777 = vadd.f32 0.0, %v776
  %778 = vmatmul.bf16.gmra.mxu0 %v324
  %v779 = vpop.f32.mrf.mxu0
  %v780 = vadd.f32 0.0, %v779
  %v781 = vpop.f32.mrf.mxu0
  %v782 = vadd.f32 0.0, %v781
  %783 = vdwg.mxu0
  %784 = vmatpush.bf16.msra.mxu0 0
  %785 = vmatpush.bf16.msra.mxu0 0
  %786 = vmatpush.bf16.msra.mxu0 0
  %787 = vmatpush.bf16.msra.mxu0 0
  %788 = vmatpush.bf16.msra.mxu0 0
  %789 = vmatpush.bf16.msra.mxu0 %v748
  %790 = vmatpush.bf16.msra.mxu0 %v745
  %791 = vmatpush.bf16.msra.mxu0 %v744
  %792 = vmatmul.bf16.gmra.mxu0 %v388
  %v793 = vpop.f32.mrf.mxu0
  %v794 = vadd.f32 0.0, %v793
  %v795 = vpop.f32.mrf.mxu0
  %v796 = vadd.f32 0.0, %v795
  %797 = vmatmul.bf16.gmra.mxu0 %v391
  %v798 = vpop.f32.mrf.mxu0
  %v799 = vadd.f32 0.0, %v798
  %v800 = vpop.f32.mrf.mxu0
  %v801 = vadd.f32 0.0, %v800
  %802 = vmatmul.bf16.gmra.mxu0 %v394
  %v803 = vpop.f32.mrf.mxu0
  %v804 = vadd.f32 0.0, %v803
  %v805 = vpop.f32.mrf.mxu0
  %v806 = vadd.f32 0.0, %v805
  %807 = vmatmul.bf16.gmra.mxu0 %v397
  %v808 = vpop.f32.mrf.mxu0
  %v809 = vadd.f32 0.0, %v808
  %v810 = vpop.f32.mrf.mxu0
  %v811 = vadd.f32 0.0, %v810
  %812 = vmatmul.bf16.gmra.mxu0 %v400
  %v813 = vpop.f32.mrf.mxu0
  %v814 = vadd.f32 0.0, %v813
  %v815 = vpop.f32.mrf.mxu0
  %v816 = vadd.f32 0.0, %v815
  %817 = vdwg.mxu0
  %v818 = vld [vmem:[%s16] sm:$0xf]
  %v819 = vld [vmem:[%s16 + $0x4] sm:$0xf]
  %v820 = vld [vmem:[%s16 + $0x8] sm:$0xf]
  %v821 = vld [vmem:[%s16 + $0xc] sm:$0xf]
  %v822 = vld [vmem:[%s16 + $0x10] sm:$0xf]
  %v823 = vld [vmem:[%s16 + $0x14] sm:$0xf]
  %v824 = vld [vmem:[%s16 + $0x18] sm:$0xf]
  %v825 = vld [vmem:[%s16 + $0x1c] sm:$0xf]
  %v826 = vld [vmem:[%s16 + $0x20] sm:$0xf]
  %v827 = vld [vmem:[%s16 + $0x24] sm:$0xf]
  %v828 = vld [vmem:[%s16 + $0x28] sm:$0xf]
  %v829 = vld [vmem:[%s16 + $0x2c] sm:$0xf]
  %v830 = vpack.c.bf16 %v735, %v734
  %v831 = vpack.c.bf16 %v737, %v736
  %v832 = vpack.c.bf16 %v739, %v738
  %v833 = vpack.c.bf16 %v741, %v740
  %v834 = vpack.c.bf16 %v743, %v742
  %v835 = vpack.c.bf16 %v762, %v760
  %v836 = vpack.c.bf16 %v767, %v765
  %v837 = vpack.c.bf16 %v772, %v770
  %v838 = vpack.c.bf16 %v777, %v775
  %v839 = vpack.c.bf16 %v782, %v780
  %v844 = vunpack.c.l.b16 %v822
  %v845 = vunpack.c.l.b16 %v823
  %v846 = vunpack.c.l.b16 %v824
  %v847 = vunpack.c.l.b16 %v825
  %v848 = vpack.c.b16 %v845, %v844
  %v849 = vpack.c.b16 %v847, %v846
  %v853 = vsel %vm187, %v835, 0
  %v856 = vsel %vm187, %v836, 0
  %v859 = vsel %vm187, %v837, 0
  %v862 = vsel %vm187, %v838, 0
  %v865 = vsel %vm187, %v839, 0
  %867 = vmatpush.bf16.msra.mxu0 0
  %868 = vmatpush.bf16.msra.mxu0 0
  %869 = vmatpush.bf16.msra.mxu0 0
  %870 = vmatpush.bf16.msra.mxu0 0
  %871 = vmatpush.bf16.msra.mxu0 0
  %872 = vmatpush.bf16.msra.mxu0 0
  %873 = vmatpush.bf16.msra.mxu0 %v849
  %874 = vmatpush.bf16.msra.mxu0 %v848
  %875 = vmatmul.bf16.gmra.mxu0 %v853
  %v876 = vpop.f32.mrf.mxu0
  %v877 = vadd.f32 0.0, %v876
  %v878 = vpop.f32.mrf.mxu0
  %v879 = vadd.f32 0.0, %v878
  %880 = vmatmul.bf16.gmra.mxu0 %v856
  %v881 = vpop.f32.mrf.mxu0
  %v882 = vadd.f32 0.0, %v881
  %v883 = vpop.f32.mrf.mxu0
  %v884 = vadd.f32 0.0, %v883
  %885 = vmatmul.bf16.gmra.mxu0 %v859
  %v886 = vpop.f32.mrf.mxu0
  %v887 = vadd.f32 0.0, %v886
  %v888 = vpop.f32.mrf.mxu0
  %v889 = vadd.f32 0.0, %v888
  %890 = vmatmul.bf16.gmra.mxu0 %v862
  %v891 = vpop.f32.mrf.mxu0
  %v892 = vadd.f32 0.0, %v891
  %v893 = vpop.f32.mrf.mxu0
  %v894 = vadd.f32 0.0, %v893
  %895 = vmatmul.bf16.gmra.mxu0 %v865
  %v896 = vpop.f32.mrf.mxu0
  %v897 = vadd.f32 0.0, %v896
  %v898 = vpop.f32.mrf.mxu0
  %v899 = vadd.f32 0.0, %v898
  %900 = vdwg.mxu0
  %v905 = vunpack.c.l.b16 %v818
  %v906 = vunpack.c.l.b16 %v819
  %v907 = vunpack.c.l.b16 %v820
  %v908 = vunpack.c.l.b16 %v821
  %v909 = vpack.c.b16 %v906, %v905
  %v910 = vpack.c.b16 %v908, %v907
  %v914 = vsel %vm187, %v830, 0
  %v917 = vsel %vm187, %v831, 0
  %v920 = vsel %vm187, %v832, 0
  %v923 = vsel %vm187, %v833, 0
  %v926 = vsel %vm187, %v834, 0
  %928 = vmatpush.bf16.msra.mxu0 0
  %929 = vmatpush.bf16.msra.mxu0 0
  %930 = vmatpush.bf16.msra.mxu0 0
  %931 = vmatpush.bf16.msra.mxu0 0
  %932 = vmatpush.bf16.msra.mxu0 0
  %933 = vmatpush.bf16.msra.mxu0 0
  %934 = vmatpush.bf16.msra.mxu0 %v910
  %935 = vmatpush.bf16.msra.mxu0 %v909
  %936 = vmatmul.bf16.gmra.mxu0 %v914
  %v937 = vpop.f32.mrf.mxu0
  %v938 = vadd.f32 %v877, %v937
  %v939 = vpop.f32.mrf.mxu0
  %v940 = vadd.f32 %v879, %v939
  %941 = vmatmul.bf16.gmra.mxu0 %v917
  %v942 = vpop.f32.mrf.mxu0
  %v943 = vadd.f32 %v882, %v942
  %v944 = vpop.f32.mrf.mxu0
  %v945 = vadd.f32 %v884, %v944
  %946 = vmatmul.bf16.gmra.mxu0 %v920
  %v947 = vpop.f32.mrf.mxu0
  %v948 = vadd.f32 %v887, %v947
  %v949 = vpop.f32.mrf.mxu0
  %v950 = vadd.f32 %v889, %v949
  %951 = vmatmul.bf16.gmra.mxu0 %v923
  %v952 = vpop.f32.mrf.mxu0
  %v953 = vadd.f32 %v892, %v952
  %v954 = vpop.f32.mrf.mxu0
  %v955 = vadd.f32 %v894, %v954
  %956 = vmatmul.bf16.gmra.mxu0 %v926
  %v957 = vpop.f32.mrf.mxu0
  %v958 = vadd.f32 %v897, %v957
  %v959 = vpop.f32.mrf.mxu0
  %v960 = vadd.f32 %v899, %v959
  %961 = vdwg.mxu0
  %v962 = vpack.c.bf16 %v796, %v794
  %v963 = vpack.c.bf16 %v801, %v799
  %v964 = vpack.c.bf16 %v806, %v804
  %v965 = vpack.c.bf16 %v811, %v809
  %v966 = vpack.c.bf16 %v816, %v814
  %v971 = vunpack.c.l.b16 %v826
  %v972 = vunpack.c.l.b16 %v827
  %v973 = vunpack.c.l.b16 %v828
  %v974 = vunpack.c.l.b16 %v829
  %v975 = vpack.c.b16 %v972, %v971
  %v976 = vpack.c.b16 %v974, %v973
  %v980 = vsel %vm187, %v962, 0
  %v983 = vsel %vm187, %v963, 0
  %v986 = vsel %vm187, %v964, 0
  %v989 = vsel %vm187, %v965, 0
  %v992 = vsel %vm187, %v966, 0
  %994 = vmatpush.bf16.msra.mxu0 0
  %995 = vmatpush.bf16.msra.mxu0 0
  %996 = vmatpush.bf16.msra.mxu0 0
  %997 = vmatpush.bf16.msra.mxu0 0
  %998 = vmatpush.bf16.msra.mxu0 0
  %999 = vmatpush.bf16.msra.mxu0 0
  %1000 = vmatpush.bf16.msra.mxu0 %v976
  %1001 = vmatpush.bf16.msra.mxu0 %v975
  %1002 = vmatmul.bf16.gmra.mxu0 %v980
  %v1003 = vpop.f32.mrf.mxu0
  %v1004 = vadd.f32 0.0, %v1003
  %v1005 = vpop.f32.mrf.mxu0
  %v1006 = vadd.f32 0.0, %v1005
  %1007 = vmatmul.bf16.gmra.mxu0 %v983
  %v1008 = vpop.f32.mrf.mxu0
  %v1009 = vadd.f32 0.0, %v1008
  %v1010 = vpop.f32.mrf.mxu0
  %v1011 = vadd.f32 0.0, %v1010
  %1012 = vmatmul.bf16.gmra.mxu0 %v986
  %v1013 = vpop.f32.mrf.mxu0
  %v1014 = vadd.f32 0.0, %v1013
  %v1015 = vpop.f32.mrf.mxu0
  %v1016 = vadd.f32 0.0, %v1015
  %1017 = vmatmul.bf16.gmra.mxu0 %v989
  %v1018 = vpop.f32.mrf.mxu0
  %v1019 = vadd.f32 0.0, %v1018
  %v1020 = vpop.f32.mrf.mxu0
  %v1021 = vadd.f32 0.0, %v1020
  %1022 = vmatmul.bf16.gmra.mxu0 %v992
  %v1023 = vpop.f32.mrf.mxu0
  %v1024 = vadd.f32 0.0, %v1023
  %v1025 = vpop.f32.mrf.mxu0
  %v1026 = vadd.f32 0.0, %v1025
  %1027 = vdwg.mxu0
  %v1028 = vadd.f32 %v938, %v1004
  %v1029 = vadd.f32 %v940, %v1006
  %v1030 = vadd.f32 %v943, %v1009
  %v1031 = vadd.f32 %v945, %v1011
  %v1032 = vadd.f32 %v948, %v1014
  %v1033 = vadd.f32 %v950, %v1016
  %v1034 = vadd.f32 %v953, %v1019
  %v1035 = vadd.f32 %v955, %v1021
  %v1036 = vadd.f32 %v958, %v1024
  %v1037 = vadd.f32 %v960, %v1026
  %v1038 = vld [vmem:[%s17] sm:$0x1]
  %v1040 = vperm.slane %v1038, 0
  %v1042 = vadd.f32 %v1028, %v1040
  %v1043 = vadd.f32 %v1029, %v1040
  %v1044 = vadd.f32 %v1030, %v1040
  %v1045 = vadd.f32 %v1031, %v1040
  %v1046 = vadd.f32 %v1032, %v1040
  %v1047 = vadd.f32 %v1033, %v1040
  %v1048 = vadd.f32 %v1034, %v1040
  %v1049 = vadd.f32 %v1035, %v1040
  %v1050 = vadd.f32 %v1036, %v1040
  %v1051 = vadd.f32 %v1037, %v1040
  %v1052 = vmax.f32 %v1042, 0.0
  %v1053 = vmax.f32 %v1043, 0.0
  %v1054 = vmax.f32 %v1044, 0.0
  %v1055 = vmax.f32 %v1045, 0.0
  %v1056 = vmax.f32 %v1046, 0.0
  %v1057 = vmax.f32 %v1047, 0.0
  %v1058 = vmax.f32 %v1048, 0.0
  %v1059 = vmax.f32 %v1049, 0.0
  %v1060 = vmax.f32 %v1050, 0.0
  %v1061 = vmax.f32 %v1051, 0.0
  %v1062 = vpack.c.bf16 %v1053, %v1052
  %v1063 = vpack.c.bf16 %v1055, %v1054
  %v1064 = vpack.c.bf16 %v1057, %v1056
  %v1065 = vpack.c.bf16 %v1059, %v1058
  %v1066 = vpack.c.bf16 %v1061, %v1060
  %v1072 = vunpack.c.l.b16 %v109
  %v1073 = vunpack.c.l.b16 %v110
  %v1074 = vunpack.c.l.b16 %v111
  %v1075 = vunpack.c.l.b16 %v112
  %v1076 = vunpack.c.l.b16 %v113
  %v1077 = vpack.c.b16 %v1073, %v1072
  %v1078 = vpack.c.b16 %v1075, %v1074
  %v1079 = vpack.c.b16 %v1076, %v1076
  %vm1080 = vcmask 654336
  %v1082 = vsel %vm1080, %v1077, 0
  %v1085 = vsel %vm1080, %v1078, 0
  %v1088 = vsel %vm1080, %v1079, 0
  %1090 = vmatpush.bf16.msra.mxu0 0
  %1091 = vmatpush.bf16.msra.mxu0 0
  %1092 = vmatpush.bf16.msra.mxu0 0
  %1093 = vmatpush.bf16.msra.mxu0 %v1066
  %1094 = vmatpush.bf16.msra.mxu0 %v1065
  %1095 = vmatpush.bf16.msra.mxu0 %v1064
  %1096 = vmatpush.bf16.msra.mxu0 %v1063
  %1097 = vmatpush.bf16.msra.mxu0 %v1062
  %1098 = vmatmul.bf16.gmra.mxu0 %v1082
  %v1099 = vpop.f32.mrf.mxu0
  %v1100 = vadd.f32 0.0, %v1099
  %v1101 = vpop.f32.mrf.mxu0
  %v1102 = vadd.f32 0.0, %v1101
  %1103 = vmatmul.bf16.gmra.mxu0 %v1085
  %v1104 = vpop.f32.mrf.mxu0
  %v1105 = vadd.f32 0.0, %v1104
  %v1106 = vpop.f32.mrf.mxu0
  %v1107 = vadd.f32 0.0, %v1106
  %1108 = vmatmul.bf16.gmra.mxu0 %v1088
  %v1109 = vpop.f32.mrf.mxu0
  %v1110 = vadd.f32 0.0, %v1109
  %v1111 = vpop.f32.mrf.mxu0
  %1112 = vdwg.mxu0
  %v1113 = vld [vmem:[%s18] sm:$0xf]
  %v1114 = vld [vmem:[%s18 + $0x4] sm:$0xf]
  %v1115 = vld [vmem:[%s18 + $0x8] sm:$0xf]
  %v1116 = vld [vmem:[%s18 + $0xc] sm:$0xf]
  %v1117 = vld [vmem:[%s18 + $0x10] sm:$0xf]
  %v1118 = vld [vmem:[%s18 + $0x14] sm:$0xf]
  %v1119 = vld [vmem:[%s18 + $0x18] sm:$0xf]
  %v1120 = vld [vmem:[%s18 + $0x1c] sm:$0xf]
  %v1121 = vpack.c.bf16 %v1102, %v1100
  %v1122 = vpack.c.bf16 %v1107, %v1105
  %v1123 = vpack.c.bf16 %v1110, %v1110
  %v1128 = vunpack.c.l.b16 %v1117
  %v1129 = vunpack.c.l.b16 %v1118
  %v1130 = vunpack.c.l.b16 %v1119
  %v1131 = vunpack.c.l.b16 %v1120
  %v1132 = vpack.c.b16 %v1129, %v1128
  %v1133 = vpack.c.b16 %v1131, %v1130
  %v1137 = vsel %vm187, %v1121, 0
  %v1140 = vsel %vm187, %v1122, 0
  %v1143 = vsel %vm187, %v1123, 0
  %1145 = vmatpush.bf16.msra.mxu0 0
  %1146 = vmatpush.bf16.msra.mxu0 0
  %1147 = vmatpush.bf16.msra.mxu0 0
  %1148 = vmatpush.bf16.msra.mxu0 0
  %1149 = vmatpush.bf16.msra.mxu0 0
  %1150 = vmatpush.bf16.msra.mxu0 0
  %1151 = vmatpush.bf16.msra.mxu0 %v1133
  %1152 = vmatpush.bf16.msra.mxu0 %v1132
  %1153 = vmatmul.bf16.gmra.mxu0 %v1137
  %v1154 = vpop.f32.mrf.mxu0
  %v1155 = vadd.f32 0.0, %v1154
  %v1156 = vpop.f32.mrf.mxu0
  %v1157 = vadd.f32 0.0, %v1156
  %1158 = vmatmul.bf16.gmra.mxu0 %v1140
  %v1159 = vpop.f32.mrf.mxu0
  %v1160 = vadd.f32 0.0, %v1159
  %v1161 = vpop.f32.mrf.mxu0
  %v1162 = vadd.f32 0.0, %v1161
  %1163 = vmatmul.bf16.gmra.mxu0 %v1143
  %v1164 = vpop.f32.mrf.mxu0
  %v1165 = vadd.f32 0.0, %v1164
  %v1166 = vpop.f32.mrf.mxu0
  %1167 = vdwg.mxu0
  %v1172 = vunpack.c.l.b16 %v1113
  %v1173 = vunpack.c.l.b16 %v1114
  %v1174 = vunpack.c.l.b16 %v1115
  %v1175 = vunpack.c.l.b16 %v1116
  %v1176 = vpack.c.b16 %v1173, %v1172
  %v1177 = vpack.c.b16 %v1175, %v1174
  %v1181 = vsel %vm187, %v744, 0
  %v1184 = vsel %vm187, %v745, 0
  %v1186 = vsel %vm187, %v746, 0
  %1188 = vmatpush.bf16.msra.mxu0 0
  %1189 = vmatpush.bf16.msra.mxu0 0
  %1190 = vmatpush.bf16.msra.mxu0 0
  %1191 = vmatpush.bf16.msra.mxu0 0
  %1192 = vmatpush.bf16.msra.mxu0 0
  %1193 = vmatpush.bf16.msra.mxu0 0
  %1194 = vmatpush.bf16.msra.mxu0 %v1177
  %1195 = vmatpush.bf16.msra.mxu0 %v1176
  %1196 = vmatmul.bf16.gmra.mxu0 %v1181
  %v1197 = vpop.f32.mrf.mxu0
  %v1198 = vadd.f32 %v1155, %v1197
  %v1199 = vpop.f32.mrf.mxu0
  %v1200 = vadd.f32 %v1157, %v1199
  %1201 = vmatmul.bf16.gmra.mxu0 %v1184
  %v1202 = vpop.f32.mrf.mxu0
  %v1203 = vadd.f32 %v1160, %v1202
  %v1204 = vpop.f32.mrf.mxu0
  %v1205 = vadd.f32 %v1162, %v1204
  %1206 = vmatmul.bf16.gmra.mxu0 %v1186
  %v1207 = vpop.f32.mrf.mxu0
  %v1208 = vadd.f32 %v1165, %v1207
  %v1209 = vpop.f32.mrf.mxu0
  %1210 = vdwg.mxu0
  %v1211 = vld [vmem:[%s19] sm:$0x1]
  %v1213 = vperm.slane %v1211, 0
  %v1215 = vadd.f32 %v1198, %v1213
  %v1216 = vadd.f32 %v1200, %v1213
  %v1217 = vadd.f32 %v1203, %v1213
  %v1218 = vadd.f32 %v1205, %v1213
  %v1219 = vadd.f32 %v1208, %v1213
  %v1220 = vadd.f32 %v1215, %v280
  %v1221 = vadd.f32 %v1216, %v281
  %v1222 = vadd.f32 %v1217, %v282
  %v1223 = vadd.f32 %v1218, %v283
  %v1224 = vadd.f32 %v1219, %v284
  %v1225 = vmax.f32 %v1220, 0.0
  %v1226 = vmax.f32 %v1221, 0.0
  %v1227 = vmax.f32 %v1222, 0.0
  %v1228 = vmax.f32 %v1223, 0.0
  %v1229 = vmax.f32 %v1224, 0.0
  %v1230 = vpack.c.bf16 %v1226, %v1225
  %v1231 = vpack.c.bf16 %v1228, %v1227
  %v1232 = vpack.c.bf16 %v1229, %v1229
  %v1234 = vsel %vm132, %v1232, 0
  %1236 = vmatpush.bf16.msra.mxu0 0
  %1237 = vmatpush.bf16.msra.mxu0 0
  %1238 = vmatpush.bf16.msra.mxu0 0
  %1239 = vmatpush.bf16.msra.mxu0 0
  %1240 = vmatpush.bf16.msra.mxu0 0
  %1241 = vmatpush.bf16.msra.mxu0 %v1234
  %1242 = vmatpush.bf16.msra.mxu0 %v1231
  %1243 = vmatpush.bf16.msra.mxu0 %v1230
  %1244 = vmatmul.bf16.gmra.mxu0 %v312
  %v1245 = vpop.f32.mrf.mxu0
  %v1246 = vadd.f32 0.0, %v1245
  %v1247 = vpop.f32.mrf.mxu0
  %v1248 = vadd.f32 0.0, %v1247
  %1249 = vmatmul.bf16.gmra.mxu0 %v315
  %v1250 = vpop.f32.mrf.mxu0
  %v1251 = vadd.f32 0.0, %v1250
  %v1252 = vpop.f32.mrf.mxu0
  %v1253 = vadd.f32 0.0, %v1252
  %1254 = vmatmul.bf16.gmra.mxu0 %v318
  %v1255 = vpop.f32.mrf.mxu0
  %v1256 = vadd.f32 0.0, %v1255
  %v1257 = vpop.f32.mrf.mxu0
  %v1258 = vadd.f32 0.0, %v1257
  %1259 = vmatmul.bf16.gmra.mxu0 %v321
  %v1260 = vpop.f32.mrf.mxu0
  %v1261 = vadd.f32 0.0, %v1260
  %v1262 = vpop.f32.mrf.mxu0
  %v1263 = vadd.f32 0.0, %v1262
  %1264 = vmatmul.bf16.gmra.mxu0 %v324
  %v1265 = vpop.f32.mrf.mxu0
  %v1266 = vadd.f32 0.0, %v1265
  %v1267 = vpop.f32.mrf.mxu0
  %v1268 = vadd.f32 0.0, %v1267
  %1269 = vdwg.mxu0
  %1270 = vmatpush.bf16.msra.mxu0 0
  %1271 = vmatpush.bf16.msra.mxu0 0
  %1272 = vmatpush.bf16.msra.mxu0 0
  %1273 = vmatpush.bf16.msra.mxu0 0
  %1274 = vmatpush.bf16.msra.mxu0 0
  %1275 = vmatpush.bf16.msra.mxu0 %v1234
  %1276 = vmatpush.bf16.msra.mxu0 %v1231
  %1277 = vmatpush.bf16.msra.mxu0 %v1230
  %1278 = vmatmul.bf16.gmra.mxu0 %v388
  %v1279 = vpop.f32.mrf.mxu0
  %v1280 = vadd.f32 0.0, %v1279
  %v1281 = vpop.f32.mrf.mxu0
  %v1282 = vadd.f32 0.0, %v1281
  %1283 = vmatmul.bf16.gmra.mxu0 %v391
  %v1284 = vpop.f32.mrf.mxu0
  %v1285 = vadd.f32 0.0, %v1284
  %v1286 = vpop.f32.mrf.mxu0
  %v1287 = vadd.f32 0.0, %v1286
  %1288 = vmatmul.bf16.gmra.mxu0 %v394
  %v1289 = vpop.f32.mrf.mxu0
  %v1290 = vadd.f32 0.0, %v1289
  %v1291 = vpop.f32.mrf.mxu0
  %v1292 = vadd.f32 0.0, %v1291
  %1293 = vmatmul.bf16.gmra.mxu0 %v397
  %v1294 = vpop.f32.mrf.mxu0
  %v1295 = vadd.f32 0.0, %v1294
  %v1296 = vpop.f32.mrf.mxu0
  %v1297 = vadd.f32 0.0, %v1296
  %1298 = vmatmul.bf16.gmra.mxu0 %v400
  %v1299 = vpop.f32.mrf.mxu0
  %v1300 = vadd.f32 0.0, %v1299
  %v1301 = vpop.f32.mrf.mxu0
  %v1302 = vadd.f32 0.0, %v1301
  %1303 = vdwg.mxu0
  %v1304 = vpack.c.bf16 %v1248, %v1246
  %v1305 = vpack.c.bf16 %v1253, %v1251
  %v1306 = vpack.c.bf16 %v1258, %v1256
  %v1307 = vpack.c.bf16 %v1263, %v1261
  %v1308 = vpack.c.bf16 %v1268, %v1266
  %v1310 = vsel %vm187, %v1304, 0
  %v1313 = vsel %vm187, %v1305, 0
  %v1316 = vsel %vm187, %v1306, 0
  %v1319 = vsel %vm187, %v1307, 0
  %v1322 = vsel %vm187, %v1308, 0
  %1324 = vmatpush.bf16.msra.mxu0 0
  %1325 = vmatpush.bf16.msra.mxu0 0
  %1326 = vmatpush.bf16.msra.mxu0 0
  %1327 = vmatpush.bf16.msra.mxu0 0
  %1328 = vmatpush.bf16.msra.mxu0 0
  %1329 = vmatpush.bf16.msra.mxu0 0
  %1330 = vmatpush.bf16.msra.mxu0 %v849
  %1331 = vmatpush.bf16.msra.mxu0 %v848
  %1332 = vmatmul.bf16.gmra.mxu0 %v1310
  %v1333 = vpop.f32.mrf.mxu0
  %v1334 = vadd.f32 0.0, %v1333
  %v1335 = vpop.f32.mrf.mxu0
  %v1336 = vadd.f32 0.0, %v1335
  %1337 = vmatmul.bf16.gmra.mxu0 %v1313
  %v1338 = vpop.f32.mrf.mxu0
  %v1339 = vadd.f32 0.0, %v1338
  %v1340 = vpop.f32.mrf.mxu0
  %v1341 = vadd.f32 0.0, %v1340
  %1342 = vmatmul.bf16.gmra.mxu0 %v1316
  %v1343 = vpop.f32.mrf.mxu0
  %v1344 = vadd.f32 0.0, %v1343
  %v1345 = vpop.f32.mrf.mxu0
  %v1346 = vadd.f32 0.0, %v1345
  %1347 = vmatmul.bf16.gmra.mxu0 %v1319
  %v1348 = vpop.f32.mrf.mxu0
  %v1349 = vadd.f32 0.0, %v1348
  %v1350 = vpop.f32.mrf.mxu0
  %v1351 = vadd.f32 0.0, %v1350
  %1352 = vmatmul.bf16.gmra.mxu0 %v1322
  %v1353 = vpop.f32.mrf.mxu0
  %v1354 = vadd.f32 0.0, %v1353
  %v1355 = vpop.f32.mrf.mxu0
  %v1356 = vadd.f32 0.0, %v1355
  %1357 = vdwg.mxu0
  %1358 = vmatpush.bf16.msra.mxu0 0
  %1359 = vmatpush.bf16.msra.mxu0 0
  %1360 = vmatpush.bf16.msra.mxu0 0
  %1361 = vmatpush.bf16.msra.mxu0 0
  %1362 = vmatpush.bf16.msra.mxu0 0
  %1363 = vmatpush.bf16.msra.mxu0 0
  %1364 = vmatpush.bf16.msra.mxu0 %v910
  %1365 = vmatpush.bf16.msra.mxu0 %v909
  %1366 = vmatmul.bf16.gmra.mxu0 %v914
  %v1367 = vpop.f32.mrf.mxu0
  %v1368 = vadd.f32 %v1334, %v1367
  %v1369 = vpop.f32.mrf.mxu0
  %v1370 = vadd.f32 %v1336, %v1369
  %1371 = vmatmul.bf16.gmra.mxu0 %v917
  %v1372 = vpop.f32.mrf.mxu0
  %v1373 = vadd.f32 %v1339, %v1372
  %v1374 = vpop.f32.mrf.mxu0
  %v1375 = vadd.f32 %v1341, %v1374
  %1376 = vmatmul.bf16.gmra.mxu0 %v920
  %v1377 = vpop.f32.mrf.mxu0
  %v1378 = vadd.f32 %v1344, %v1377
  %v1379 = vpop.f32.mrf.mxu0
  %v1380 = vadd.f32 %v1346, %v1379
  %1381 = vmatmul.bf16.gmra.mxu0 %v923
  %v1382 = vpop.f32.mrf.mxu0
  %v1383 = vadd.f32 %v1349, %v1382
  %v1384 = vpop.f32.mrf.mxu0
  %v1385 = vadd.f32 %v1351, %v1384
  %1386 = vmatmul.bf16.gmra.mxu0 %v926
  %v1387 = vpop.f32.mrf.mxu0
  %v1388 = vadd.f32 %v1354, %v1387
  %v1389 = vpop.f32.mrf.mxu0
  %v1390 = vadd.f32 %v1356, %v1389
  %1391 = vdwg.mxu0
  %v1392 = vpack.c.bf16 %v1282, %v1280
  %v1393 = vpack.c.bf16 %v1287, %v1285
  %v1394 = vpack.c.bf16 %v1292, %v1290
  %v1395 = vpack.c.bf16 %v1297, %v1295
  %v1396 = vpack.c.bf16 %v1302, %v1300
  %v1398 = vsel %vm187, %v1392, 0
  %v1401 = vsel %vm187, %v1393, 0
  %v1404 = vsel %vm187, %v1394, 0
  %v1407 = vsel %vm187, %v1395, 0
  %v1410 = vsel %vm187, %v1396, 0
  %1412 = vmatpush.bf16.msra.mxu0 0
  %1413 = vmatpush.bf16.msra.mxu0 0
  %1414 = vmatpush.bf16.msra.mxu0 0
  %1415 = vmatpush.bf16.msra.mxu0 0
  %1416 = vmatpush.bf16.msra.mxu0 0
  %1417 = vmatpush.bf16.msra.mxu0 0
  %1418 = vmatpush.bf16.msra.mxu0 %v976
  %1419 = vmatpush.bf16.msra.mxu0 %v975
  %1420 = vmatmul.bf16.gmra.mxu0 %v1398
  %v1421 = vpop.f32.mrf.mxu0
  %v1422 = vadd.f32 0.0, %v1421
  %v1423 = vpop.f32.mrf.mxu0
  %v1424 = vadd.f32 0.0, %v1423
  %1425 = vmatmul.bf16.gmra.mxu0 %v1401
  %v1426 = vpop.f32.mrf.mxu0
  %v1427 = vadd.f32 0.0, %v1426
  %v1428 = vpop.f32.mrf.mxu0
  %v1429 = vadd.f32 0.0, %v1428
  %1430 = vmatmul.bf16.gmra.mxu0 %v1404
  %v1431 = vpop.f32.mrf.mxu0
  %v1432 = vadd.f32 0.0, %v1431
  %v1433 = vpop.f32.mrf.mxu0
  %v1434 = vadd.f32 0.0, %v1433
  %1435 = vmatmul.bf16.gmra.mxu0 %v1407
  %v1436 = vpop.f32.mrf.mxu0
  %v1437 = vadd.f32 0.0, %v1436
  %v1438 = vpop.f32.mrf.mxu0
  %v1439 = vadd.f32 0.0, %v1438
  %1440 = vmatmul.bf16.gmra.mxu0 %v1410
  %v1441 = vpop.f32.mrf.mxu0
  %v1442 = vadd.f32 0.0, %v1441
  %v1443 = vpop.f32.mrf.mxu0
  %v1444 = vadd.f32 0.0, %v1443
  %1445 = vdwg.mxu0
  %v1446 = vadd.f32 %v1368, %v1422
  %v1447 = vadd.f32 %v1370, %v1424
  %v1448 = vadd.f32 %v1373, %v1427
  %v1449 = vadd.f32 %v1375, %v1429
  %v1450 = vadd.f32 %v1378, %v1432
  %v1451 = vadd.f32 %v1380, %v1434
  %v1452 = vadd.f32 %v1383, %v1437
  %v1453 = vadd.f32 %v1385, %v1439
  %v1454 = vadd.f32 %v1388, %v1442
  %v1455 = vadd.f32 %v1390, %v1444
  %v1456 = vadd.f32 %v1446, %v1040
  %v1457 = vadd.f32 %v1447, %v1040
  %v1458 = vadd.f32 %v1448, %v1040
  %v1459 = vadd.f32 %v1449, %v1040
  %v1460 = vadd.f32 %v1450, %v1040
  %v1461 = vadd.f32 %v1451, %v1040
  %v1462 = vadd.f32 %v1452, %v1040
  %v1463 = vadd.f32 %v1453, %v1040
  %v1464 = vadd.f32 %v1454, %v1040
  %v1465 = vadd.f32 %v1455, %v1040
  %v1466 = vmax.f32 %v1456, 0.0
  %v1467 = vmax.f32 %v1457, 0.0
  %v1468 = vmax.f32 %v1458, 0.0
  %v1469 = vmax.f32 %v1459, 0.0
  %v1470 = vmax.f32 %v1460, 0.0
  %v1471 = vmax.f32 %v1461, 0.0
  %v1472 = vmax.f32 %v1462, 0.0
  %v1473 = vmax.f32 %v1463, 0.0
  %v1474 = vmax.f32 %v1464, 0.0
  %v1475 = vmax.f32 %v1465, 0.0
  %v1476 = vpack.c.bf16 %v1467, %v1466
  %v1477 = vpack.c.bf16 %v1469, %v1468
  %v1478 = vpack.c.bf16 %v1471, %v1470
  %v1479 = vpack.c.bf16 %v1473, %v1472
  %v1480 = vpack.c.bf16 %v1475, %v1474
  %1481 = vmatpush.bf16.msra.mxu0 0
  %1482 = vmatpush.bf16.msra.mxu0 0
  %1483 = vmatpush.bf16.msra.mxu0 0
  %1484 = vmatpush.bf16.msra.mxu0 %v1480
  %1485 = vmatpush.bf16.msra.mxu0 %v1479
  %1486 = vmatpush.bf16.msra.mxu0 %v1478
  %1487 = vmatpush.bf16.msra.mxu0 %v1477
  %1488 = vmatpush.bf16.msra.mxu0 %v1476
  %1489 = vmatmul.bf16.gmra.mxu0 %v1082
  %v1490 = vpop.f32.mrf.mxu0
  %v1491 = vadd.f32 0.0, %v1490
  %v1492 = vpop.f32.mrf.mxu0
  %v1493 = vadd.f32 0.0, %v1492
  %1494 = vmatmul.bf16.gmra.mxu0 %v1085
  %v1495 = vpop.f32.mrf.mxu0
  %v1496 = vadd.f32 0.0, %v1495
  %v1497 = vpop.f32.mrf.mxu0
  %v1498 = vadd.f32 0.0, %v1497
  %1499 = vmatmul.bf16.gmra.mxu0 %v1088
  %v1500 = vpop.f32.mrf.mxu0
  %v1501 = vadd.f32 0.0, %v1500
  %v1502 = vpop.f32.mrf.mxu0
  %1503 = vdwg.mxu0
  %v1504 = vpack.c.bf16 %v1493, %v1491
  %v1505 = vpack.c.bf16 %v1498, %v1496
  %v1506 = vpack.c.bf16 %v1501, %v1501
  %v1508 = vsel %vm187, %v1504, 0
  %v1511 = vsel %vm187, %v1505, 0
  %v1514 = vsel %vm187, %v1506, 0
  %1516 = vmatpush.bf16.msra.mxu0 0
  %1517 = vmatpush.bf16.msra.mxu0 0
  %1518 = vmatpush.bf16.msra.mxu0 0
  %1519 = vmatpush.bf16.msra.mxu0 0
  %1520 = vmatpush.bf16.msra.mxu0 0
  %1521 = vmatpush.bf16.msra.mxu0 0
  %1522 = vmatpush.bf16.msra.mxu0 %v1133
  %1523 = vmatpush.bf16.msra.mxu0 %v1132
  %1524 = vmatmul.bf16.gmra.mxu0 %v1508
  %v1525 = vpop.f32.mrf.mxu0
  %v1526 = vadd.f32 0.0, %v1525
  %v1527 = vpop.f32.mrf.mxu0
  %v1528 = vadd.f32 0.0, %v1527
  %1529 = vmatmul.bf16.gmra.mxu0 %v1511
  %v1530 = vpop.f32.mrf.mxu0
  %v1531 = vadd.f32 0.0, %v1530
  %v1532 = vpop.f32.mrf.mxu0
  %v1533 = vadd.f32 0.0, %v1532
  %1534 = vmatmul.bf16.gmra.mxu0 %v1514
  %v1535 = vpop.f32.mrf.mxu0
  %v1536 = vadd.f32 0.0, %v1535
  %v1537 = vpop.f32.mrf.mxu0
  %1538 = vdwg.mxu0
  %1539 = vmatpush.bf16.msra.mxu0 0
  %1540 = vmatpush.bf16.msra.mxu0 0
  %1541 = vmatpush.bf16.msra.mxu0 0
  %1542 = vmatpush.bf16.msra.mxu0 0
  %1543 = vmatpush.bf16.msra.mxu0 0
  %1544 = vmatpush.bf16.msra.mxu0 0
  %1545 = vmatpush.bf16.msra.mxu0 %v1177
  %1546 = vmatpush.bf16.msra.mxu0 %v1176
  %1547 = vmatmul.bf16.gmra.mxu0 %v1181
  %v1548 = vpop.f32.mrf.mxu0
  %v1549 = vadd.f32 %v1526, %v1548
  %v1550 = vpop.f32.mrf.mxu0
  %v1551 = vadd.f32 %v1528, %v1550
  %1552 = vmatmul.bf16.gmra.mxu0 %v1184
  %v1553 = vpop.f32.mrf.mxu0
  %v1554 = vadd.f32 %v1531, %v1553
  %v1555 = vpop.f32.mrf.mxu0
  %v1556 = vadd.f32 %v1533, %v1555
  %1557 = vmatmul.bf16.gmra.mxu0 %v1186
  %v1558 = vpop.f32.mrf.mxu0
  %v1559 = vadd.f32 %v1536, %v1558
  %v1560 = vpop.f32.mrf.mxu0
  %1561 = vdwg.mxu0
  %v1562 = vadd.f32 %v1549, %v1213
  %v1563 = vadd.f32 %v1551, %v1213
  %v1564 = vadd.f32 %v1554, %v1213
  %v1565 = vadd.f32 %v1556, %v1213
  %v1566 = vadd.f32 %v1559, %v1213
  %v1567 = vadd.f32 %v1562, %v1225
  %v1568 = vadd.f32 %v1563, %v1226
  %v1569 = vadd.f32 %v1564, %v1227
  %v1570 = vadd.f32 %v1565, %v1228
  %v1571 = vadd.f32 %v1566, %v1229
  %v1572 = vmax.f32 %v1567, 0.0
  %v1573 = vmax.f32 %v1568, 0.0
  %v1574 = vmax.f32 %v1569, 0.0
  %v1575 = vmax.f32 %v1570, 0.0
  %v1576 = vmax.f32 %v1571, 0.0
  %v1577 = vld [vmem:[%s20] sm:$0xf]
  %v1578 = vld [vmem:[%s20 + $0x4] sm:$0xf]
  %v1579 = vld [vmem:[%s20 + $0x8] sm:$0xf]
  %v1580 = vld [vmem:[%s20 + $0xc] sm:$0xf]
  %v1581 = vld [vmem:[%s20 + $0x10] sm:$0xf]
  %v1582 = vld [vmem:[%s20 + $0x14] sm:$0xf]
  %v1583 = vld [vmem:[%s20 + $0x18] sm:$0xf]
  %v1584 = vld [vmem:[%s20 + $0x1c] sm:$0xf]
  %v1585 = vpack.c.bf16 %v1573, %v1572
  %v1586 = vpack.c.bf16 %v1575, %v1574
  %v1587 = vpack.c.bf16 %v1576, %v1576
  %v1592 = vunpack.c.l.b16 %v1581
  %v1593 = vunpack.c.l.b16 %v1582
  %v1594 = vunpack.c.l.b16 %v1583
  %v1595 = vunpack.c.l.b16 %v1584
  %v1596 = vpack.c.b16 %v1593, %v1592
  %v1597 = vpack.c.b16 %v1595, %v1594
  %v1601 = vsel %vm187, %v1585, 0
  %v1604 = vsel %vm187, %v1586, 0
  %v1607 = vsel %vm187, %v1587, 0
  %1609 = vmatpush.bf16.msra.mxu0 0
  %1610 = vmatpush.bf16.msra.mxu0 0
  %1611 = vmatpush.bf16.msra.mxu0 0
  %1612 = vmatpush.bf16.msra.mxu0 0
  %1613 = vmatpush.bf16.msra.mxu0 0
  %1614 = vmatpush.bf16.msra.mxu0 0
  %1615 = vmatpush.bf16.msra.mxu0 %v1597
  %1616 = vmatpush.bf16.msra.mxu0 %v1596
  %1617 = vmatmul.bf16.gmra.mxu0 %v1601
  %v1618 = vpop.f32.mrf.mxu0
  %v1619 = vadd.f32 0.0, %v1618
  %v1620 = vpop.f32.mrf.mxu0
  %v1621 = vadd.f32 0.0, %v1620
  %1622 = vmatmul.bf16.gmra.mxu0 %v1604
  %v1623 = vpop.f32.mrf.mxu0
  %v1624 = vadd.f32 0.0, %v1623
  %v1625 = vpop.f32.mrf.mxu0
  %v1626 = vadd.f32 0.0, %v1625
  %1627 = vmatmul.bf16.gmra.mxu0 %v1607
  %v1628 = vpop.f32.mrf.mxu0
  %v1629 = vadd.f32 0.0, %v1628
  %v1630 = vpop.f32.mrf.mxu0
  %1631 = vdwg.mxu0
  %v1636 = vunpack.c.l.b16 %v1577
  %v1637 = vunpack.c.l.b16 %v1578
  %v1638 = vunpack.c.l.b16 %v1579
  %v1639 = vunpack.c.l.b16 %v1580
  %v1640 = vpack.c.b16 %v1637, %v1636
  %v1641 = vpack.c.b16 %v1639, %v1638
  %1644 = vmatpush.bf16.msra.mxu0 0
  %1645 = vmatpush.bf16.msra.mxu0 0
  %1646 = vmatpush.bf16.msra.mxu0 0
  %1647 = vmatpush.bf16.msra.mxu0 0
  %1648 = vmatpush.bf16.msra.mxu0 0
  %1649 = vmatpush.bf16.msra.mxu0 0
  %1650 = vmatpush.bf16.msra.mxu0 %v1641
  %1651 = vmatpush.bf16.msra.mxu0 %v1640
  %1652 = vmatmul.bf16.gmra.mxu0 %v1181
  %v1653 = vpop.f32.mrf.mxu0
  %v1654 = vadd.f32 %v1619, %v1653
  %v1655 = vpop.f32.mrf.mxu0
  %v1656 = vadd.f32 %v1621, %v1655
  %1657 = vmatmul.bf16.gmra.mxu0 %v1184
  %v1658 = vpop.f32.mrf.mxu0
  %v1659 = vadd.f32 %v1624, %v1658
  %v1660 = vpop.f32.mrf.mxu0
  %v1661 = vadd.f32 %v1626, %v1660
  %1662 = vmatmul.bf16.gmra.mxu0 %v1186
  %v1663 = vpop.f32.mrf.mxu0
  %v1664 = vadd.f32 %v1629, %v1663
  %v1665 = vpop.f32.mrf.mxu0
  %1666 = vdwg.mxu0
  %v1667 = vld [vmem:[%s21] sm:$0x1]
  %v1669 = vperm.slane %v1667, 0
  %v1671 = vadd.f32 %v1654, %v1669
  %v1672 = vadd.f32 %v1656, %v1669
  %v1673 = vadd.f32 %v1659, %v1669
  %v1674 = vadd.f32 %v1661, %v1669
  %v1675 = vadd.f32 %v1664, %v1669
  %v1676 = vmax.f32 %v1671, 0.0
  %v1677 = vmax.f32 %v1672, 0.0
  %v1678 = vmax.f32 %v1673, 0.0
  %v1679 = vmax.f32 %v1674, 0.0
  %v1680 = vmax.f32 %v1675, 0.0
  %v1681 = vld [vmem:[%s22] sm:$0xf]
  %v1682 = vld [vmem:[%s22 + $0x4] sm:$0xf]
  %v1683 = vld [vmem:[%s22 + $0x8] sm:$0xf]
  %v1684 = vld [vmem:[%s22 + $0xc] sm:$0xf]
  %v1685 = vpack.c.bf16 %v1677, %v1676
  %v1686 = vpack.c.bf16 %v1679, %v1678
  %v1687 = vpack.c.bf16 %v1680, %v1680
  %v1688 = vld [vmem:[%s23] sm:$0x1]
  %v1690 = vperm.slane %v1688, 0
  %v1696 = vunpack.c.l.b16 %v1681
  %v1697 = vunpack.c.l.b16 %v1682
  %v1698 = vunpack.c.l.b16 %v1683
  %v1699 = vunpack.c.l.b16 %v1684
  %v1700 = vpack.c.b16 %v1697, %v1696
  %v1701 = vpack.c.b16 %v1699, %v1698
  %v1705 = vsel %vm187, %v1685, 0
  %v1708 = vsel %vm187, %v1686, 0
  %v1711 = vsel %vm187, %v1687, 0
  %1713 = vmatpush.bf16.msra.mxu0 0
  %1714 = vmatpush.bf16.msra.mxu0 0
  %1715 = vmatpush.bf16.msra.mxu0 0
  %1716 = vmatpush.bf16.msra.mxu0 0
  %1717 = vmatpush.bf16.msra.mxu0 0
  %1718 = vmatpush.bf16.msra.mxu0 0
  %1719 = vmatpush.bf16.msra.mxu0 %v1701
  %1720 = vmatpush.bf16.msra.mxu0 %v1700
  %1721 = vmatmul.bf16.gmra.mxu0 %v1705
  %v1722 = vpop.f32.mrf.mxu0
  %v1723 = vadd.f32 %v1690, %v1722
  %v1724 = vpop.f32.mrf.mxu0
  %v1725 = vadd.f32 %v1690, %v1724
  %1726 = vmatmul.bf16.gmra.mxu0 %v1708
  %v1727 = vpop.f32.mrf.mxu0
  %v1728 = vadd.f32 %v1690, %v1727
  %v1729 = vpop.f32.mrf.mxu0
  %v1730 = vadd.f32 %v1690, %v1729
  %1731 = vmatmul.bf16.gmra.mxu0 %v1711
  %v1732 = vpop.f32.mrf.mxu0
  %v1733 = vadd.f32 %v1690, %v1732
  %v1734 = vpop.f32.mrf.mxu0
  %1735 = vdwg.mxu0
  %v1736 = vmax.f32 %v1723, 0.0
  %v1737 = vmax.f32 %v1725, 0.0
  %v1738 = vmax.f32 %v1728, 0.0
  %v1739 = vmax.f32 %v1730, 0.0
  %v1740 = vmax.f32 %v1733, 0.0
  %v1741 = vld [vmem:[%s24] sm:$0xf]
  %v1742 = vld [vmem:[%s24 + $0x4] sm:$0xf]
  %v1743 = vld [vmem:[%s24 + $0x8] sm:$0xf]
  %v1744 = vld [vmem:[%s24 + $0xc] sm:$0xf]
  %v1745 = vpack.c.bf16 %v1737, %v1736
  %v1746 = vpack.c.bf16 %v1739, %v1738
  %v1747 = vpack.c.bf16 %v1740, %v1740
  %v1748 = vld [vmem:[%s25] sm:$0x1]
  %v1750 = vperm.slane %v1748, 0
  %v1756 = vunpack.c.l.b16 %v1741
  %v1757 = vunpack.c.l.b16 %v1742
  %v1758 = vunpack.c.l.b16 %v1743
  %v1759 = vunpack.c.l.b16 %v1744
  %v1760 = vpack.c.b16 %v1757, %v1756
  %v1761 = vpack.c.b16 %v1759, %v1758
  %v1765 = vsel %vm187, %v1745, 0
  %v1768 = vsel %vm187, %v1746, 0
  %v1771 = vsel %vm187, %v1747, 0
  %1773 = vmatpush.bf16.msra.mxu0 0
  %1774 = vmatpush.bf16.msra.mxu0 0
  %1775 = vmatpush.bf16.msra.mxu0 0
  %1776 = vmatpush.bf16.msra.mxu0 0
  %1777 = vmatpush.bf16.msra.mxu0 0
  %1778 = vmatpush.bf16.msra.mxu0 0
  %1779 = vmatpush.bf16.msra.mxu0 %v1761
  %1780 = vmatpush.bf16.msra.mxu0 %v1760
  %1781 = vmatmul.bf16.gmra.mxu0 %v1765
  %v1782 = vpop.f32.mrf.mxu0
  %v1783 = vadd.f32 %v1750, %v1782
  %v1784 = vpop.f32.mrf.mxu0
  %v1785 = vadd.f32 %v1750, %v1784
  %1786 = vmatmul.bf16.gmra.mxu0 %v1768
  %v1787 = vpop.f32.mrf.mxu0
  %v1788 = vadd.f32 %v1750, %v1787
  %v1789 = vpop.f32.mrf.mxu0
  %v1790 = vadd.f32 %v1750, %v1789
  %1791 = vmatmul.bf16.gmra.mxu0 %v1771
  %v1792 = vpop.f32.mrf.mxu0
  %v1793 = vadd.f32 %v1750, %v1792
  %v1794 = vpop.f32.mrf.mxu0
  %1795 = vdwg.mxu0
  %1796 = vst.msk [vmem:[%s26] sm:$0xff] %vm187, %v1783
  %1797 = vst.msk [vmem:[%s26 + $0x8] sm:$0xff] %vm187, %v1785
  %1798 = vst.msk [vmem:[%s26 + $0x10] sm:$0xff] %vm187, %v1788
  %1799 = vst.msk [vmem:[%s26 + $0x18] sm:$0xff] %vm187, %v1790
  %1800 = vst.msk [vmem:[%s26 + $0x20] sm:$0xff] %vm187, %v1793
  // Predicated region
  $region106: #{_lambda_.2} parent=0 // pred_check
    _
  $region107: #{_lambda_.2} parent=0 // pred_check_branch
    %1802 = sbr.rel (0) target = $region109
  $region108: #{_lambda_.2} parent=0 // pred_region
    _
  $region109: #{_lambda_.2} parent=0 // pred_fallthru
    _
  // Predicated region
  $region110: #{_lambda_.2} parent=0 // pred_check
    _
  $region111: #{_lambda_.2} parent=0 // pred_check_branch
    %1804 = sbr.rel (0) target = $region113
  $region112: #{_lambda_.2} parent=0 // pred_region
    _
  $region113: #{_lambda_.2} parent=0 // pred_fallthru
    _

</llo_original>
